<compile_context>
chip_gen: v7x
topology: tpu7x:2x2x1
jax: 0.10.0
libtpu: 0.0.40
codegen_flags: <defaults>
</compile_context>

<pallas_src>
import functools
import math

import jax
import jax.numpy as jnp
from jax.experimental import pallas as pl
from jax.experimental.pallas import tpu as pltpu

_EPS = 1e-5                      # torch.nn.LayerNorm default eps
_GELU_C = math.sqrt(2.0 / math.pi)
_TAPS = tuple((dy, dx) for dy in range(3) for dx in range(3))


def _gelu_tanh(x):
    # F.gelu(x, approximate='tanh')
    return 0.5 * x * (1.0 + jnp.tanh(_GELU_C * (x + 0.044715 * x * x * x)))


def _round_up(x, m):
    return (x + m - 1) // m * m


def _zero_border(pad_ref, bt, h, w):
    """Zero the 1-pixel border of a (bt, h+2, wp, c) pad scratch (wp >= w+2).

    Done every grid step (not once under program_id==0) because the batch grid
    axis is 'parallel': each TensorCore owns its own scratch and may never run
    step 0.  The interior is fully overwritten each step and columns >= w+2
    are never read by any tap, so only rows 0 / h+1 and columns 0 / w+1 need
    refreshing.
    """
    wp, c = pad_ref.shape[2], pad_ref.shape[3]
    dt = pad_ref.dtype
    zrow = jnp.zeros((bt, 1, wp, c), dt)
    zcol = jnp.zeros((bt, h, 1, c), dt)
    pad_ref[:, 0:1, :, :] = zrow
    pad_ref[:, h + 1:h + 2, :, :] = zrow
    pad_ref[:, 1:h + 1, 0:1, :] = zcol
    pad_ref[:, 1:h + 1, w + 1:w + 2, :] = zcol


def _conv3x3(pad_ref, w_ref, col_ref, m, cin, h, w):
    """3x3 SAME conv over the zero-bordered pad scratch -> (m, cout) f32.

    If `col_ref` is provided (cin % 128 == 0) each tap is stored at a
    128-lane-aligned column offset of the bf16 im2col scratch and the conv is
    one big-K MXU matmul.  Otherwise (small / misaligned cin) the conv is 9
    accumulating matmuls with K = cin read straight from the pad scratch,
    which avoids cross-lane packing of misaligned concat columns.
    """
    if col_ref is not None:
        for t, (dy, dx) in enumerate(_TAPS):
            tap = pad_ref[:, dy:dy + h, dx:dx + w, :].reshape(m, cin)
            col_ref[:, t * cin:(t + 1) * cin] = tap          # 128-aligned (static)
        return jnp.dot(col_ref[...], w_ref[...],
                       preferred_element_type=jnp.float32)
    acc = None
    for t, (dy, dx) in enumerate(_TAPS):
        tap = pad_ref[:, dy:dy + h, dx:dx + w, :].reshape(m, cin)
        part = jnp.dot(tap, w_ref[t], preferred_element_type=jnp.float32)
        acc = part if acc is None else acc + part
    return acc


def _extra_conv_block_kernel(x_ref, gamma_ref, beta_ref, w1_ref, b1_ref,
                             w2_ref, b2_ref, o_ref, *scratch,
                             im2col1, im2col2):
    pad1_ref, pad2_ref = scratch[0], scratch[1]
    s = 2
    col1_ref = None
    col2_ref = None
    if im2col1:
        col1_ref = scratch[s]
        s += 1
    if im2col2:
        col2_ref = scratch[s]
        s += 1

    bt, h, w, c = x_ref.shape
    cm = b1_ref.shape[-1]
    m = bt * h * w

    # ---- LayerNorm over the channel dim (f32, elementwise affine) ----
    x = x_ref[...].astype(jnp.float32)                       # (bt, h, w, c)
    mean = jnp.mean(x, axis=-1, keepdims=True)
    var = jnp.mean(jnp.square(x - mean), axis=-1, keepdims=True)
    ln = (x - mean) * jax.lax.rsqrt(var + _EPS)
    ln = ln * gamma_ref[...] + beta_ref[...]                  # f32, kept live

    # ---- conv: 3x3 SAME, C -> Cm ----
    _zero_border(pad1_ref, bt, h, w)
    pad1_ref[:, 1:h + 1, 1:w + 1, :] = ln.astype(pad1_ref.dtype)   # single cast
    acc1 = _conv3x3(pad1_ref, w1_ref, col1_ref, m, c, h, w)   # (m, cm) f32
    res = _gelu_tanh(acc1 + b1_ref[...])                      # f32 elementwise

    # ---- conv_1: 3x3 SAME, Cm -> C ----
    _zero_border(pad2_ref, bt, h, w)
    pad2_ref[:, 1:h + 1, 1:w + 1, :] = (
        res.reshape(bt, h, w, cm).astype(pad2_ref.dtype))     # single cast
    acc2 = _conv3x3(pad2_ref, w2_ref, col2_ref, m, cm, h, w)  # (m, c) f32

    # ---- residual on the post-LayerNorm tensor (f32, no pad reload) ----
    out = ln + (acc2 + b2_ref[...]).reshape(bt, h, w, c)

    # Lane-dense write: o_ref is (bt, h, w*c) when c is not a multiple of 128.
    o_ref[...] = out.reshape(o_ref.shape).astype(o_ref.dtype)


def _vmem_capacity_bytes():
    try:
        return int(pltpu.get_tpu_info().vmem_capacity_bytes)
    except Exception:
        return 128 * 1024 * 1024


def _pick_block_b(B, H, W, C, Cm, itemsize, budget):
    """Batch elements per grid step.

    Grow block_b until M = block_b*H*W is comfortably large (amortizes the
    ~0.35 us per-step overhead and fills MXU rows) while (a) keeping at least
    2 grid steps so pipelining / v7x megacore sharding stay alive and (b)
    keeping the per-step VMEM working set inside `budget`.
    """
    wp = _round_up(W + 2, 8)
    m1 = H * W
    w_bytes = 9 * 2 * C * Cm * 2                      # packed bf16 weights

    def working_set(bt):
        io = 2 * 2 * bt * H * W * C * itemsize        # x + out blocks, 2-buffered
        pads = bt * (H + 2) * wp * (C + Cm) * 2       # bf16 pad scratches
        cols = 0
        if C % 128 == 0:
            cols += bt * m1 * 9 * C * 2
        if Cm % 128 == 0:
            cols += bt * m1 * 9 * Cm * 2
        interm = 2 * bt * m1 * (C + Cm) * 4           # f32 ln/res/acc slack
        return io + pads + cols + interm + w_bytes

    best = 1
    for d in range(1, B + 1):
        if B % d:
            continue
        if B >= 2 and B // d < 2:                     # keep >= 2 grid steps
            continue
        if working_set(d) > budget:
            continue
        best = d
        if d * m1 >= 1024:
            break
    return best


def extra_conv_block(x, gamma, beta, w1, b1, w2, b2, *, block_b=None):
    """x: (B, H, W, C) NHWC.  w1: (3, 3, C, Cm) HWIO,  w2: (3, 3, Cm, C) HWIO."""
    B, H, W, C = x.shape
    Cm = w1.shape[3]

    cap = _vmem_capacity_bytes()
    vmem_limit = min(int(cap * 0.75), 96 * 1024 * 1024)
    if block_b is None:
        block_b = _pick_block_b(B, H, W, C, Cm, x.dtype.itemsize,
                                vmem_limit // 2)
    assert B % block_b == 0, (B, block_b)

    im2col1 = (C % 128 == 0)
    im2col2 = (Cm % 128 == 0)
    lane_dense = (C % 128 != 0)

    # Pre-pack weights to match the tap order (t = dy*3 + dx) used in the
    # kernel; pre-cast to bf16 (MXU-native).  Accumulation stays f32.
    if im2col1:
        w1p = w1.reshape(9 * C, Cm).astype(jnp.bfloat16)
        w1_spec = pl.BlockSpec((9 * C, Cm), lambda b: (0, 0))
    else:
        w1p = w1.reshape(9, C, Cm).astype(jnp.bfloat16)
        w1_spec = pl.BlockSpec((9, C, Cm), lambda b: (0, 0, 0))
    if im2col2:
        w2p = w2.reshape(9 * Cm, C).astype(jnp.bfloat16)
        w2_spec = pl.BlockSpec((9 * Cm, C), lambda b: (0, 0))
    else:
        w2p = w2.reshape(9, Cm, C).astype(jnp.bfloat16)
        w2_spec = pl.BlockSpec((9, Cm, C), lambda b: (0, 0, 0))

    gamma2 = gamma.reshape(1, C).astype(jnp.float32)
    beta2 = beta.reshape(1, C).astype(jnp.float32)
    b1_2 = b1.reshape(1, Cm).astype(jnp.float32)
    b2_2 = b2.reshape(1, C).astype(jnp.float32)

    wp = _round_up(W + 2, 8)                 # sublane-aligned padded width
    m = block_b * H * W
    scratch = [pltpu.VMEM((block_b, H + 2, wp, C), jnp.bfloat16),
               pltpu.VMEM((block_b, H + 2, wp, Cm), jnp.bfloat16)]
    if im2col1:
        scratch.append(pltpu.VMEM((m, 9 * C), jnp.bfloat16))
    if im2col2:
        scratch.append(pltpu.VMEM((m, 9 * Cm), jnp.bfloat16))

    if lane_dense:
        out_shape = jax.ShapeDtypeStruct((B, H, W * C), x.dtype)
        out_spec = pl.BlockSpec((block_b, H, W * C), lambda b: (b, 0, 0))
    else:
        out_shape = jax.ShapeDtypeStruct((B, H, W, C), x.dtype)
        out_spec = pl.BlockSpec((block_b, H, W, C), lambda b: (b, 0, 0, 0))

    kernel = functools.partial(_extra_conv_block_kernel,
                               im2col1=im2col1, im2col2=im2col2)

    out = pl.pallas_call(
        kernel,
        out_shape=out_shape,
        grid_spec=pltpu.PrefetchScalarGridSpec(
            num_scalar_prefetch=0,
            grid=(B // block_b,),
            in_specs=[
                pl.BlockSpec((block_b, H, W, C), lambda b: (b, 0, 0, 0)),
                pl.BlockSpec((1, C), lambda b: (0, 0)),
                pl.BlockSpec((1, C), lambda b: (0, 0)),
                w1_spec,
                pl.BlockSpec((1, Cm), lambda b: (0, 0)),
                w2_spec,
                pl.BlockSpec((1, C), lambda b: (0, 0)),
            ],
            out_specs=out_spec,
            scratch_shapes=scratch,
        ),
        # Batch blocks are fully independent -> 'parallel' lets Mosaic shard
        # the grid across both TensorCores on v7x (harmless on v5e/v6e).
        compiler_params=pltpu.CompilerParams(
            dimension_semantics=("parallel",),
            vmem_limit_bytes=vmem_limit),
    )(x, gamma2, beta2, w1p, b1_2, w2p, b2_2)

    if lane_dense:
        out = out.reshape(B, H, W, C)        # free row-major reshape in XLA
    return out


def _ref_forward(x, gamma, beta, w1, b1, w2, b2):
    """Pure-JAX f32 reference matching the PyTorch module (NHWC in/out)."""
    mean = x.mean(-1, keepdims=True)
    var = ((x - mean) ** 2).mean(-1, keepdims=True)
    ln = (x - mean) / jnp.sqrt(var + _EPS) * gamma + beta
    xn = jnp.transpose(ln, (0, 3, 1, 2))                     # NCHW
    w1_oihw = jnp.transpose(w1, (3, 2, 0, 1))
    w2_oihw = jnp.transpose(w2, (3, 2, 0, 1))
    dn = ('NCHW', 'OIHW', 'NCHW')
    hp = jax.lax.Precision.HIGHEST
    res = jax.lax.conv_general_dilated(xn, w1_oihw, (1, 1), 'SAME',
                                       dimension_numbers=dn, precision=hp)
    res = _gelu_tanh(res + b1[None, :, None, None])
    out = xn + jax.lax.conv_general_dilated(res, w2_oihw, (1, 1), 'SAME',
                                            dimension_numbers=dn, precision=hp) \
             + b2[None, :, None, None]
    return jnp.transpose(out, (0, 2, 3, 1))                  # back to NHWC


if __name__ == "__main__":
    B, H, W, C, MULT = 2, 8, 8, 32, 4
    Cm = C * MULT

    key = jax.random.PRNGKey(0)
    kx, k1, k2, k3, k4 = jax.random.split(key, 5)
    x = jax.random.normal(kx, (B, H, W, C), jnp.float32)
    # LayerNorm init (weight=1, bias=0); conv params random but deterministic.
    gamma = jnp.ones((C,), jnp.float32)
    beta = jnp.zeros((C,), jnp.float32)
    w1 = jax.random.normal(k1, (3, 3, C, Cm), jnp.float32) / math.sqrt(9 * C)
    b1 = jax.random.normal(k2, (Cm,), jnp.float32) * 0.01
    w2 = jax.random.normal(k3, (3, 3, Cm, C), jnp.float32) / math.sqrt(9 * Cm)
    b2 = jax.random.normal(k4, (C,), jnp.float32) * 0.01

    out = extra_conv_block(x, gamma, beta, w1, b1, w2, b2)
    out = jax.block_until_ready(out)

    ref = _ref_forward(x, gamma, beta, w1, b1, w2, b2)
    # bf16 MXU operands (f32 accumulation) introduce ~1e-2-level abs error at
    # these value scales, hence the looser-than-f32 tolerance.
    if not jnp.allclose(out, ref, atol=2e-2, rtol=2e-2):
        max_err = float(jnp.max(jnp.abs(out - ref)))
        raise AssertionError(f"mismatch vs reference, max abs err = {max_err}")

    print("KERNEL_OK")
</pallas_src>

<mosaic_0001>
module attributes {stable_mosaic.version = 11 : i64} {
  func.func @_extra_conv_block_kernel(%arg0: i32, %arg1: memref<1x8x8x32xf32, #tpu.memory_space<vmem>>, %arg2: memref<1x32xf32, #tpu.memory_space<vmem>>, %arg3: memref<1x32xf32, #tpu.memory_space<vmem>>, %arg4: memref<9x32x128xbf16, #tpu.memory_space<vmem>>, %arg5: memref<1x128xf32, #tpu.memory_space<vmem>>, %arg6: memref<1152x32xbf16, #tpu.memory_space<vmem>>, %arg7: memref<1x32xf32, #tpu.memory_space<vmem>>, %arg8: memref<1x8x256xf32, #tpu.memory_space<vmem>>, %arg9: memref<1x10x16x32xbf16, #tpu.memory_space<vmem>>, %arg10: memref<1x10x16x128xbf16, #tpu.memory_space<vmem>>, %arg11: memref<64x1152xbf16, #tpu.memory_space<vmem>>) attributes {dimension_semantics = [#tpu.dimension_semantics<parallel>], iteration_bounds = array<i64: 2>, scalar_prefetch = 0 : i64, scratch_operands = 3 : i64, tpu.core_type = #tpu.core_type<tc>, window_params = [{transform_indices = @transform_0, window_bounds = array<i64: 1, 8, 8, 32>}, {pipeline_mode = #tpu.pipeline_mode<synchronous>, transform_indices = @transform_1, window_bounds = array<i64: 1, 32>}, {pipeline_mode = #tpu.pipeline_mode<synchronous>, transform_indices = @transform_2, window_bounds = array<i64: 1, 32>}, {pipeline_mode = #tpu.pipeline_mode<synchronous>, transform_indices = @transform_3, window_bounds = array<i64: 9, 32, 128>}, {pipeline_mode = #tpu.pipeline_mode<synchronous>, transform_indices = @transform_4, window_bounds = array<i64: 1, 128>}, {pipeline_mode = #tpu.pipeline_mode<synchronous>, transform_indices = @transform_5, window_bounds = array<i64: 1152, 32>}, {pipeline_mode = #tpu.pipeline_mode<synchronous>, transform_indices = @transform_6, window_bounds = array<i64: 1, 32>}, {transform_indices = @transform_7, window_bounds = array<i64: 1, 8, 256>}]} {
    %c0 = arith.constant 0 : index
    %c0_0 = arith.constant 0 : index
    %c0_1 = arith.constant 0 : index
    %c0_2 = arith.constant 0 : index
    %0 = vector.load %arg1[%c0, %c0_0, %c0_1, %c0_2] : memref<1x8x8x32xf32, #tpu.memory_space<vmem>>, vector<1x8x8x32xf32>
    %cst = arith.constant dense<0.000000e+00> : vector<1x8x8xf32>
    %1 = vector.multi_reduction <add>, %0, %cst [3] : vector<1x8x8x32xf32> to vector<1x8x8xf32>
    %2 = vector.shape_cast %1 : vector<1x8x8xf32> to vector<1x8x8x1xf32>
    %cst_3 = arith.constant 3.200000e+01 : f32
    %3 = vector.broadcast %cst_3 : f32 to vector<1x8x8x1xf32>
    %4 = arith.divf %2, %3 : vector<1x8x8x1xf32>
    %5 = vector.broadcast %4 : vector<1x8x8x1xf32> to vector<1x8x8x32xf32>
    %6 = arith.subf %0, %5 : vector<1x8x8x32xf32>
    %7 = arith.mulf %6, %6 : vector<1x8x8x32xf32>
    %cst_4 = arith.constant dense<0.000000e+00> : vector<1x8x8xf32>
    %8 = vector.multi_reduction <add>, %7, %cst_4 [3] : vector<1x8x8x32xf32> to vector<1x8x8xf32>
    %9 = vector.shape_cast %8 : vector<1x8x8xf32> to vector<1x8x8x1xf32>
    %cst_5 = arith.constant 3.200000e+01 : f32
    %10 = vector.broadcast %cst_5 : f32 to vector<1x8x8x1xf32>
    %11 = arith.divf %9, %10 : vector<1x8x8x1xf32>
    %12 = vector.broadcast %4 : vector<1x8x8x1xf32> to vector<1x8x8x32xf32>
    %13 = arith.subf %0, %12 : vector<1x8x8x32xf32>
    %cst_6 = arith.constant 9.99999974E-6 : f32
    %14 = vector.broadcast %cst_6 : f32 to vector<1x8x8x1xf32>
    %15 = arith.addf %11, %14 : vector<1x8x8x1xf32>
    %16 = math.rsqrt %15 : vector<1x8x8x1xf32>
    %17 = vector.broadcast %16 : vector<1x8x8x1xf32> to vector<1x8x8x32xf32>
    %18 = arith.mulf %13, %17 : vector<1x8x8x32xf32>
    %c0_7 = arith.constant 0 : index
    %c0_8 = arith.constant 0 : index
    %19 = vector.load %arg2[%c0_7, %c0_8] : memref<1x32xf32, #tpu.memory_space<vmem>>, vector<1x32xf32>
    %20 = vector.shape_cast %19 : vector<1x32xf32> to vector<1x1x1x32xf32>
    %21 = vector.broadcast %20 : vector<1x1x1x32xf32> to vector<1x8x8x32xf32>
    %22 = arith.mulf %18, %21 : vector<1x8x8x32xf32>
    %c0_9 = arith.constant 0 : index
    %c0_10 = arith.constant 0 : index
    %23 = vector.load %arg3[%c0_9, %c0_10] : memref<1x32xf32, #tpu.memory_space<vmem>>, vector<1x32xf32>
    %24 = vector.shape_cast %23 : vector<1x32xf32> to vector<1x1x1x32xf32>
    %25 = vector.broadcast %24 : vector<1x1x1x32xf32> to vector<1x8x8x32xf32>
    %26 = arith.addf %22, %25 : vector<1x8x8x32xf32>
    %cst_11 = arith.constant 0.000000e+00 : bf16
    %27 = vector.broadcast %cst_11 : bf16 to vector<1x1x16x32xbf16>
    %cst_12 = arith.constant 0.000000e+00 : bf16
    %28 = vector.broadcast %cst_12 : bf16 to vector<1x8x1x32xbf16>
    %c0_13 = arith.constant 0 : index
    %c0_14 = arith.constant 0 : index
    %c0_15 = arith.constant 0 : index
    %c0_16 = arith.constant 0 : index
    %29 = vector.load %arg9[%c0_13, %c0_14, %c0_15, %c0_16] : memref<1x10x16x32xbf16, #tpu.memory_space<vmem>>, vector<1x1x16x32xbf16>
    tpu.vector_store %arg9[%c0_13, %c0_14, %c0_15, %c0_16], %27 {strides = array<i32>} : memref<1x10x16x32xbf16, #tpu.memory_space<vmem>>, vector<1x1x16x32xbf16>,
    %c0_17 = arith.constant 0 : index
    %c9 = arith.constant 9 : index
    %c0_18 = arith.constant 0 : index
    %c0_19 = arith.constant 0 : index
    %30 = vector.load %arg9[%c0_17, %c9, %c0_18, %c0_19] : memref<1x10x16x32xbf16, #tpu.memory_space<vmem>>, vector<1x1x16x32xbf16>
    tpu.vector_store %arg9[%c0_17, %c9, %c0_18, %c0_19], %27 {strides = array<i32>} : memref<1x10x16x32xbf16, #tpu.memory_space<vmem>>, vector<1x1x16x32xbf16>,
    %c0_20 = arith.constant 0 : index
    %c1 = arith.constant 1 : index
    %c0_21 = arith.constant 0 : index
    %c0_22 = arith.constant 0 : index
    %31 = vector.load %arg9[%c0_20, %c1, %c0_21, %c0_22] : memref<1x10x16x32xbf16, #tpu.memory_space<vmem>>, vector<1x8x1x32xbf16>
    tpu.vector_store %arg9[%c0_20, %c1, %c0_21, %c0_22], %28 {strides = array<i32>} : memref<1x10x16x32xbf16, #tpu.memory_space<vmem>>, vector<1x8x1x32xbf16>,
    %c0_23 = arith.constant 0 : index
    %c1_24 = arith.constant 1 : index
    %c9_25 = arith.constant 9 : index
    %c0_26 = arith.constant 0 : index
    %32 = vector.load %arg9[%c0_23, %c1_24, %c9_25, %c0_26] : memref<1x10x16x32xbf16, #tpu.memory_space<vmem>>, vector<1x8x1x32xbf16>
    tpu.vector_store %arg9[%c0_23, %c1_24, %c9_25, %c0_26], %28 {strides = array<i32>} : memref<1x10x16x32xbf16, #tpu.memory_space<vmem>>, vector<1x8x1x32xbf16>,
    %33 = arith.truncf %26 : vector<1x8x8x32xf32> to vector<1x8x8x32xbf16>
    %c0_27 = arith.constant 0 : index
    %c1_28 = arith.constant 1 : index
    %c1_29 = arith.constant 1 : index
    %c0_30 = arith.constant 0 : index
    %34 = vector.load %arg9[%c0_27, %c1_28, %c1_29, %c0_30] : memref<1x10x16x32xbf16, #tpu.memory_space<vmem>>, vector<1x8x8x32xbf16>
    tpu.vector_store %arg9[%c0_27, %c1_28, %c1_29, %c0_30], %33 {strides = array<i32>} : memref<1x10x16x32xbf16, #tpu.memory_space<vmem>>, vector<1x8x8x32xbf16>,
    %c0_31 = arith.constant 0 : index
    %c0_32 = arith.constant 0 : index
    %c0_33 = arith.constant 0 : index
    %c0_34 = arith.constant 0 : index
    %35 = vector.load %arg9[%c0_31, %c0_32, %c0_33, %c0_34] : memref<1x10x16x32xbf16, #tpu.memory_space<vmem>>, vector<1x8x8x32xbf16>
    %36 = vector.shape_cast %35 : vector<1x8x8x32xbf16> to vector<64x32xbf16>
    %c0_35 = arith.constant 0 : index
    %c0_36 = arith.constant 0 : index
    %c0_37 = arith.constant 0 : index
    %37 = vector.load %arg4[%c0_35, %c0_36, %c0_37] : memref<9x32x128xbf16, #tpu.memory_space<vmem>>, vector<1x32x128xbf16>
    %38 = vector.shape_cast %37 : vector<1x32x128xbf16> to vector<32x128xbf16>
    %cst_38 = arith.constant dense<0.000000e+00> : vector<64x128xf32>
    %39 = tpu.matmul %36, %38, %cst_38 {dimension_numbers = #tpu.dot_dimension_numbers<[1], [0], [0], [1], [0, 0, 1, 1], [], []>} : vector<64x32xbf16>, vector<32x128xbf16>, vector<64x128xf32> -> vector<64x128xf32>
    %c0_39 = arith.constant 0 : index
    %c0_40 = arith.constant 0 : index
    %c1_41 = arith.constant 1 : index
    %c0_42 = arith.constant 0 : index
    %40 = vector.load %arg9[%c0_39, %c0_40, %c1_41, %c0_42] : memref<1x10x16x32xbf16, #tpu.memory_space<vmem>>, vector<1x8x8x32xbf16>
    %41 = vector.shape_cast %40 : vector<1x8x8x32xbf16> to vector<64x32xbf16>
    %c1_43 = arith.constant 1 : index
    %c0_44 = arith.constant 0 : index
    %c0_45 = arith.constant 0 : index
    %42 = vector.load %arg4[%c1_43, %c0_44, %c0_45] : memref<9x32x128xbf16, #tpu.memory_space<vmem>>, vector<1x32x128xbf16>
    %43 = vector.shape_cast %42 : vector<1x32x128xbf16> to vector<32x128xbf16>
    %cst_46 = arith.constant dense<0.000000e+00> : vector<64x128xf32>
    %44 = tpu.matmul %41, %43, %cst_46 {dimension_numbers = #tpu.dot_dimension_numbers<[1], [0], [0], [1], [0, 0, 1, 1], [], []>} : vector<64x32xbf16>, vector<32x128xbf16>, vector<64x128xf32> -> vector<64x128xf32>
    %45 = arith.addf %39, %44 : vector<64x128xf32>
    %c0_47 = arith.constant 0 : index
    %c0_48 = arith.constant 0 : index
    %c2 = arith.constant 2 : index
    %c0_49 = arith.constant 0 : index
    %46 = vector.load %arg9[%c0_47, %c0_48, %c2, %c0_49] : memref<1x10x16x32xbf16, #tpu.memory_space<vmem>>, vector<1x8x8x32xbf16>
    %47 = vector.shape_cast %46 : vector<1x8x8x32xbf16> to vector<64x32xbf16>
    %c2_50 = arith.constant 2 : index
    %c0_51 = arith.constant 0 : index
    %c0_52 = arith.constant 0 : index
    %48 = vector.load %arg4[%c2_50, %c0_51, %c0_52] : memref<9x32x128xbf16, #tpu.memory_space<vmem>>, vector<1x32x128xbf16>
    %49 = vector.shape_cast %48 : vector<1x32x128xbf16> to vector<32x128xbf16>
    %cst_53 = arith.constant dense<0.000000e+00> : vector<64x128xf32>
    %50 = tpu.matmul %47, %49, %cst_53 {dimension_numbers = #tpu.dot_dimension_numbers<[1], [0], [0], [1], [0, 0, 1, 1], [], []>} : vector<64x32xbf16>, vector<32x128xbf16>, vector<64x128xf32> -> vector<64x128xf32>
    %51 = arith.addf %45, %50 : vector<64x128xf32>
    %c0_54 = arith.constant 0 : index
    %c1_55 = arith.constant 1 : index
    %c0_56 = arith.constant 0 : index
    %c0_57 = arith.constant 0 : index
    %52 = vector.load %arg9[%c0_54, %c1_55, %c0_56, %c0_57] : memref<1x10x16x32xbf16, #tpu.memory_space<vmem>>, vector<1x8x8x32xbf16>
    %53 = vector.shape_cast %52 : vector<1x8x8x32xbf16> to vector<64x32xbf16>
    %c3 = arith.constant 3 : index
    %c0_58 = arith.constant 0 : index
    %c0_59 = arith.constant 0 : index
    %54 = vector.load %arg4[%c3, %c0_58, %c0_59] : memref<9x32x128xbf16, #tpu.memory_space<vmem>>, vector<1x32x128xbf16>
    %55 = vector.shape_cast %54 : vector<1x32x128xbf16> to vector<32x128xbf16>
    %cst_60 = arith.constant dense<0.000000e+00> : vector<64x128xf32>
    %56 = tpu.matmul %53, %55, %cst_60 {dimension_numbers = #tpu.dot_dimension_numbers<[1], [0], [0], [1], [0, 0, 1, 1], [], []>} : vector<64x32xbf16>, vector<32x128xbf16>, vector<64x128xf32> -> vector<64x128xf32>
    %57 = arith.addf %51, %56 : vector<64x128xf32>
    %c0_61 = arith.constant 0 : index
    %c1_62 = arith.constant 1 : index
    %c1_63 = arith.constant 1 : index
    %c0_64 = arith.constant 0 : index
    %58 = vector.load %arg9[%c0_61, %c1_62, %c1_63, %c0_64] : memref<1x10x16x32xbf16, #tpu.memory_space<vmem>>, vector<1x8x8x32xbf16>
    %59 = vector.shape_cast %58 : vector<1x8x8x32xbf16> to vector<64x32xbf16>
    %c4 = arith.constant 4 : index
    %c0_65 = arith.constant 0 : index
    %c0_66 = arith.constant 0 : index
    %60 = vector.load %arg4[%c4, %c0_65, %c0_66] : memref<9x32x128xbf16, #tpu.memory_space<vmem>>, vector<1x32x128xbf16>
    %61 = vector.shape_cast %60 : vector<1x32x128xbf16> to vector<32x128xbf16>
    %cst_67 = arith.constant dense<0.000000e+00> : vector<64x128xf32>
    %62 = tpu.matmul %59, %61, %cst_67 {dimension_numbers = #tpu.dot_dimension_numbers<[1], [0], [0], [1], [0, 0, 1, 1], [], []>} : vector<64x32xbf16>, vector<32x128xbf16>, vector<64x128xf32> -> vector<64x128xf32>
    %63 = arith.addf %57, %62 : vector<64x128xf32>
    %c0_68 = arith.constant 0 : index
    %c1_69 = arith.constant 1 : index
    %c2_70 = arith.constant 2 : index
    %c0_71 = arith.constant 0 : index
    %64 = vector.load %arg9[%c0_68, %c1_69, %c2_70, %c0_71] : memref<1x10x16x32xbf16, #tpu.memory_space<vmem>>, vector<1x8x8x32xbf16>
    %65 = vector.shape_cast %64 : vector<1x8x8x32xbf16> to vector<64x32xbf16>
    %c5 = arith.constant 5 : index
    %c0_72 = arith.constant 0 : index
    %c0_73 = arith.constant 0 : index
    %66 = vector.load %arg4[%c5, %c0_72, %c0_73] : memref<9x32x128xbf16, #tpu.memory_space<vmem>>, vector<1x32x128xbf16>
    %67 = vector.shape_cast %66 : vector<1x32x128xbf16> to vector<32x128xbf16>
    %cst_74 = arith.constant dense<0.000000e+00> : vector<64x128xf32>
    %68 = tpu.matmul %65, %67, %cst_74 {dimension_numbers = #tpu.dot_dimension_numbers<[1], [0], [0], [1], [0, 0, 1, 1], [], []>} : vector<64x32xbf16>, vector<32x128xbf16>, vector<64x128xf32> -> vector<64x128xf32>
    %69 = arith.addf %63, %68 : vector<64x128xf32>
    %c0_75 = arith.constant 0 : index
    %c2_76 = arith.constant 2 : index
    %c0_77 = arith.constant 0 : index
    %c0_78 = arith.constant 0 : index
    %70 = vector.load %arg9[%c0_75, %c2_76, %c0_77, %c0_78] : memref<1x10x16x32xbf16, #tpu.memory_space<vmem>>, vector<1x8x8x32xbf16>
    %71 = vector.shape_cast %70 : vector<1x8x8x32xbf16> to vector<64x32xbf16>
    %c6 = arith.constant 6 : index
    %c0_79 = arith.constant 0 : index
    %c0_80 = arith.constant 0 : index
    %72 = vector.load %arg4[%c6, %c0_79, %c0_80] : memref<9x32x128xbf16, #tpu.memory_space<vmem>>, vector<1x32x128xbf16>
    %73 = vector.shape_cast %72 : vector<1x32x128xbf16> to vector<32x128xbf16>
    %cst_81 = arith.constant dense<0.000000e+00> : vector<64x128xf32>
    %74 = tpu.matmul %71, %73, %cst_81 {dimension_numbers = #tpu.dot_dimension_numbers<[1], [0], [0], [1], [0, 0, 1, 1], [], []>} : vector<64x32xbf16>, vector<32x128xbf16>, vector<64x128xf32> -> vector<64x128xf32>
    %75 = arith.addf %69, %74 : vector<64x128xf32>
    %c0_82 = arith.constant 0 : index
    %c2_83 = arith.constant 2 : index
    %c1_84 = arith.constant 1 : index
    %c0_85 = arith.constant 0 : index
    %76 = vector.load %arg9[%c0_82, %c2_83, %c1_84, %c0_85] : memref<1x10x16x32xbf16, #tpu.memory_space<vmem>>, vector<1x8x8x32xbf16>
    %77 = vector.shape_cast %76 : vector<1x8x8x32xbf16> to vector<64x32xbf16>
    %c7 = arith.constant 7 : index
    %c0_86 = arith.constant 0 : index
    %c0_87 = arith.constant 0 : index
    %78 = vector.load %arg4[%c7, %c0_86, %c0_87] : memref<9x32x128xbf16, #tpu.memory_space<vmem>>, vector<1x32x128xbf16>
    %79 = vector.shape_cast %78 : vector<1x32x128xbf16> to vector<32x128xbf16>
    %cst_88 = arith.constant dense<0.000000e+00> : vector<64x128xf32>
    %80 = tpu.matmul %77, %79, %cst_88 {dimension_numbers = #tpu.dot_dimension_numbers<[1], [0], [0], [1], [0, 0, 1, 1], [], []>} : vector<64x32xbf16>, vector<32x128xbf16>, vector<64x128xf32> -> vector<64x128xf32>
    %81 = arith.addf %75, %80 : vector<64x128xf32>
    %c0_89 = arith.constant 0 : index
    %c2_90 = arith.constant 2 : index
    %c2_91 = arith.constant 2 : index
    %c0_92 = arith.constant 0 : index
    %82 = vector.load %arg9[%c0_89, %c2_90, %c2_91, %c0_92] : memref<1x10x16x32xbf16, #tpu.memory_space<vmem>>, vector<1x8x8x32xbf16>
    %83 = vector.shape_cast %82 : vector<1x8x8x32xbf16> to vector<64x32xbf16>
    %c8 = arith.constant 8 : index
    %c0_93 = arith.constant 0 : index
    %c0_94 = arith.constant 0 : index
    %84 = vector.load %arg4[%c8, %c0_93, %c0_94] : memref<9x32x128xbf16, #tpu.memory_space<vmem>>, vector<1x32x128xbf16>
    %85 = vector.shape_cast %84 : vector<1x32x128xbf16> to vector<32x128xbf16>
    %cst_95 = arith.constant dense<0.000000e+00> : vector<64x128xf32>
    %86 = tpu.matmul %83, %85, %cst_95 {dimension_numbers = #tpu.dot_dimension_numbers<[1], [0], [0], [1], [0, 0, 1, 1], [], []>} : vector<64x32xbf16>, vector<32x128xbf16>, vector<64x128xf32> -> vector<64x128xf32>
    %87 = arith.addf %81, %86 : vector<64x128xf32>
    %c0_96 = arith.constant 0 : index
    %c0_97 = arith.constant 0 : index
    %88 = vector.load %arg5[%c0_96, %c0_97] : memref<1x128xf32, #tpu.memory_space<vmem>>, vector<1x128xf32>
    %89 = vector.broadcast %88 : vector<1x128xf32> to vector<64x128xf32>
    %90 = arith.addf %87, %89 : vector<64x128xf32>
    %cst_98 = arith.constant 5.000000e-01 : f32
    %91 = vector.broadcast %cst_98 : f32 to vector<64x128xf32>
    %92 = arith.mulf %91, %90 : vector<64x128xf32>
    %cst_99 = arith.constant 4.471500e-02 : f32
    %93 = vector.broadcast %cst_99 : f32 to vector<64x128xf32>
    %94 = arith.mulf %93, %90 : vector<64x128xf32>
    %95 = arith.mulf %94, %90 : vector<64x128xf32>
    %96 = arith.mulf %95, %90 : vector<64x128xf32>
    %97 = arith.addf %90, %96 : vector<64x128xf32>
    %cst_100 = arith.constant 0.797884583 : f32
    %98 = vector.broadcast %cst_100 : f32 to vector<64x128xf32>
    %99 = arith.mulf %98, %97 : vector<64x128xf32>
    %100 = math.tanh %99 : vector<64x128xf32>
    %cst_101 = arith.constant 1.000000e+00 : f32
    %101 = vector.broadcast %cst_101 : f32 to vector<64x128xf32>
    %102 = arith.addf %101, %100 : vector<64x128xf32>
    %103 = arith.mulf %92, %102 : vector<64x128xf32>
    %cst_102 = arith.constant 0.000000e+00 : bf16
    %104 = vector.broadcast %cst_102 : bf16 to vector<1x1x16x128xbf16>
    %cst_103 = arith.constant 0.000000e+00 : bf16
    %105 = vector.broadcast %cst_103 : bf16 to vector<1x8x1x128xbf16>
    %c0_104 = arith.constant 0 : index
    %c0_105 = arith.constant 0 : index
    %c0_106 = arith.constant 0 : index
    %c0_107 = arith.constant 0 : index
    %106 = vector.load %arg10[%c0_104, %c0_105, %c0_106, %c0_107] : memref<1x10x16x128xbf16, #tpu.memory_space<vmem>>, vector<1x1x16x128xbf16>
    tpu.vector_store %arg10[%c0_104, %c0_105, %c0_106, %c0_107], %104 {strides = array<i32>} : memref<1x10x16x128xbf16, #tpu.memory_space<vmem>>, vector<1x1x16x128xbf16>,
    %c0_108 = arith.constant 0 : index
    %c9_109 = arith.constant 9 : index
    %c0_110 = arith.constant 0 : index
    %c0_111 = arith.constant 0 : index
    %107 = vector.load %arg10[%c0_108, %c9_109, %c0_110, %c0_111] : memref<1x10x16x128xbf16, #tpu.memory_space<vmem>>, vector<1x1x16x128xbf16>
    tpu.vector_store %arg10[%c0_108, %c9_109, %c0_110, %c0_111], %104 {strides = array<i32>} : memref<1x10x16x128xbf16, #tpu.memory_space<vmem>>, vector<1x1x16x128xbf16>,
    %c0_112 = arith.constant 0 : index
    %c1_113 = arith.constant 1 : index
    %c0_114 = arith.constant 0 : index
    %c0_115 = arith.constant 0 : index
    %108 = vector.load %arg10[%c0_112, %c1_113, %c0_114, %c0_115] : memref<1x10x16x128xbf16, #tpu.memory_space<vmem>>, vector<1x8x1x128xbf16>
    tpu.vector_store %arg10[%c0_112, %c1_113, %c0_114, %c0_115], %105 {strides = array<i32>} : memref<1x10x16x128xbf16, #tpu.memory_space<vmem>>, vector<1x8x1x128xbf16>,
    %c0_116 = arith.constant 0 : index
    %c1_117 = arith.constant 1 : index
    %c9_118 = arith.constant 9 : index
    %c0_119 = arith.constant 0 : index
    %109 = vector.load %arg10[%c0_116, %c1_117, %c9_118, %c0_119] : memref<1x10x16x128xbf16, #tpu.memory_space<vmem>>, vector<1x8x1x128xbf16>
    tpu.vector_store %arg10[%c0_116, %c1_117, %c9_118, %c0_119], %105 {strides = array<i32>} : memref<1x10x16x128xbf16, #tpu.memory_space<vmem>>, vector<1x8x1x128xbf16>,
    %110 = vector.shape_cast %103 : vector<64x128xf32> to vector<1x8x8x128xf32>
    %111 = arith.truncf %110 : vector<1x8x8x128xf32> to vector<1x8x8x128xbf16>
    %c0_120 = arith.constant 0 : index
    %c1_121 = arith.constant 1 : index
    %c1_122 = arith.constant 1 : index
    %c0_123 = arith.constant 0 : index
    %112 = vector.load %arg10[%c0_120, %c1_121, %c1_122, %c0_123] : memref<1x10x16x128xbf16, #tpu.memory_space<vmem>>, vector<1x8x8x128xbf16>
    tpu.vector_store %arg10[%c0_120, %c1_121, %c1_122, %c0_123], %111 {strides = array<i32>} : memref<1x10x16x128xbf16, #tpu.memory_space<vmem>>, vector<1x8x8x128xbf16>,
    %c0_124 = arith.constant 0 : index
    %c0_125 = arith.constant 0 : index
    %c0_126 = arith.constant 0 : index
    %c0_127 = arith.constant 0 : index
    %113 = vector.load %arg10[%c0_124, %c0_125, %c0_126, %c0_127] : memref<1x10x16x128xbf16, #tpu.memory_space<vmem>>, vector<1x8x8x128xbf16>
    %114 = vector.shape_cast %113 : vector<1x8x8x128xbf16> to vector<64x128xbf16>
    %c0_128 = arith.constant 0 : index
    %c0_129 = arith.constant 0 : index
    %115 = vector.load %arg11[%c0_128, %c0_129] : memref<64x1152xbf16, #tpu.memory_space<vmem>>, vector<64x128xbf16>
    tpu.vector_store %arg11[%c0_128, %c0_129], %114 {strides = array<i32>} : memref<64x1152xbf16, #tpu.memory_space<vmem>>, vector<64x128xbf16>,
    %c0_130 = arith.constant 0 : index
    %c0_131 = arith.constant 0 : index
    %c1_132 = arith.constant 1 : index
    %c0_133 = arith.constant 0 : index
    %116 = vector.load %arg10[%c0_130, %c0_131, %c1_132, %c0_133] : memref<1x10x16x128xbf16, #tpu.memory_space<vmem>>, vector<1x8x8x128xbf16>
    %117 = vector.shape_cast %116 : vector<1x8x8x128xbf16> to vector<64x128xbf16>
    %c0_134 = arith.constant 0 : index
    %c128 = arith.constant 128 : index
    %118 = vector.load %arg11[%c0_134, %c128] : memref<64x1152xbf16, #tpu.memory_space<vmem>>, vector<64x128xbf16>
    tpu.vector_store %arg11[%c0_134, %c128], %117 {strides = array<i32>} : memref<64x1152xbf16, #tpu.memory_space<vmem>>, vector<64x128xbf16>,
    %c0_135 = arith.constant 0 : index
    %c0_136 = arith.constant 0 : index
    %c2_137 = arith.constant 2 : index
    %c0_138 = arith.constant 0 : index
    %119 = vector.load %arg10[%c0_135, %c0_136, %c2_137, %c0_138] : memref<1x10x16x128xbf16, #tpu.memory_space<vmem>>, vector<1x8x8x128xbf16>
    %120 = vector.shape_cast %119 : vector<1x8x8x128xbf16> to vector<64x128xbf16>
    %c0_139 = arith.constant 0 : index
    %c256 = arith.constant 256 : index
    %121 = vector.load %arg11[%c0_139, %c256] : memref<64x1152xbf16, #tpu.memory_space<vmem>>, vector<64x128xbf16>
    tpu.vector_store %arg11[%c0_139, %c256], %120 {strides = array<i32>} : memref<64x1152xbf16, #tpu.memory_space<vmem>>, vector<64x128xbf16>,
    %c0_140 = arith.constant 0 : index
    %c1_141 = arith.constant 1 : index
    %c0_142 = arith.constant 0 : index
    %c0_143 = arith.constant 0 : index
    %122 = vector.load %arg10[%c0_140, %c1_141, %c0_142, %c0_143] : memref<1x10x16x128xbf16, #tpu.memory_space<vmem>>, vector<1x8x8x128xbf16>
    %123 = vector.shape_cast %122 : vector<1x8x8x128xbf16> to vector<64x128xbf16>
    %c0_144 = arith.constant 0 : index
    %c384 = arith.constant 384 : index
    %124 = vector.load %arg11[%c0_144, %c384] : memref<64x1152xbf16, #tpu.memory_space<vmem>>, vector<64x128xbf16>
    tpu.vector_store %arg11[%c0_144, %c384], %123 {strides = array<i32>} : memref<64x1152xbf16, #tpu.memory_space<vmem>>, vector<64x128xbf16>,
    %c0_145 = arith.constant 0 : index
    %c1_146 = arith.constant 1 : index
    %c1_147 = arith.constant 1 : index
    %c0_148 = arith.constant 0 : index
    %125 = vector.load %arg10[%c0_145, %c1_146, %c1_147, %c0_148] : memref<1x10x16x128xbf16, #tpu.memory_space<vmem>>, vector<1x8x8x128xbf16>
    %126 = vector.shape_cast %125 : vector<1x8x8x128xbf16> to vector<64x128xbf16>
    %c0_149 = arith.constant 0 : index
    %c512 = arith.constant 512 : index
    %127 = vector.load %arg11[%c0_149, %c512] : memref<64x1152xbf16, #tpu.memory_space<vmem>>, vector<64x128xbf16>
    tpu.vector_store %arg11[%c0_149, %c512], %126 {strides = array<i32>} : memref<64x1152xbf16, #tpu.memory_space<vmem>>, vector<64x128xbf16>,
    %c0_150 = arith.constant 0 : index
    %c1_151 = arith.constant 1 : index
    %c2_152 = arith.constant 2 : index
    %c0_153 = arith.constant 0 : index
    %128 = vector.load %arg10[%c0_150, %c1_151, %c2_152, %c0_153] : memref<1x10x16x128xbf16, #tpu.memory_space<vmem>>, vector<1x8x8x128xbf16>
    %129 = vector.shape_cast %128 : vector<1x8x8x128xbf16> to vector<64x128xbf16>
    %c0_154 = arith.constant 0 : index
    %c640 = arith.constant 640 : index
    %130 = vector.load %arg11[%c0_154, %c640] : memref<64x1152xbf16, #tpu.memory_space<vmem>>, vector<64x128xbf16>
    tpu.vector_store %arg11[%c0_154, %c640], %129 {strides = array<i32>} : memref<64x1152xbf16, #tpu.memory_space<vmem>>, vector<64x128xbf16>,
    %c0_155 = arith.constant 0 : index
    %c2_156 = arith.constant 2 : index
    %c0_157 = arith.constant 0 : index
    %c0_158 = arith.constant 0 : index
    %131 = vector.load %arg10[%c0_155, %c2_156, %c0_157, %c0_158] : memref<1x10x16x128xbf16, #tpu.memory_space<vmem>>, vector<1x8x8x128xbf16>
    %132 = vector.shape_cast %131 : vector<1x8x8x128xbf16> to vector<64x128xbf16>
    %c0_159 = arith.constant 0 : index
    %c768 = arith.constant 768 : index
    %133 = vector.load %arg11[%c0_159, %c768] : memref<64x1152xbf16, #tpu.memory_space<vmem>>, vector<64x128xbf16>
    tpu.vector_store %arg11[%c0_159, %c768], %132 {strides = array<i32>} : memref<64x1152xbf16, #tpu.memory_space<vmem>>, vector<64x128xbf16>,
    %c0_160 = arith.constant 0 : index
    %c2_161 = arith.constant 2 : index
    %c1_162 = arith.constant 1 : index
    %c0_163 = arith.constant 0 : index
    %134 = vector.load %arg10[%c0_160, %c2_161, %c1_162, %c0_163] : memref<1x10x16x128xbf16, #tpu.memory_space<vmem>>, vector<1x8x8x128xbf16>
    %135 = vector.shape_cast %134 : vector<1x8x8x128xbf16> to vector<64x128xbf16>
    %c0_164 = arith.constant 0 : index
    %c896 = arith.constant 896 : index
    %136 = vector.load %arg11[%c0_164, %c896] : memref<64x1152xbf16, #tpu.memory_space<vmem>>, vector<64x128xbf16>
    tpu.vector_store %arg11[%c0_164, %c896], %135 {strides = array<i32>} : memref<64x1152xbf16, #tpu.memory_space<vmem>>, vector<64x128xbf16>,
    %c0_165 = arith.constant 0 : index
    %c2_166 = arith.constant 2 : index
    %c2_167 = arith.constant 2 : index
    %c0_168 = arith.constant 0 : index
    %137 = vector.load %arg10[%c0_165, %c2_166, %c2_167, %c0_168] : memref<1x10x16x128xbf16, #tpu.memory_space<vmem>>, vector<1x8x8x128xbf16>
    %138 = vector.shape_cast %137 : vector<1x8x8x128xbf16> to vector<64x128xbf16>
    %c0_169 = arith.constant 0 : index
    %c1024 = arith.constant 1024 : index
    %139 = vector.load %arg11[%c0_169, %c1024] : memref<64x1152xbf16, #tpu.memory_space<vmem>>, vector<64x128xbf16>
    tpu.vector_store %arg11[%c0_169, %c1024], %138 {strides = array<i32>} : memref<64x1152xbf16, #tpu.memory_space<vmem>>, vector<64x128xbf16>,
    %c0_170 = arith.constant 0 : index
    %c0_171 = arith.constant 0 : index
    %140 = vector.load %arg11[%c0_170, %c0_171] : memref<64x1152xbf16, #tpu.memory_space<vmem>>, vector<64x1152xbf16>
    %c0_172 = arith.constant 0 : index
    %c0_173 = arith.constant 0 : index
    %141 = vector.load %arg6[%c0_172, %c0_173] : memref<1152x32xbf16, #tpu.memory_space<vmem>>, vector<1152x32xbf16>
    %cst_174 = arith.constant dense<0.000000e+00> : vector<64x32xf32>
    %142 = tpu.matmul %140, %141, %cst_174 {dimension_numbers = #tpu.dot_dimension_numbers<[1], [0], [0], [1], [0, 0, 1, 1], [], []>} : vector<64x1152xbf16>, vector<1152x32xbf16>, vector<64x32xf32> -> vector<64x32xf32>
    %c0_175 = arith.constant 0 : index
    %c0_176 = arith.constant 0 : index
    %143 = vector.load %arg7[%c0_175, %c0_176] : memref<1x32xf32, #tpu.memory_space<vmem>>, vector<1x32xf32>
    %144 = vector.broadcast %143 : vector<1x32xf32> to vector<64x32xf32>
    %145 = arith.addf %142, %144 : vector<64x32xf32>
    %146 = vector.shape_cast %145 : vector<64x32xf32> to vector<1x8x8x32xf32>
    %147 = arith.addf %26, %146 : vector<1x8x8x32xf32>
    %148 = vector.shape_cast %147 : vector<1x8x8x32xf32> to vector<1x8x256xf32>
    %c0_177 = arith.constant 0 : index
    %c0_178 = arith.constant 0 : index
    %c0_179 = arith.constant 0 : index
    %149 = vector.load %arg8[%c0_177, %c0_178, %c0_179] : memref<1x8x256xf32, #tpu.memory_space<vmem>>, vector<1x8x256xf32>
    tpu.vector_store %arg8[%c0_177, %c0_178, %c0_179], %148 {strides = array<i32>} : memref<1x8x256xf32, #tpu.memory_space<vmem>>, vector<1x8x256xf32>,
    return
  }
  func.func @transform_0(%arg0: i32) -> (i32, i32, i32, i32) {
    %c0_i32 = arith.constant 0 : i32
    %c0_i32_0 = arith.constant 0 : i32
    %c0_i32_1 = arith.constant 0 : i32
    %c0_i32_2 = arith.constant 0 : i32
    return %arg0, %c0_i32, %c0_i32_0, %c0_i32_1 : i32, i32, i32, i32
  }
  func.func @transform_1(%arg0: i32) -> (i32, i32) {
    %c0_i32 = arith.constant 0 : i32
    %c0_i32_0 = arith.constant 0 : i32
    %c0_i32_1 = arith.constant 0 : i32
    return %c0_i32, %c0_i32_0 : i32, i32
  }
  func.func @transform_2(%arg0: i32) -> (i32, i32) {
    %c0_i32 = arith.constant 0 : i32
    %c0_i32_0 = arith.constant 0 : i32
    %c0_i32_1 = arith.constant 0 : i32
    return %c0_i32, %c0_i32_0 : i32, i32
  }
  func.func @transform_3(%arg0: i32) -> (i32, i32, i32) {
    %c0_i32 = arith.constant 0 : i32
    %c0_i32_0 = arith.constant 0 : i32
    %c0_i32_1 = arith.constant 0 : i32
    %c0_i32_2 = arith.constant 0 : i32
    return %c0_i32, %c0_i32_0, %c0_i32_1 : i32, i32, i32
  }
  func.func @transform_4(%arg0: i32) -> (i32, i32) {
    %c0_i32 = arith.constant 0 : i32
    %c0_i32_0 = arith.constant 0 : i32
    %c0_i32_1 = arith.constant 0 : i32
    return %c0_i32, %c0_i32_0 : i32, i32
  }
  func.func @transform_5(%arg0: i32) -> (i32, i32) {
    %c0_i32 = arith.constant 0 : i32
    %c0_i32_0 = arith.constant 0 : i32
    %c0_i32_1 = arith.constant 0 : i32
    return %c0_i32, %c0_i32_0 : i32, i32
  }
  func.func @transform_6(%arg0: i32) -> (i32, i32) {
    %c0_i32 = arith.constant 0 : i32
    %c0_i32_0 = arith.constant 0 : i32
    %c0_i32_1 = arith.constant 0 : i32
    return %c0_i32, %c0_i32_0 : i32, i32
  }
  func.func @transform_7(%arg0: i32) -> (i32, i32, i32) {
    %c0_i32 = arith.constant 0 : i32
    %c0_i32_0 = arith.constant 0 : i32
    %c0_i32_1 = arith.constant 0 : i32
    return %arg0, %c0_i32, %c0_i32_0 : i32, i32, i32
  }
}

</mosaic_0001>

<llo_original>
// kernel: tpu_custom_call.1
$region0: #{tpu_custom_call.1}
  #allocation0 [shape = 'u32[]', space=smem, size = 0x4, offset = 0x4, fixed_abs, tag = 'smem constant byte address 0x4 - core index']
  #allocation1 [shape = 'u32[144,128]{1,0:T(1,128)}', space=vmem, size = 0x12000, scoped, tag = 'internal scratch']
  #allocation2 [shape = 'bf16[1,10,16,32]{3,2,1,0:T(16,128)(2,1)}', space=vmem, size = 0xa000, scoped, tag = 'scratch operand']
  #allocation3 [shape = 'bf16[1,10,16,128]{3,2,1,0:T(16,128)(2,1)}', space=vmem, size = 0xa000, scoped, tag = 'scratch operand']
  #allocation4 [shape = 'bf16[64,1152]{1,0:T(16,128)(2,1)}', space=vmem, size = 0x24000, scoped, tag = 'scratch operand']
  %s0 = inlined_call_operand.hbm [shape: f32[2,8,8,32], index: 0, kind: input, shape index: {}]
  %s1 = inlined_call_operand.hbm [shape: f32[1,32], index: 1, kind: input, shape index: {}]
  %s2 = inlined_call_operand.hbm [shape: f32[1,32], index: 2, kind: input, shape index: {}]
  %s3 = inlined_call_operand.hbm [shape: bf16[9,32,128], index: 3, kind: input, shape index: {}]
  %s4 = inlined_call_operand.hbm [shape: f32[1,128], index: 4, kind: input, shape index: {}]
  %s5 = inlined_call_operand.hbm [shape: bf16[1152,32], index: 5, kind: input, shape index: {}]
  %s6 = inlined_call_operand.hbm [shape: f32[1,32], index: 6, kind: input, shape index: {}]
  %s7 = inlined_call_operand.hbm [shape: f32[2,8,256], index: 7, kind: output, shape index: {}]
  %s8 = sld [smem:[#allocation0]]
  $region89: #{tpu_custom_call.1} parent=0
    _
  %s10 = ssub.s32 1, %s8
  %s11 = scalar_select 0, %s10, %s8
  $region1: #{tpu_custom_call.1} parent=0
    #allocation5 [shape = 'u8[65536]{0}', space=vmem, size = 0x10000, scoped, tag = 'input window, operand 0']
    #allocation6 [shape = 's32[2]{0}', space=sflag, size = 0x8, scoped, tag = 'scoped memory for tpu_custom_call.1']
    #allocation7 [shape = 's32[2]{0}', space=sflag, size = 0x8, scoped, tag = 'scoped memory for tpu_custom_call.1']
    #allocation8 [shape = 'u8[512]{0}', space=vmem, size = 0x400, scoped, tag = 'input window, operand 1, single buffered']
    #allocation9 [shape = 's32[1]{0}', space=sflag, size = 0x4, scoped, tag = 'scoped memory for tpu_custom_call.1']
    #allocation10 [shape = 'u8[512]{0}', space=vmem, size = 0x400, scoped, tag = 'input window, operand 2, single buffered']
    #allocation11 [shape = 'u8[73728]{0}', space=vmem, size = 0x12000, scoped, tag = 'input window, operand 3, single buffered']
    #allocation12 [shape = 's32[1]{0}', space=sflag, size = 0x4, scoped, tag = 'scoped memory for tpu_custom_call.1']
    #allocation13 [shape = 'u8[512]{0}', space=vmem, size = 0x400, scoped, tag = 'input window, operand 4, single buffered']
    #allocation14 [shape = 'u8[294912]{0}', space=vmem, size = 0x48000, scoped, tag = 'input window, operand 5, single buffered']
    #allocation15 [shape = 's32[1]{0}', space=sflag, size = 0x4, scoped, tag = 'scoped memory for tpu_custom_call.1']
    #allocation16 [shape = 'u8[512]{0}', space=vmem, size = 0x400, scoped, tag = 'input window, operand 6, single buffered']
    #allocation17 [shape = 'u8[16384]{0}', space=vmem, size = 0x4000, scoped, tag = 'output window, operand 0']
    %12 = vsyncpa [#allocation6], 0
    %s13 = scalar_lea.sflag [#allocation6], 1
    %14 = vsyncpa %s13, 0
    %15 = vsyncpa [#allocation9], 0
    %16 = vsyncpa [#allocation12], 0
    %17 = vsyncpa [#allocation15], 0
    %18 = vsyncpa [#allocation7], 0
    %s19 = scalar_lea.sflag [#allocation7], 1
    %20 = vsyncpa %s19, 0
    loop: start=0, step=1, limit=4
    $region2: #{tpu_custom_call.1} parent=1 // loop_pre_header
      _
    $region3: #{tpu_custom_call.1} parent=1 // loop_header
      %s22 = sphi 0, %s26
      %p23 = scmp.ge.s32.totalorder %s22, 4
      %s32 = sphi 0, %s34
      %s35 = sphi 0, %s32
      %s36 = sphi 0, %s35
      %s52 = sphi 0, %s36
      %s56 = sphi 0, %s56
      %s58 = sphi 0, %s56
      %s59 = sphi 0, %s58
      %s73 = sphi 0, %s59
      %s77 = sphi 0, %s77
      %s79 = sphi 0, %s77
      %s80 = sphi 0, %s79
      %s94 = sphi 0, %s80
      %s98 = sphi 0, %s98
      %s100 = sphi 0, %s98
      %s101 = sphi 0, %s100
      %s115 = sphi 0, %s101
      %s119 = sphi 0, %s119
      %s121 = sphi 0, %s119
      %s122 = sphi 0, %s121
      %s136 = sphi 0, %s122
      %s140 = sphi 0, %s140
      %s142 = sphi 0, %s140
      %s143 = sphi 0, %s142
      %s157 = sphi 0, %s143
      %s161 = sphi 0, %s161
      %s163 = sphi 0, %s161
      %s164 = sphi 0, %s163
      %s178 = sphi 0, %s164
      %s184 = sphi 0, %s186
      %s187 = sphi 0, %s184
      %s188 = sphi 0, %s187
      %s204 = sphi 0, %s188
    $region4: #{tpu_custom_call.1} parent=1 // loop_header_branch
      %25 = sbr.rel (%p23) target = $region8
    $region5: #{tpu_custom_call.1} parent=1 // loop_body
      %s27 = ssub.s32 %s22, 1
      %s28 = ssub.s32 %s22, 2
      %s29 = sadd.s32 %s22, 1
      %s30 = ssub.s32 %s22, %s29
      %p31 = scmp.eq.s32.totalorder %s30, 0
      %s33 = sadd.s32 %s32, 1
      %s34 = scalar_select %p31, %s32, %s33
      %p37 = pneg %p31
      %p38 = scmp.eq.s32.totalorder %s22, 1
      %p39 = por %p37, %p38
      %p40 = scmp.ne.s32.totalorder %s32, %s35
      %p41 = scmp.eq.s32.totalorder %s22, 0
      %p42 = por %p40, %p41
      %p43 = scmp.ne.s32.totalorder %s32, %s35
      %p44 = scmp.eq.s32.totalorder %s27, 1
      %p45 = por %p43, %p44
      %p46 = scmp.ne.s32.totalorder %s35, %s36
      %p47 = scmp.eq.s32.totalorder %s27, 0
      %p48 = por %p46, %p47
      %p49 = scmp.ne.s32.totalorder %s35, %s36
      %p50 = scmp.eq.s32.totalorder %s28, 1
      %p51 = por %p49, %p50
      %p53 = scmp.ne.s32.totalorder %s36, %s52
      %p54 = scmp.eq.s32.totalorder %s28, 0
      %p55 = por %p53, %p54
      %s57 = sadd.s32 %s56, 1
      %p60 = scmp.eq.s32.totalorder %s22, 1
      %p61 = scmp.ne.s32.totalorder %s56, %s58
      %p62 = scmp.eq.s32.totalorder %s22, 0
      %p63 = por %p61, %p62
      %p64 = scmp.ne.s32.totalorder %s56, %s58
      %p65 = scmp.eq.s32.totalorder %s27, 1
      %p66 = por %p64, %p65
      %p67 = scmp.ne.s32.totalorder %s58, %s59
      %p68 = scmp.eq.s32.totalorder %s27, 0
      %p69 = por %p67, %p68
      %p70 = scmp.ne.s32.totalorder %s58, %s59
      %p71 = scmp.eq.s32.totalorder %s28, 1
      %p72 = por %p70, %p71
      %p74 = scmp.ne.s32.totalorder %s59, %s73
      %p75 = scmp.eq.s32.totalorder %s28, 0
      %p76 = por %p74, %p75
      %s78 = sadd.s32 %s77, 1
      %p81 = scmp.eq.s32.totalorder %s22, 1
      %p82 = scmp.ne.s32.totalorder %s77, %s79
      %p83 = scmp.eq.s32.totalorder %s22, 0
      %p84 = por %p82, %p83
      %p85 = scmp.ne.s32.totalorder %s77, %s79
      %p86 = scmp.eq.s32.totalorder %s27, 1
      %p87 = por %p85, %p86
      %p88 = scmp.ne.s32.totalorder %s79, %s80
      %p89 = scmp.eq.s32.totalorder %s27, 0
      %p90 = por %p88, %p89
      %p91 = scmp.ne.s32.totalorder %s79, %s80
      %p92 = scmp.eq.s32.totalorder %s28, 1
      %p93 = por %p91, %p92
      %p95 = scmp.ne.s32.totalorder %s80, %s94
      %p96 = scmp.eq.s32.totalorder %s28, 0
      %p97 = por %p95, %p96
      %s99 = sadd.s32 %s98, 1
      %p102 = scmp.eq.s32.totalorder %s22, 1
      %p103 = scmp.ne.s32.totalorder %s98, %s100
      %p104 = scmp.eq.s32.totalorder %s22, 0
      %p105 = por %p103, %p104
      %p106 = scmp.ne.s32.totalorder %s98, %s100
      %p107 = scmp.eq.s32.totalorder %s27, 1
      %p108 = por %p106, %p107
      %p109 = scmp.ne.s32.totalorder %s100, %s101
      %p110 = scmp.eq.s32.totalorder %s27, 0
      %p111 = por %p109, %p110
      %p112 = scmp.ne.s32.totalorder %s100, %s101
      %p113 = scmp.eq.s32.totalorder %s28, 1
      %p114 = por %p112, %p113
      %p116 = scmp.ne.s32.totalorder %s101, %s115
      %p117 = scmp.eq.s32.totalorder %s28, 0
      %p118 = por %p116, %p117
      %s120 = sadd.s32 %s119, 1
      %p123 = scmp.eq.s32.totalorder %s22, 1
      %p124 = scmp.ne.s32.totalorder %s119, %s121
      %p125 = scmp.eq.s32.totalorder %s22, 0
      %p126 = por %p124, %p125
      %p127 = scmp.ne.s32.totalorder %s119, %s121
      %p128 = scmp.eq.s32.totalorder %s27, 1
      %p129 = por %p127, %p128
      %p130 = scmp.ne.s32.totalorder %s121, %s122
      %p131 = scmp.eq.s32.totalorder %s27, 0
      %p132 = por %p130, %p131
      %p133 = scmp.ne.s32.totalorder %s121, %s122
      %p134 = scmp.eq.s32.totalorder %s28, 1
      %p135 = por %p133, %p134
      %p137 = scmp.ne.s32.totalorder %s122, %s136
      %p138 = scmp.eq.s32.totalorder %s28, 0
      %p139 = por %p137, %p138
      %s141 = sadd.s32 %s140, 1
      %p144 = scmp.eq.s32.totalorder %s22, 1
      %p145 = scmp.ne.s32.totalorder %s140, %s142
      %p146 = scmp.eq.s32.totalorder %s22, 0
      %p147 = por %p145, %p146
      %p148 = scmp.ne.s32.totalorder %s140, %s142
      %p149 = scmp.eq.s32.totalorder %s27, 1
      %p150 = por %p148, %p149
      %p151 = scmp.ne.s32.totalorder %s142, %s143
      %p152 = scmp.eq.s32.totalorder %s27, 0
      %p153 = por %p151, %p152
      %p154 = scmp.ne.s32.totalorder %s142, %s143
      %p155 = scmp.eq.s32.totalorder %s28, 1
      %p156 = por %p154, %p155
      %p158 = scmp.ne.s32.totalorder %s143, %s157
      %p159 = scmp.eq.s32.totalorder %s28, 0
      %p160 = por %p158, %p159
      %s162 = sadd.s32 %s161, 1
      %p165 = scmp.eq.s32.totalorder %s22, 1
      %p166 = scmp.ne.s32.totalorder %s161, %s163
      %p167 = scmp.eq.s32.totalorder %s22, 0
      %p168 = por %p166, %p167
      %p169 = scmp.ne.s32.totalorder %s161, %s163
      %p170 = scmp.eq.s32.totalorder %s27, 1
      %p171 = por %p169, %p170
      %p172 = scmp.ne.s32.totalorder %s163, %s164
      %p173 = scmp.eq.s32.totalorder %s27, 0
      %p174 = por %p172, %p173
      %p175 = scmp.ne.s32.totalorder %s163, %s164
      %p176 = scmp.eq.s32.totalorder %s28, 1
      %p177 = por %p175, %p176
      %p179 = scmp.ne.s32.totalorder %s164, %s178
      %p180 = scmp.eq.s32.totalorder %s28, 0
      %p181 = por %p179, %p180
      %s182 = ssub.s32 %s22, %s29
      %p183 = scmp.eq.s32.totalorder %s182, 0
      %s185 = sadd.s32 %s184, 1
      %s186 = scalar_select %p183, %s184, %s185
      %p189 = pneg %p183
      %p190 = scmp.eq.s32.totalorder %s22, 1
      %p191 = por %p189, %p190
      %p192 = scmp.ne.s32.totalorder %s184, %s187
      %p193 = scmp.eq.s32.totalorder %s22, 0
      %p194 = por %p192, %p193
      %p195 = scmp.ne.s32.totalorder %s184, %s187
      %p196 = scmp.eq.s32.totalorder %s27, 1
      %p197 = por %p195, %p196
      %p198 = scmp.ne.s32.totalorder %s187, %s188
      %p199 = scmp.eq.s32.totalorder %s27, 0
      %p200 = por %p198, %p199
      %p201 = scmp.ne.s32.totalorder %s187, %s188
      %p202 = scmp.eq.s32.totalorder %s28, 1
      %p203 = por %p201, %p202
      %p205 = scmp.ne.s32.totalorder %s188, %s204
      %p206 = scmp.eq.s32.totalorder %s28, 0
      %p207 = por %p205, %p206
      %p208 = scmp.le.s32.totalorder 1, %s22
      %p209 = scmp.lt.s32.totalorder %s22, 3
      %p210 = pnand %p208, %p209
      %p211 = pneg %p210
      // Predicated region
      $region9: #{tpu_custom_call.1} parent=5 // pred_check
        _
      $region10: #{tpu_custom_call.1} parent=5 // pred_check_branch
        %213 = sbr.rel (%p210) target = $region12
      $region11: #{tpu_custom_call.1} parent=5 // pred_region
        %s214 = ssub.s32 %s22, 1
        // Predicated region
        $region13: #{tpu_custom_call.1} parent=11 // pred_check
          %p215 = pneg %p69
        $region14: #{tpu_custom_call.1} parent=11 // pred_check_branch
          %217 = sbr.rel (%p215) target = $region16
        $region15: #{tpu_custom_call.1} parent=11 // pred_region
          %s219 = ssub.s32 16, 16
          %220 = vsyncadd [#allocation9], %s219
          %s222 = sshll.u32 [#allocation8], 4
          %s223 = int_to_ptr.vmem [resolvable:$true] %s222
          %225 = dma.hbm_to_vmem [thread:$0]  %s1, 16, %s223, [#allocation9]
        $region16: #{tpu_custom_call.1} parent=11 // pred_fallthru
          _
        // Predicated region
        $region17: #{tpu_custom_call.1} parent=11 // pred_check
          %p226 = pneg %p90
        $region18: #{tpu_custom_call.1} parent=11 // pred_check_branch
          %228 = sbr.rel (%p226) target = $region20
        $region19: #{tpu_custom_call.1} parent=11 // pred_region
          %s230 = ssub.s32 16, 16
          %231 = vsyncadd [#allocation9], %s230
          %s233 = sshll.u32 [#allocation10], 4
          %s234 = int_to_ptr.vmem [resolvable:$true] %s233
          %236 = dma.hbm_to_vmem [thread:$0]  %s2, 16, %s234, [#allocation9]
        $region20: #{tpu_custom_call.1} parent=11 // pred_fallthru
          _
        // Predicated region
        $region21: #{tpu_custom_call.1} parent=11 // pred_check
          %p237 = pneg %p111
        $region22: #{tpu_custom_call.1} parent=11 // pred_check_branch
          %239 = sbr.rel (%p237) target = $region24
        $region23: #{tpu_custom_call.1} parent=11 // pred_region
          %s241 = ssub.s32 2304, 2304
          %242 = vsyncadd [#allocation12], %s241
          %s243 = sshll.u32 [#allocation11], 4
          %s244 = int_to_ptr.vmem [resolvable:$true] %s243
          %249 = dma.hbm_to_vmem [thread:$0]  %s3, 2304, %s244, [#allocation12], 64, 64, 4
        $region24: #{tpu_custom_call.1} parent=11 // pred_fallthru
          _
        // Predicated region
        $region25: #{tpu_custom_call.1} parent=11 // pred_check
          %p250 = pneg %p132
        $region26: #{tpu_custom_call.1} parent=11 // pred_check_branch
          %252 = sbr.rel (%p250) target = $region28
        $region27: #{tpu_custom_call.1} parent=11 // pred_region
          %s254 = ssub.s32 16, 16
          %255 = vsyncadd [#allocation12], %s254
          %s257 = sshll.u32 [#allocation13], 4
          %s258 = int_to_ptr.vmem [resolvable:$true] %s257
          %260 = dma.hbm_to_vmem [thread:$0]  %s4, 16, %s258, [#allocation12]
        $region28: #{tpu_custom_call.1} parent=11 // pred_fallthru
          _
        // Predicated region
        $region29: #{tpu_custom_call.1} parent=11 // pred_check
          %p261 = pneg %p153
        $region30: #{tpu_custom_call.1} parent=11 // pred_check_branch
          %263 = sbr.rel (%p261) target = $region32
        $region31: #{tpu_custom_call.1} parent=11 // pred_region
          %s265 = ssub.s32 9216, 9216
          %266 = vsyncadd [#allocation15], %s265
          %s267 = sshll.u32 [#allocation14], 4
          %s268 = int_to_ptr.vmem [resolvable:$true] %s267
          %273 = dma.hbm_to_vmem [thread:$0]  %s5, 9216, %s268, [#allocation15], 64, 64, 4
        $region32: #{tpu_custom_call.1} parent=11 // pred_fallthru
          _
        // Predicated region
        $region33: #{tpu_custom_call.1} parent=11 // pred_check
          %p274 = pneg %p174
        $region34: #{tpu_custom_call.1} parent=11 // pred_check_branch
          %276 = sbr.rel (%p274) target = $region36
        $region35: #{tpu_custom_call.1} parent=11 // pred_region
          %s278 = ssub.s32 16, 16
          %279 = vsyncadd [#allocation15], %s278
          %s281 = sshll.u32 [#allocation16], 4
          %s282 = int_to_ptr.vmem [resolvable:$true] %s281
          %284 = dma.hbm_to_vmem [thread:$0]  %s6, 16, %s282, [#allocation15]
        $region36: #{tpu_custom_call.1} parent=11 // pred_fallthru
          _
      $region12: #{tpu_custom_call.1} parent=5 // pred_fallthru
        _
      %p285 = scmp.lt.s32.totalorder %s22, 2
      // Predicated region
      $region37: #{tpu_custom_call.1} parent=5 // pred_check
        %p286 = pneg %p285
      $region38: #{tpu_custom_call.1} parent=5 // pred_check_branch
        %288 = sbr.rel (%p286) target = $region40
      $region39: #{tpu_custom_call.1} parent=5 // pred_region
        // Predicated region
        $region41: #{tpu_custom_call.1} parent=39 // pred_check
          %p289 = pneg %p42
        $region42: #{tpu_custom_call.1} parent=39 // pred_check_branch
          %291 = sbr.rel (%p289) target = $region44
        $region43: #{tpu_custom_call.1} parent=39 // pred_region
          %s292 = sand.u32 %s32, 1
          %s293 = scalar_lea.sflag [#allocation6], %s292
          %s294 = sand.u32 %s32, 1
          %s295 = smul.addr %s294, 64
          %s296 = scalar_lea.vmem [#allocation5], %s295
          %s298 = ssub.s32 1024, 1024
          %299 = vsyncadd %s293, %s298
          %s300 = smul.addr %s22, 8
          %s301 = smul.addr %s300, 128
          %s302 = scalar_lea.hbm %s0, %s301
          %s303 = sshll.u32 %s296, 4
          %s304 = int_to_ptr.vmem [resolvable:$true] %s303
          %309 = dma.hbm_to_vmem [thread:$0]  %s302, 1024, %s304, %s293, 128, 128, 8
        $region44: #{tpu_custom_call.1} parent=39 // pred_fallthru
          _
      $region40: #{tpu_custom_call.1} parent=5 // pred_fallthru
        _
      %p310 = scmp.le.s32.totalorder 1, %s22
      %p311 = scmp.lt.s32.totalorder %s22, 3
      %p312 = pnand %p310, %p311
      %p313 = pneg %p312
      // Predicated region
      $region45: #{tpu_custom_call.1} parent=5 // pred_check
        _
      $region46: #{tpu_custom_call.1} parent=5 // pred_check_branch
        %315 = sbr.rel (%p312) target = $region48
      $region47: #{tpu_custom_call.1} parent=5 // pred_region
        %s316 = ssub.s32 %s22, 1
        %s317 = sand.u32 %s35, 1
        %s318 = scalar_lea.sflag [#allocation6], %s317
        %s319 = sand.u32 %s35, 1
        %s320 = smul.addr %s319, 64
        %s321 = scalar_lea.vmem [#allocation5], %s320
        // Predicated region
        $region49: #{tpu_custom_call.1} parent=47 // pred_check
          %p322 = pneg %p48
        $region50: #{tpu_custom_call.1} parent=47 // pred_check_branch
          %324 = sbr.rel (%p322) target = $region52
        $region51: #{tpu_custom_call.1} parent=47 // pred_region
          %325 = dma.done %s318, 1024
        $region52: #{tpu_custom_call.1} parent=47 // pred_fallthru
          _
        // Predicated region
        $region53: #{tpu_custom_call.1} parent=47 // pred_check
          %p326 = pneg %p69
        $region54: #{tpu_custom_call.1} parent=47 // pred_check_branch
          %328 = sbr.rel (%p326) target = $region56
        $region55: #{tpu_custom_call.1} parent=47 // pred_region
          %329 = dma.done [#allocation9], 16
        $region56: #{tpu_custom_call.1} parent=47 // pred_fallthru
          _
        // Predicated region
        $region57: #{tpu_custom_call.1} parent=47 // pred_check
          %p330 = pneg %p90
        $region58: #{tpu_custom_call.1} parent=47 // pred_check_branch
          %332 = sbr.rel (%p330) target = $region60
        $region59: #{tpu_custom_call.1} parent=47 // pred_region
          %333 = dma.done [#allocation9], 16
        $region60: #{tpu_custom_call.1} parent=47 // pred_fallthru
          _
        // Predicated region
        $region61: #{tpu_custom_call.1} parent=47 // pred_check
          %p334 = pneg %p111
        $region62: #{tpu_custom_call.1} parent=47 // pred_check_branch
          %336 = sbr.rel (%p334) target = $region64
        $region63: #{tpu_custom_call.1} parent=47 // pred_region
          %337 = dma.done [#allocation12], 2304
        $region64: #{tpu_custom_call.1} parent=47 // pred_fallthru
          _
        // Predicated region
        $region65: #{tpu_custom_call.1} parent=47 // pred_check
          %p338 = pneg %p132
        $region66: #{tpu_custom_call.1} parent=47 // pred_check_branch
          %340 = sbr.rel (%p338) target = $region68
        $region67: #{tpu_custom_call.1} parent=47 // pred_region
          %341 = dma.done [#allocation12], 16
        $region68: #{tpu_custom_call.1} parent=47 // pred_fallthru
          _
        // Predicated region
        $region69: #{tpu_custom_call.1} parent=47 // pred_check
          %p342 = pneg %p153
        $region70: #{tpu_custom_call.1} parent=47 // pred_check_branch
          %344 = sbr.rel (%p342) target = $region72
        $region71: #{tpu_custom_call.1} parent=47 // pred_region
          %345 = dma.done [#allocation15], 9216
        $region72: #{tpu_custom_call.1} parent=47 // pred_fallthru
          _
        // Predicated region
        $region73: #{tpu_custom_call.1} parent=47 // pred_check
          %p346 = pneg %p174
        $region74: #{tpu_custom_call.1} parent=47 // pred_check_branch
          %348 = sbr.rel (%p346) target = $region76
        $region75: #{tpu_custom_call.1} parent=47 // pred_region
          %349 = dma.done [#allocation15], 16
        $region76: #{tpu_custom_call.1} parent=47 // pred_fallthru
          _
        %s350 = sand.u32 %s35, 1
        %s351 = scalar_lea.sflag [#allocation6], %s350
        %s352 = sand.u32 %s35, 1
        %s353 = smul.addr %s352, 64
        %s354 = scalar_lea.vmem [#allocation5], %s353
        %p355 = pneg %p48
        %p356 = pneg %p45
        %p357 = pneg %p69
        %p358 = pneg %p66
        %p359 = pneg %p90
        %p360 = pneg %p87
        %p361 = pneg %p111
        %p362 = pneg %p108
        %p363 = pneg %p132
        %p364 = pneg %p129
        %p365 = pneg %p153
        %p366 = pneg %p150
        %p367 = pneg %p174
        %p368 = pneg %p171
        %p369 = pneg %p200
        %p370 = pneg %p197
        %s371 = sand.u32 %s187, 1
        %s372 = scalar_lea.sflag [#allocation7], %s371
        %s373 = sand.u32 %s187, 1
        %s374 = smul.addr %s373, 16
        %s375 = scalar_lea.vmem [#allocation17], %s374
        %v377 = vld [vmem:[%s321] sm:$0xff]
        %v378 = vld [vmem:[%s321 + $0x8] sm:$0xff]
        %v379 = vld [vmem:[%s321 + $0x10] sm:$0xff]
        %v380 = vld [vmem:[%s321 + $0x18] sm:$0xff]
        %v381 = vld [vmem:[%s321 + $0x20] sm:$0xff]
        %v382 = vld [vmem:[%s321 + $0x28] sm:$0xff]
        %v383 = vld [vmem:[%s321 + $0x30] sm:$0xff]
        %v384 = vld [vmem:[%s321 + $0x38] sm:$0xff]
        %vm385 = vcmask 261120
        %v386 = vsel %vm385, %v377, 0.0
        %387 = vadd.xlane.f32.xlu0 %v386
        %v388 = vpop.xlane.xlu0 %387
        %v389 = vsel %vm385, %v378, 0.0
        %390 = vadd.xlane.f32.xlu0 %v389
        %v391 = vpop.xlane.xlu0 %390
        %v392 = vsel %vm385, %v379, 0.0
        %393 = vadd.xlane.f32.xlu0 %v392
        %v394 = vpop.xlane.xlu0 %393
        %v395 = vsel %vm385, %v380, 0.0
        %396 = vadd.xlane.f32.xlu0 %v395
        %v397 = vpop.xlane.xlu0 %396
        %v398 = vsel %vm385, %v381, 0.0
        %399 = vadd.xlane.f32.xlu0 %v398
        %v400 = vpop.xlane.xlu0 %399
        %v401 = vsel %vm385, %v382, 0.0
        %402 = vadd.xlane.f32.xlu0 %v401
        %v403 = vpop.xlane.xlu0 %402
        %v404 = vsel %vm385, %v383, 0.0
        %405 = vadd.xlane.f32.xlu0 %v404
        %v406 = vpop.xlane.xlu0 %405
        %v407 = vsel %vm385, %v384, 0.0
        %408 = vadd.xlane.f32.xlu0 %v407
        %v409 = vpop.xlane.xlu0 %408
        %v410 = vrcp.pop 32.0
        %v411 = vmul.f32 %v388, %v410
        %v412 = vmul.f32 %v391, %v410
        %v413 = vmul.f32 %v394, %v410
        %v414 = vmul.f32 %v397, %v410
        %v415 = vmul.f32 %v400, %v410
        %v416 = vmul.f32 %v403, %v410
        %v417 = vmul.f32 %v406, %v410
        %v418 = vmul.f32 %v409, %v410
        %v419 = vsub.f32 %v377, %v411
        %v420 = vsub.f32 %v378, %v412
        %v421 = vsub.f32 %v379, %v413
        %v422 = vsub.f32 %v380, %v414
        %v423 = vsub.f32 %v381, %v415
        %v424 = vsub.f32 %v382, %v416
        %v425 = vsub.f32 %v383, %v417
        %v426 = vsub.f32 %v384, %v418
        %v427 = vmul.f32 %v419, %v419
        %v428 = vmul.f32 %v420, %v420
        %v429 = vmul.f32 %v421, %v421
        %v430 = vmul.f32 %v422, %v422
        %v431 = vmul.f32 %v423, %v423
        %v432 = vmul.f32 %v424, %v424
        %v433 = vmul.f32 %v425, %v425
        %v434 = vmul.f32 %v426, %v426
        %v435 = vsel %vm385, %v427, 0.0
        %436 = vadd.xlane.f32.xlu0 %v435
        %v437 = vpop.xlane.xlu0 %436
        %v438 = vsel %vm385, %v428, 0.0
        %439 = vadd.xlane.f32.xlu0 %v438
        %v440 = vpop.xlane.xlu0 %439
        %v441 = vsel %vm385, %v429, 0.0
        %442 = vadd.xlane.f32.xlu0 %v441
        %v443 = vpop.xlane.xlu0 %442
        %v444 = vsel %vm385, %v430, 0.0
        %445 = vadd.xlane.f32.xlu0 %v444
        %v446 = vpop.xlane.xlu0 %445
        %v447 = vsel %vm385, %v431, 0.0
        %448 = vadd.xlane.f32.xlu0 %v447
        %v449 = vpop.xlane.xlu0 %448
        %v450 = vsel %vm385, %v432, 0.0
        %451 = vadd.xlane.f32.xlu0 %v450
        %v452 = vpop.xlane.xlu0 %451
        %v453 = vsel %vm385, %v433, 0.0
        %454 = vadd.xlane.f32.xlu0 %v453
        %v455 = vpop.xlane.xlu0 %454
        %v456 = vsel %vm385, %v434, 0.0
        %457 = vadd.xlane.f32.xlu0 %v456
        %v458 = vpop.xlane.xlu0 %457
        %v459 = vmul.f32 %v437, %v410
        %v460 = vmul.f32 %v440, %v410
        %v461 = vmul.f32 %v443, %v410
        %v462 = vmul.f32 %v446, %v410
        %v463 = vmul.f32 %v449, %v410
        %v464 = vmul.f32 %v452, %v410
        %v465 = vmul.f32 %v455, %v410
        %v466 = vmul.f32 %v458, %v410
        %v467 = vadd.f32 %v459, 1e-05
        %v468 = vadd.f32 %v460, 1e-05
        %v469 = vadd.f32 %v461, 1e-05
        %v470 = vadd.f32 %v462, 1e-05
        %v471 = vadd.f32 %v463, 1e-05
        %v472 = vadd.f32 %v464, 1e-05
        %v473 = vadd.f32 %v465, 1e-05
        %v474 = vadd.f32 %v466, 1e-05
        %v475 = vrsqrt.pop %v467
        %v476 = vrsqrt.pop %v468
        %v477 = vrsqrt.pop %v469
        %v478 = vrsqrt.pop %v470
        %v479 = vrsqrt.pop %v471
        %v480 = vrsqrt.pop %v472
        %v481 = vrsqrt.pop %v473
        %v482 = vrsqrt.pop %v474
        %v483 = vmul.f32 %v419, %v475
        %v484 = vmul.f32 %v420, %v476
        %v485 = vmul.f32 %v421, %v477
        %v486 = vmul.f32 %v422, %v478
        %v487 = vmul.f32 %v423, %v479
        %v488 = vmul.f32 %v424, %v480
        %v489 = vmul.f32 %v425, %v481
        %v490 = vmul.f32 %v426, %v482
        %v491 = vld [vmem:[#allocation8] sm:$0x1]
        %v493 = vlaneseq
        %v494 = vshrl.u32 %v493, 7
        %v495 = vsub.s32 0, %v494
        %v496 = vrot.slane %v491, %v495
        %v498 = vmul.f32 %v483, %v496
        %v499 = vmul.f32 %v484, %v496
        %v500 = vmul.f32 %v485, %v496
        %v501 = vmul.f32 %v486, %v496
        %v502 = vmul.f32 %v487, %v496
        %v503 = vmul.f32 %v488, %v496
        %v504 = vmul.f32 %v489, %v496
        %v505 = vmul.f32 %v490, %v496
        %v506 = vld [vmem:[#allocation10] sm:$0x1]
        %v508 = vlaneseq
        %v509 = vshrl.u32 %v508, 7
        %v510 = vsub.s32 0, %v509
        %v511 = vrot.slane %v506, %v510
        %v513 = vadd.f32 %v498, %v511
        %v514 = vadd.f32 %v499, %v511
        %v515 = vadd.f32 %v500, %v511
        %v516 = vadd.f32 %v501, %v511
        %v517 = vadd.f32 %v502, %v511
        %v518 = vadd.f32 %v503, %v511
        %v519 = vadd.f32 %v504, %v511
        %v520 = vadd.f32 %v505, %v511
        %521 = vst.msk [vmem:[#allocation2] sm:$0xff] %vm385, 0
        %s522 = scalar_lea.vmem [#allocation2], 72
        %523 = vst.msk [vmem:[%s522] sm:$0xff] %vm385, 0
        %s524 = scalar_lea.vmem [#allocation2], 8
        %vm525 = vcmask 253952
        %vm526 = vsmask.f32 256
        %vm527 = vmand %vm525, %vm526
        %v528 = vld [vmem:[%s524] sm:$0x1]
        %v529 = vsel %vm527, 0, %v528
        %530 = vst [vmem:[%s524] sm:$0x1] %v529
        %v531 = vld [vmem:[%s524 + $0x8] sm:$0x1]
        %v532 = vsel %vm527, 0, %v531
        %533 = vst [vmem:[%s524 + $0x8] sm:$0x1] %v532
        %v534 = vld [vmem:[%s524 + $0x10] sm:$0x1]
        %v535 = vsel %vm527, 0, %v534
        %536 = vst [vmem:[%s524 + $0x10] sm:$0x1] %v535
        %v537 = vld [vmem:[%s524 + $0x18] sm:$0x1]
        %v538 = vsel %vm527, 0, %v537
        %539 = vst [vmem:[%s524 + $0x18] sm:$0x1] %v538
        %v540 = vld [vmem:[%s524 + $0x20] sm:$0x1]
        %v541 = vsel %vm527, 0, %v540
        %542 = vst [vmem:[%s524 + $0x20] sm:$0x1] %v541
        %v543 = vld [vmem:[%s524 + $0x28] sm:$0x1]
        %v544 = vsel %vm527, 0, %v543
        %545 = vst [vmem:[%s524 + $0x28] sm:$0x1] %v544
        %v546 = vld [vmem:[%s524 + $0x30] sm:$0x1]
        %v547 = vsel %vm527, 0, %v546
        %548 = vst [vmem:[%s524 + $0x30] sm:$0x1] %v547
        %v549 = vld [vmem:[%s524 + $0x38] sm:$0x1]
        %v550 = vsel %vm527, 0, %v549
        %551 = vst [vmem:[%s524 + $0x38] sm:$0x1] %v550
        %vm552 = vcmask 258052
        %vm553 = vsmask.f32 7954
        %vm554 = vmand %vm552, %vm553
        %v555 = vld [vmem:[%s524] sm:$0x10]
        %v556 = vsel %vm554, 0, %v555
        %557 = vst [vmem:[%s524] sm:$0x10] %v556
        %v558 = vld [vmem:[%s524 + $0x8] sm:$0x10]
        %v559 = vsel %vm554, 0, %v558
        %560 = vst [vmem:[%s524 + $0x8] sm:$0x10] %v559
        %v561 = vld [vmem:[%s524 + $0x10] sm:$0x10]
        %v562 = vsel %vm554, 0, %v561
        %563 = vst [vmem:[%s524 + $0x10] sm:$0x10] %v562
        %v564 = vld [vmem:[%s524 + $0x18] sm:$0x10]
        %v565 = vsel %vm554, 0, %v564
        %566 = vst [vmem:[%s524 + $0x18] sm:$0x10] %v565
        %v567 = vld [vmem:[%s524 + $0x20] sm:$0x10]
        %v568 = vsel %vm554, 0, %v567
        %569 = vst [vmem:[%s524 + $0x20] sm:$0x10] %v568
        %v570 = vld [vmem:[%s524 + $0x28] sm:$0x10]
        %v571 = vsel %vm554, 0, %v570
        %572 = vst [vmem:[%s524 + $0x28] sm:$0x10] %v571
        %v573 = vld [vmem:[%s524 + $0x30] sm:$0x10]
        %v574 = vsel %vm554, 0, %v573
        %575 = vst [vmem:[%s524 + $0x30] sm:$0x10] %v574
        %v576 = vld [vmem:[%s524 + $0x38] sm:$0x10]
        %v577 = vsel %vm554, 0, %v576
        %578 = vst [vmem:[%s524 + $0x38] sm:$0x10] %v577
        %v579 = vpack.c.bf16 %v513, %v513
        %v580 = vpack.c.bf16 %v514, %v514
        %v581 = vpack.c.bf16 %v515, %v515
        %v582 = vpack.c.bf16 %v516, %v516
        %v583 = vpack.c.bf16 %v517, %v517
        %v584 = vpack.c.bf16 %v518, %v518
        %v585 = vpack.c.bf16 %v519, %v519
        %v586 = vpack.c.bf16 %v520, %v520
        %v588 = vshrl.u32 %v579, 16
        %v590 = vrot.slane %v588, 7
        %v591 = vshll.u32 %v579, 16
        %v593 = vor.u32 %v590, %v591
        %v595 = vshrl.u32 %v580, 16
        %v597 = vrot.slane %v595, 7
        %v598 = vshll.u32 %v580, 16
        %v600 = vor.u32 %v597, %v598
        %v602 = vshrl.u32 %v581, 16
        %v604 = vrot.slane %v602, 7
        %v605 = vshll.u32 %v581, 16
        %v607 = vor.u32 %v604, %v605
        %v609 = vshrl.u32 %v582, 16
        %v611 = vrot.slane %v609, 7
        %v612 = vshll.u32 %v582, 16
        %v614 = vor.u32 %v611, %v612
        %v616 = vshrl.u32 %v583, 16
        %v618 = vrot.slane %v616, 7
        %v619 = vshll.u32 %v583, 16
        %v621 = vor.u32 %v618, %v619
        %v623 = vshrl.u32 %v584, 16
        %v625 = vrot.slane %v623, 7
        %v626 = vshll.u32 %v584, 16
        %v628 = vor.u32 %v625, %v626
        %v630 = vshrl.u32 %v585, 16
        %v632 = vrot.slane %v630, 7
        %v633 = vshll.u32 %v585, 16
        %v635 = vor.u32 %v632, %v633
        %v637 = vshrl.u32 %v586, 16
        %v639 = vrot.slane %v637, 7
        %v640 = vshll.u32 %v586, 16
        %v642 = vor.u32 %v639, %v640
        %vm651 = vcmask 258048
        %vm652 = vsmask.f32 4354
        %vm653 = vmand %vm651, %vm652
        %v654 = vld [vmem:[%s524] sm:$0x1f]
        %v655 = vsel %vm653, %v593, %v654
        %656 = vst [vmem:[%s524] sm:$0x1f] %v655
        %v657 = vld [vmem:[%s524 + $0x8] sm:$0x1f]
        %v658 = vsel %vm653, %v600, %v657
        %659 = vst [vmem:[%s524 + $0x8] sm:$0x1f] %v658
        %v660 = vld [vmem:[%s524 + $0x10] sm:$0x1f]
        %v661 = vsel %vm653, %v607, %v660
        %662 = vst [vmem:[%s524 + $0x10] sm:$0x1f] %v661
        %v663 = vld [vmem:[%s524 + $0x18] sm:$0x1f]
        %v664 = vsel %vm653, %v614, %v663
        %665 = vst [vmem:[%s524 + $0x18] sm:$0x1f] %v664
        %v666 = vld [vmem:[%s524 + $0x20] sm:$0x1f]
        %v667 = vsel %vm653, %v621, %v666
        %668 = vst [vmem:[%s524 + $0x20] sm:$0x1f] %v667
        %v669 = vld [vmem:[%s524 + $0x28] sm:$0x1f]
        %v670 = vsel %vm653, %v628, %v669
        %671 = vst [vmem:[%s524 + $0x28] sm:$0x1f] %v670
        %v672 = vld [vmem:[%s524 + $0x30] sm:$0x1f]
        %v673 = vsel %vm653, %v635, %v672
        %674 = vst [vmem:[%s524 + $0x30] sm:$0x1f] %v673
        %v675 = vld [vmem:[%s524 + $0x38] sm:$0x1f]
        %v676 = vsel %vm653, %v642, %v675
        %677 = vst [vmem:[%s524 + $0x38] sm:$0x1f] %v676
        %v678 = vld [vmem:[#allocation2] sm:$0xf]
        %v679 = vld [vmem:[#allocation2 + $0x8] sm:$0xf]
        %v680 = vld [vmem:[#allocation2 + $0x10] sm:$0xf]
        %v681 = vld [vmem:[#allocation2 + $0x18] sm:$0xf]
        %v682 = vld [vmem:[#allocation2 + $0x20] sm:$0xf]
        %v683 = vld [vmem:[#allocation2 + $0x28] sm:$0xf]
        %v684 = vld [vmem:[#allocation2 + $0x30] sm:$0xf]
        %v685 = vld [vmem:[#allocation2 + $0x38] sm:$0xf]
        %v686 = vld [vmem:[#allocation11] sm:$0xf]
        %v687 = vld [vmem:[#allocation11 + $0x4] sm:$0xf]
        %v688 = vld [vmem:[#allocation11 + $0x8] sm:$0xf]
        %v689 = vld [vmem:[#allocation11 + $0xc] sm:$0xf]
        %v690 = vld [vmem:[#allocation2] sm:$0x1f]
        %v691 = vld [vmem:[#allocation2 + $0x8] sm:$0x1f]
        %v692 = vld [vmem:[#allocation2 + $0x10] sm:$0x1f]
        %v693 = vld [vmem:[#allocation2 + $0x18] sm:$0x1f]
        %v694 = vld [vmem:[#allocation2 + $0x20] sm:$0x1f]
        %v695 = vld [vmem:[#allocation2 + $0x28] sm:$0x1f]
        %v696 = vld [vmem:[#allocation2 + $0x30] sm:$0x1f]
        %v697 = vld [vmem:[#allocation2 + $0x38] sm:$0x1f]
        %v706 = vunpack.c.l.b16 %v690
        %v707 = vunpack.c.h.b16 %v690
        %v708 = vunpack.c.l.b16 %v691
        %v709 = vunpack.c.h.b16 %v691
        %v710 = vunpack.c.l.b16 %v692
        %v711 = vunpack.c.h.b16 %v692
        %v712 = vunpack.c.l.b16 %v693
        %v713 = vunpack.c.h.b16 %v693
        %v714 = vunpack.c.l.b16 %v694
        %v715 = vunpack.c.h.b16 %v694
        %v716 = vunpack.c.l.b16 %v695
        %v717 = vunpack.c.h.b16 %v695
        %v718 = vunpack.c.l.b16 %v696
        %v719 = vunpack.c.h.b16 %v696
        %v720 = vunpack.c.l.b16 %v697
        %v721 = vunpack.c.h.b16 %v697
        %v722 = vpack.c.b16 %v706, %v706
        %v723 = vpack.c.b16 %v707, %v707
        %v724 = vpack.c.b16 %v708, %v708
        %v725 = vpack.c.b16 %v709, %v709
        %v726 = vpack.c.b16 %v710, %v710
        %v727 = vpack.c.b16 %v711, %v711
        %v728 = vpack.c.b16 %v712, %v712
        %v729 = vpack.c.b16 %v713, %v713
        %v730 = vpack.c.b16 %v714, %v714
        %v731 = vpack.c.b16 %v715, %v715
        %v732 = vpack.c.b16 %v716, %v716
        %v733 = vpack.c.b16 %v717, %v717
        %v734 = vpack.c.b16 %v718, %v718
        %v735 = vpack.c.b16 %v719, %v719
        %v736 = vpack.c.b16 %v720, %v720
        %v737 = vpack.c.b16 %v721, %v721
        %vm738 = vsmask.f32 3328
        %vm739 = vsmask.f32 7440
        %vm740 = vmor %vm738, %vm739
        %v742 = vshrl.u32 %v722, 16
        %v744 = vrot.slane %v742, 4
        %v745 = vshll.u32 %v722, 16
        %v747 = vrot.slane %v745, 5
        %v748 = vor.u32 %v744, %v747
        %v749 = vrot.slane %v748, 4
        %v751 = vshll.u32 %v723, 16
        %v753 = vrot.slane %v751, 5
        %v754 = vsel %vm740, %v749, %v753
        %v756 = vshrl.u32 %v724, 16
        %v758 = vrot.slane %v756, 4
        %v759 = vshll.u32 %v724, 16
        %v761 = vrot.slane %v759, 5
        %v762 = vor.u32 %v758, %v761
        %v763 = vrot.slane %v762, 4
        %v765 = vshll.u32 %v725, 16
        %v767 = vrot.slane %v765, 5
        %v768 = vsel %vm740, %v763, %v767
        %v770 = vshrl.u32 %v726, 16
        %v772 = vrot.slane %v770, 4
        %v773 = vshll.u32 %v726, 16
        %v775 = vrot.slane %v773, 5
        %v776 = vor.u32 %v772, %v775
        %v777 = vrot.slane %v776, 4
        %v779 = vshll.u32 %v727, 16
        %v781 = vrot.slane %v779, 5
        %v782 = vsel %vm740, %v777, %v781
        %v784 = vshrl.u32 %v728, 16
        %v786 = vrot.slane %v784, 4
        %v787 = vshll.u32 %v728, 16
        %v789 = vrot.slane %v787, 5
        %v790 = vor.u32 %v786, %v789
        %v791 = vrot.slane %v790, 4
        %v793 = vshll.u32 %v729, 16
        %v795 = vrot.slane %v793, 5
        %v796 = vsel %vm740, %v791, %v795
        %v798 = vshrl.u32 %v730, 16
        %v800 = vrot.slane %v798, 4
        %v801 = vshll.u32 %v730, 16
        %v803 = vrot.slane %v801, 5
        %v804 = vor.u32 %v800, %v803
        %v805 = vrot.slane %v804, 4
        %v807 = vshll.u32 %v731, 16
        %v809 = vrot.slane %v807, 5
        %v810 = vsel %vm740, %v805, %v809
        %v812 = vshrl.u32 %v732, 16
        %v814 = vrot.slane %v812, 4
        %v815 = vshll.u32 %v732, 16
        %v817 = vrot.slane %v815, 5
        %v818 = vor.u32 %v814, %v817
        %v819 = vrot.slane %v818, 4
        %v821 = vshll.u32 %v733, 16
        %v823 = vrot.slane %v821, 5
        %v824 = vsel %vm740, %v819, %v823
        %v826 = vshrl.u32 %v734, 16
        %v828 = vrot.slane %v826, 4
        %v829 = vshll.u32 %v734, 16
        %v831 = vrot.slane %v829, 5
        %v832 = vor.u32 %v828, %v831
        %v833 = vrot.slane %v832, 4
        %v835 = vshll.u32 %v735, 16
        %v837 = vrot.slane %v835, 5
        %v838 = vsel %vm740, %v833, %v837
        %v840 = vshrl.u32 %v736, 16
        %v842 = vrot.slane %v840, 4
        %v843 = vshll.u32 %v736, 16
        %v845 = vrot.slane %v843, 5
        %v846 = vor.u32 %v842, %v845
        %v847 = vrot.slane %v846, 4
        %v849 = vshll.u32 %v737, 16
        %v851 = vrot.slane %v849, 5
        %v852 = vsel %vm740, %v847, %v851
        %s853 = scalar_lea.vmem [#allocation11], 16
        %v854 = vld [vmem:[%s853] sm:$0xf]
        %v855 = vld [vmem:[%s853 + $0x4] sm:$0xf]
        %v856 = vld [vmem:[%s853 + $0x8] sm:$0xf]
        %v857 = vld [vmem:[%s853 + $0xc] sm:$0xf]
        %v858 = vunpack.c.l.b16 %v754
        %v859 = vunpack.c.l.b16 %v768
        %v860 = vunpack.c.l.b16 %v782
        %v861 = vunpack.c.l.b16 %v796
        %v862 = vunpack.c.l.b16 %v810
        %v863 = vunpack.c.l.b16 %v824
        %v864 = vunpack.c.l.b16 %v838
        %v865 = vunpack.c.l.b16 %v852
        %v866 = vpack.c.b16 %v859, %v858
        %v867 = vpack.c.b16 %v861, %v860
        %v868 = vpack.c.b16 %v863, %v862
        %v869 = vpack.c.b16 %v865, %v864
        %v874 = vunpack.c.l.b16 %v854
        %v875 = vunpack.c.l.b16 %v855
        %v876 = vunpack.c.l.b16 %v856
        %v877 = vunpack.c.l.b16 %v857
        %v878 = vpack.c.b16 %v875, %v874
        %v879 = vpack.c.b16 %v877, %v876
        %v883 = vsel %vm385, %v866, 0
        %v886 = vsel %vm385, %v867, 0
        %v889 = vsel %vm385, %v868, 0
        %v892 = vsel %vm385, %v869, 0
        %894 = vmatprep.subr.bf16.mxu0 0
        %895 = vmatpush1.bf16.msra.mxu0 %v878
        %896 = vmatprep.subr.bf16.mxu0 0
        %897 = vmatpush1.bf16.msra.mxu0 %v879
        %898 = vmatprep.subr.bf16.mxu0 0
        %899 = vmatpush1.bf16.msra.mxu0 0
        %900 = vmatprep.subr.bf16.mxu0 0
        %901 = vmatpush1.bf16.msra.mxu0 0
        %902 = vmatprep.subr.bf16.mxu0 0
        %903 = vmatpush1.bf16.msra.mxu0 0
        %904 = vmatprep.subr.bf16.mxu0 0
        %905 = vmatpush1.bf16.msra.mxu0 0
        %906 = vmatprep.subr.bf16.mxu0 0
        %907 = vmatpush1.bf16.msra.mxu0 0
        %908 = vmatprep.subr.bf16.mxu0 0
        %909 = vmatpush1.bf16.msra.mxu0 0
        %910 = vmatprep.subr.bf16.mxu0 0
        %911 = vmatpush1.bf16.msra.mxu0 0
        %912 = vmatprep.subr.bf16.mxu0 0
        %913 = vmatpush1.bf16.msra.mxu0 0
        %914 = vmatprep.subr.bf16.mxu0 0
        %915 = vmatpush1.bf16.msra.mxu0 0
        %916 = vmatprep.subr.bf16.mxu0 0
        %917 = vmatpush1.bf16.msra.mxu0 0
        %918 = vmatprep.subr.bf16.mxu0 0
        %919 = vmatpush1.bf16.msra.mxu0 0
        %920 = vmatprep.subr.bf16.mxu0 0
        %921 = vmatpush1.bf16.msra.mxu0 0
        %922 = vmatprep.subr.bf16.mxu0 0
        %923 = vmatpush1.bf16.msra.mxu0 0
        %924 = vmatprep.subr.bf16.mxu0 0
        %925 = vmatpush1.bf16.msra.mxu0 0
        %926 = vmatprep.mubr.bf16.mxu0 0
        %927 = vmatmul.mubr.bf16.gmra.mrb[0].mxu0 %v883
        %v928 = vpop.f32.mrb[0].mxu0
        %v929 = vadd.f32 0.0, %v928
        %v930 = vpop.f32.mrb[0].mxu0
        %v931 = vpop.f32.mrb[0].mxu0
        %v932 = vadd.f32 0.0, %v931
        %v933 = vpop.f32.mrb[0].mxu0
        %934 = vmatprep.mubr.bf16.mxu0 0
        %935 = vmatmul.mubr.bf16.gmra.mrb[0].mxu0 %v886
        %v936 = vpop.f32.mrb[0].mxu0
        %v937 = vadd.f32 0.0, %v936
        %v938 = vpop.f32.mrb[0].mxu0
        %v939 = vpop.f32.mrb[0].mxu0
        %v940 = vadd.f32 0.0, %v939
        %v941 = vpop.f32.mrb[0].mxu0
        %942 = vmatprep.mubr.bf16.mxu0 0
        %943 = vmatmul.mubr.bf16.gmra.mrb[0].mxu0 %v889
        %v944 = vpop.f32.mrb[0].mxu0
        %v945 = vadd.f32 0.0, %v944
        %v946 = vpop.f32.mrb[0].mxu0
        %v947 = vpop.f32.mrb[0].mxu0
        %v948 = vadd.f32 0.0, %v947
        %v949 = vpop.f32.mrb[0].mxu0
        %950 = vmatprep.mubr.bf16.mxu0 0
        %951 = vmatmul.mubr.bf16.gmra.mrb[0].mxu0 %v892
        %v952 = vpop.f32.mrb[0].mxu0
        %v953 = vadd.f32 0.0, %v952
        %v954 = vpop.f32.mrb[0].mxu0
        %v955 = vpop.f32.mrb[0].mxu0
        %v956 = vadd.f32 0.0, %v955
        %v957 = vpop.f32.mrb[0].mxu0
        %958 = vdwg.mxu0
        %v967 = vunpack.c.l.b16 %v678
        %v968 = vunpack.c.l.b16 %v679
        %v969 = vunpack.c.l.b16 %v680
        %v970 = vunpack.c.l.b16 %v681
        %v971 = vunpack.c.l.b16 %v682
        %v972 = vunpack.c.l.b16 %v683
        %v973 = vunpack.c.l.b16 %v684
        %v974 = vunpack.c.l.b16 %v685
        %v975 = vpack.c.b16 %v968, %v967
        %v976 = vpack.c.b16 %v970, %v969
        %v977 = vpack.c.b16 %v972, %v971
        %v978 = vpack.c.b16 %v974, %v973
        %v983 = vunpack.c.l.b16 %v686
        %v984 = vunpack.c.l.b16 %v687
        %v985 = vunpack.c.l.b16 %v688
        %v986 = vunpack.c.l.b16 %v689
        %v987 = vpack.c.b16 %v984, %v983
        %v988 = vpack.c.b16 %v986, %v985
        %v992 = vsel %vm385, %v975, 0
        %v995 = vsel %vm385, %v976, 0
        %v998 = vsel %vm385, %v977, 0
        %v1001 = vsel %vm385, %v978, 0
        %1003 = vmatprep.subr.bf16.mxu0 0
        %1004 = vmatpush1.bf16.msra.mxu0 %v987
        %1005 = vmatprep.subr.bf16.mxu0 0
        %1006 = vmatpush1.bf16.msra.mxu0 %v988
        %1007 = vmatprep.subr.bf16.mxu0 0
        %1008 = vmatpush1.bf16.msra.mxu0 0
        %1009 = vmatprep.subr.bf16.mxu0 0
        %1010 = vmatpush1.bf16.msra.mxu0 0
        %1011 = vmatprep.subr.bf16.mxu0 0
        %1012 = vmatpush1.bf16.msra.mxu0 0
        %1013 = vmatprep.subr.bf16.mxu0 0
        %1014 = vmatpush1.bf16.msra.mxu0 0
        %1015 = vmatprep.subr.bf16.mxu0 0
        %1016 = vmatpush1.bf16.msra.mxu0 0
        %1017 = vmatprep.subr.bf16.mxu0 0
        %1018 = vmatpush1.bf16.msra.mxu0 0
        %1019 = vmatprep.subr.bf16.mxu0 0
        %1020 = vmatpush1.bf16.msra.mxu0 0
        %1021 = vmatprep.subr.bf16.mxu0 0
        %1022 = vmatpush1.bf16.msra.mxu0 0
        %1023 = vmatprep.subr.bf16.mxu0 0
        %1024 = vmatpush1.bf16.msra.mxu0 0
        %1025 = vmatprep.subr.bf16.mxu0 0
        %1026 = vmatpush1.bf16.msra.mxu0 0
        %1027 = vmatprep.subr.bf16.mxu0 0
        %1028 = vmatpush1.bf16.msra.mxu0 0
        %1029 = vmatprep.subr.bf16.mxu0 0
        %1030 = vmatpush1.bf16.msra.mxu0 0
        %1031 = vmatprep.subr.bf16.mxu0 0
        %1032 = vmatpush1.bf16.msra.mxu0 0
        %1033 = vmatprep.subr.bf16.mxu0 0
        %1034 = vmatpush1.bf16.msra.mxu0 0
        %1035 = vmatprep.mubr.bf16.mxu0 0
        %1036 = vmatmul.mubr.bf16.gmra.mrb[0].mxu0 %v992
        %v1037 = vpop.f32.mrb[0].mxu0
        %v1038 = vadd.f32 %v929, %v1037
        %v1039 = vpop.f32.mrb[0].mxu0
        %v1040 = vpop.f32.mrb[0].mxu0
        %v1041 = vadd.f32 %v932, %v1040
        %v1042 = vpop.f32.mrb[0].mxu0
        %1043 = vmatprep.mubr.bf16.mxu0 0
        %1044 = vmatmul.mubr.bf16.gmra.mrb[0].mxu0 %v995
        %v1045 = vpop.f32.mrb[0].mxu0
        %v1046 = vadd.f32 %v937, %v1045
        %v1047 = vpop.f32.mrb[0].mxu0
        %v1048 = vpop.f32.mrb[0].mxu0
        %v1049 = vadd.f32 %v940, %v1048
        %v1050 = vpop.f32.mrb[0].mxu0
        %1051 = vmatprep.mubr.bf16.mxu0 0
        %1052 = vmatmul.mubr.bf16.gmra.mrb[0].mxu0 %v998
        %v1053 = vpop.f32.mrb[0].mxu0
        %v1054 = vadd.f32 %v945, %v1053
        %v1055 = vpop.f32.mrb[0].mxu0
        %v1056 = vpop.f32.mrb[0].mxu0
        %v1057 = vadd.f32 %v948, %v1056
        %v1058 = vpop.f32.mrb[0].mxu0
        %1059 = vmatprep.mubr.bf16.mxu0 0
        %1060 = vmatmul.mubr.bf16.gmra.mrb[0].mxu0 %v1001
        %v1061 = vpop.f32.mrb[0].mxu0
        %v1062 = vadd.f32 %v953, %v1061
        %v1063 = vpop.f32.mrb[0].mxu0
        %v1064 = vpop.f32.mrb[0].mxu0
        %v1065 = vadd.f32 %v956, %v1064
        %v1066 = vpop.f32.mrb[0].mxu0
        %1067 = vdwg.mxu0
        %v1068 = vld [vmem:[#allocation2] sm:$0x1e]
        %v1069 = vld [vmem:[#allocation2 + $0x8] sm:$0x1e]
        %v1070 = vld [vmem:[#allocation2 + $0x10] sm:$0x1e]
        %v1071 = vld [vmem:[#allocation2 + $0x18] sm:$0x1e]
        %v1072 = vld [vmem:[#allocation2 + $0x20] sm:$0x1e]
        %v1073 = vld [vmem:[#allocation2 + $0x28] sm:$0x1e]
        %v1074 = vld [vmem:[#allocation2 + $0x30] sm:$0x1e]
        %v1075 = vld [vmem:[#allocation2 + $0x38] sm:$0x1e]
        %v1084 = vunpack.c.l.b16 %v1068
        %v1085 = vunpack.c.h.b16 %v1068
        %v1086 = vunpack.c.l.b16 %v1069
        %v1087 = vunpack.c.h.b16 %v1069
        %v1088 = vunpack.c.l.b16 %v1070
        %v1089 = vunpack.c.h.b16 %v1070
        %v1090 = vunpack.c.l.b16 %v1071
        %v1091 = vunpack.c.h.b16 %v1071
        %v1092 = vunpack.c.l.b16 %v1072
        %v1093 = vunpack.c.h.b16 %v1072
        %v1094 = vunpack.c.l.b16 %v1073
        %v1095 = vunpack.c.h.b16 %v1073
        %v1096 = vunpack.c.l.b16 %v1074
        %v1097 = vunpack.c.h.b16 %v1074
        %v1098 = vunpack.c.l.b16 %v1075
        %v1099 = vunpack.c.h.b16 %v1075
        %v1100 = vpack.c.b16 %v1084, %v1084
        %v1101 = vpack.c.b16 %v1085, %v1085
        %v1102 = vpack.c.b16 %v1086, %v1086
        %v1103 = vpack.c.b16 %v1087, %v1087
        %v1104 = vpack.c.b16 %v1088, %v1088
        %v1105 = vpack.c.b16 %v1089, %v1089
        %v1106 = vpack.c.b16 %v1090, %v1090
        %v1107 = vpack.c.b16 %v1091, %v1091
        %v1108 = vpack.c.b16 %v1092, %v1092
        %v1109 = vpack.c.b16 %v1093, %v1093
        %v1110 = vpack.c.b16 %v1094, %v1094
        %v1111 = vpack.c.b16 %v1095, %v1095
        %v1112 = vpack.c.b16 %v1096, %v1096
        %v1113 = vpack.c.b16 %v1097, %v1097
        %v1114 = vpack.c.b16 %v1098, %v1098
        %v1115 = vpack.c.b16 %v1099, %v1099
        %vm1116 = vcmask 1042432
        %vm1117 = vcmask 1046532
        %vm1118 = vmor %vm1116, %vm1117
        %v1119 = vrot.slane %v1100, 5
        %v1120 = vrot.slane %v1119, 4
        %v1121 = vrot.slane %v1101, 5
        %v1122 = vsel %vm1118, %v1120, %v1121
        %v1123 = vrot.slane %v1102, 5
        %v1124 = vrot.slane %v1123, 4
        %v1125 = vrot.slane %v1103, 5
        %v1126 = vsel %vm1118, %v1124, %v1125
        %v1127 = vrot.slane %v1104, 5
        %v1128 = vrot.slane %v1127, 4
        %v1129 = vrot.slane %v1105, 5
        %v1130 = vsel %vm1118, %v1128, %v1129
        %v1131 = vrot.slane %v1106, 5
        %v1132 = vrot.slane %v1131, 4
        %v1133 = vrot.slane %v1107, 5
        %v1134 = vsel %vm1118, %v1132, %v1133
        %v1135 = vrot.slane %v1108, 5
        %v1136 = vrot.slane %v1135, 4
        %v1137 = vrot.slane %v1109, 5
        %v1138 = vsel %vm1118, %v1136, %v1137
        %v1139 = vrot.slane %v1110, 5
        %v1140 = vrot.slane %v1139, 4
        %v1141 = vrot.slane %v1111, 5
        %v1142 = vsel %vm1118, %v1140, %v1141
        %v1143 = vrot.slane %v1112, 5
        %v1144 = vrot.slane %v1143, 4
        %v1145 = vrot.slane %v1113, 5
        %v1146 = vsel %vm1118, %v1144, %v1145
        %v1147 = vrot.slane %v1114, 5
        %v1148 = vrot.slane %v1147, 4
        %v1149 = vrot.slane %v1115, 5
        %v1150 = vsel %vm1118, %v1148, %v1149
        %s1151 = scalar_lea.vmem [#allocation11], 32
        %v1152 = vld [vmem:[%s1151] sm:$0xf]
        %v1153 = vld [vmem:[%s1151 + $0x4] sm:$0xf]
        %v1154 = vld [vmem:[%s1151 + $0x8] sm:$0xf]
        %v1155 = vld [vmem:[%s1151 + $0xc] sm:$0xf]
        %v1156 = vunpack.c.l.b16 %v1122
        %v1157 = vunpack.c.l.b16 %v1126
        %v1158 = vunpack.c.l.b16 %v1130
        %v1159 = vunpack.c.l.b16 %v1134
        %v1160 = vunpack.c.l.b16 %v1138
        %v1161 = vunpack.c.l.b16 %v1142
        %v1162 = vunpack.c.l.b16 %v1146
        %v1163 = vunpack.c.l.b16 %v1150
        %v1164 = vpack.c.b16 %v1157, %v1156
        %v1165 = vpack.c.b16 %v1159, %v1158
        %v1166 = vpack.c.b16 %v1161, %v1160
        %v1167 = vpack.c.b16 %v1163, %v1162
        %v1172 = vunpack.c.l.b16 %v1152
        %v1173 = vunpack.c.l.b16 %v1153
        %v1174 = vunpack.c.l.b16 %v1154
        %v1175 = vunpack.c.l.b16 %v1155
        %v1176 = vpack.c.b16 %v1173, %v1172
        %v1177 = vpack.c.b16 %v1175, %v1174
        %v1181 = vsel %vm385, %v1164, 0
        %v1184 = vsel %vm385, %v1165, 0
        %v1187 = vsel %vm385, %v1166, 0
        %v1190 = vsel %vm385, %v1167, 0
        %1192 = vmatprep.subr.bf16.mxu0 0
        %1193 = vmatpush1.bf16.msra.mxu0 %v1176
        %1194 = vmatprep.subr.bf16.mxu0 0
        %1195 = vmatpush1.bf16.msra.mxu0 %v1177
        %1196 = vmatprep.subr.bf16.mxu0 0
        %1197 = vmatpush1.bf16.msra.mxu0 0
        %1198 = vmatprep.subr.bf16.mxu0 0
        %1199 = vmatpush1.bf16.msra.mxu0 0
        %1200 = vmatprep.subr.bf16.mxu0 0
        %1201 = vmatpush1.bf16.msra.mxu0 0
        %1202 = vmatprep.subr.bf16.mxu0 0
        %1203 = vmatpush1.bf16.msra.mxu0 0
        %1204 = vmatprep.subr.bf16.mxu0 0
        %1205 = vmatpush1.bf16.msra.mxu0 0
        %1206 = vmatprep.subr.bf16.mxu0 0
        %1207 = vmatpush1.bf16.msra.mxu0 0
        %1208 = vmatprep.subr.bf16.mxu0 0
        %1209 = vmatpush1.bf16.msra.mxu0 0
        %1210 = vmatprep.subr.bf16.mxu0 0
        %1211 = vmatpush1.bf16.msra.mxu0 0
        %1212 = vmatprep.subr.bf16.mxu0 0
        %1213 = vmatpush1.bf16.msra.mxu0 0
        %1214 = vmatprep.subr.bf16.mxu0 0
        %1215 = vmatpush1.bf16.msra.mxu0 0
        %1216 = vmatprep.subr.bf16.mxu0 0
        %1217 = vmatpush1.bf16.msra.mxu0 0
        %1218 = vmatprep.subr.bf16.mxu0 0
        %1219 = vmatpush1.bf16.msra.mxu0 0
        %1220 = vmatprep.subr.bf16.mxu0 0
        %1221 = vmatpush1.bf16.msra.mxu0 0
        %1222 = vmatprep.subr.bf16.mxu0 0
        %1223 = vmatpush1.bf16.msra.mxu0 0
        %1224 = vmatprep.mubr.bf16.mxu0 0
        %1225 = vmatmul.mubr.bf16.gmra.mrb[0].mxu0 %v1181
        %v1226 = vpop.f32.mrb[0].mxu0
        %v1227 = vadd.f32 0.0, %v1226
        %v1228 = vpop.f32.mrb[0].mxu0
        %v1229 = vpop.f32.mrb[0].mxu0
        %v1230 = vadd.f32 0.0, %v1229
        %v1231 = vpop.f32.mrb[0].mxu0
        %1232 = vmatprep.mubr.bf16.mxu0 0
        %1233 = vmatmul.mubr.bf16.gmra.mrb[0].mxu0 %v1184
        %v1234 = vpop.f32.mrb[0].mxu0
        %v1235 = vadd.f32 0.0, %v1234
        %v1236 = vpop.f32.mrb[0].mxu0
        %v1237 = vpop.f32.mrb[0].mxu0
        %v1238 = vadd.f32 0.0, %v1237
        %v1239 = vpop.f32.mrb[0].mxu0
        %1240 = vmatprep.mubr.bf16.mxu0 0
        %1241 = vmatmul.mubr.bf16.gmra.mrb[0].mxu0 %v1187
        %v1242 = vpop.f32.mrb[0].mxu0
        %v1243 = vadd.f32 0.0, %v1242
        %v1244 = vpop.f32.mrb[0].mxu0
        %v1245 = vpop.f32.mrb[0].mxu0
        %v1246 = vadd.f32 0.0, %v1245
        %v1247 = vpop.f32.mrb[0].mxu0
        %1248 = vmatprep.mubr.bf16.mxu0 0
        %1249 = vmatmul.mubr.bf16.gmra.mrb[0].mxu0 %v1190
        %v1250 = vpop.f32.mrb[0].mxu0
        %v1251 = vadd.f32 0.0, %v1250
        %v1252 = vpop.f32.mrb[0].mxu0
        %v1253 = vpop.f32.mrb[0].mxu0
        %v1254 = vadd.f32 0.0, %v1253
        %v1255 = vpop.f32.mrb[0].mxu0
        %1256 = vdwg.mxu0
        %v1257 = vadd.f32 %v1038, %v1227
        %v1258 = vadd.f32 %v1041, %v1230
        %v1259 = vadd.f32 %v1046, %v1235
        %v1260 = vadd.f32 %v1049, %v1238
        %v1261 = vadd.f32 %v1054, %v1243
        %v1262 = vadd.f32 %v1057, %v1246
        %v1263 = vadd.f32 %v1062, %v1251
        %v1264 = vadd.f32 %v1065, %v1254
        %v1265 = vld [vmem:[%s524] sm:$0xf]
        %v1266 = vld [vmem:[%s524 + $0x8] sm:$0xf]
        %v1267 = vld [vmem:[%s524 + $0x10] sm:$0xf]
        %v1268 = vld [vmem:[%s524 + $0x18] sm:$0xf]
        %v1269 = vld [vmem:[%s524 + $0x20] sm:$0xf]
        %v1270 = vld [vmem:[%s524 + $0x28] sm:$0xf]
        %v1271 = vld [vmem:[%s524 + $0x30] sm:$0xf]
        %v1272 = vld [vmem:[%s524 + $0x38] sm:$0xf]
        %s1273 = scalar_lea.vmem [#allocation11], 48
        %v1274 = vld [vmem:[%s1273] sm:$0xf]
        %v1275 = vld [vmem:[%s1273 + $0x4] sm:$0xf]
        %v1276 = vld [vmem:[%s1273 + $0x8] sm:$0xf]
        %v1277 = vld [vmem:[%s1273 + $0xc] sm:$0xf]
        %v1286 = vunpack.c.l.b16 %v1265
        %v1287 = vunpack.c.l.b16 %v1266
        %v1288 = vunpack.c.l.b16 %v1267
        %v1289 = vunpack.c.l.b16 %v1268
        %v1290 = vunpack.c.l.b16 %v1269
        %v1291 = vunpack.c.l.b16 %v1270
        %v1292 = vunpack.c.l.b16 %v1271
        %v1293 = vunpack.c.l.b16 %v1272
        %v1294 = vpack.c.b16 %v1287, %v1286
        %v1295 = vpack.c.b16 %v1289, %v1288
        %v1296 = vpack.c.b16 %v1291, %v1290
        %v1297 = vpack.c.b16 %v1293, %v1292
        %v1302 = vunpack.c.l.b16 %v1274
        %v1303 = vunpack.c.l.b16 %v1275
        %v1304 = vunpack.c.l.b16 %v1276
        %v1305 = vunpack.c.l.b16 %v1277
        %v1306 = vpack.c.b16 %v1303, %v1302
        %v1307 = vpack.c.b16 %v1305, %v1304
        %v1311 = vsel %vm385, %v1294, 0
        %v1314 = vsel %vm385, %v1295, 0
        %v1317 = vsel %vm385, %v1296, 0
        %v1320 = vsel %vm385, %v1297, 0
        %1322 = vmatprep.subr.bf16.mxu0 0
        %1323 = vmatpush1.bf16.msra.mxu0 %v1306
        %1324 = vmatprep.subr.bf16.mxu0 0
        %1325 = vmatpush1.bf16.msra.mxu0 %v1307
        %1326 = vmatprep.subr.bf16.mxu0 0
        %1327 = vmatpush1.bf16.msra.mxu0 0
        %1328 = vmatprep.subr.bf16.mxu0 0
        %1329 = vmatpush1.bf16.msra.mxu0 0
        %1330 = vmatprep.subr.bf16.mxu0 0
        %1331 = vmatpush1.bf16.msra.mxu0 0
        %1332 = vmatprep.subr.bf16.mxu0 0
        %1333 = vmatpush1.bf16.msra.mxu0 0
        %1334 = vmatprep.subr.bf16.mxu0 0
        %1335 = vmatpush1.bf16.msra.mxu0 0
        %1336 = vmatprep.subr.bf16.mxu0 0
        %1337 = vmatpush1.bf16.msra.mxu0 0
        %1338 = vmatprep.subr.bf16.mxu0 0
        %1339 = vmatpush1.bf16.msra.mxu0 0
        %1340 = vmatprep.subr.bf16.mxu0 0
        %1341 = vmatpush1.bf16.msra.mxu0 0
        %1342 = vmatprep.subr.bf16.mxu0 0
        %1343 = vmatpush1.bf16.msra.mxu0 0
        %1344 = vmatprep.subr.bf16.mxu0 0
        %1345 = vmatpush1.bf16.msra.mxu0 0
        %1346 = vmatprep.subr.bf16.mxu0 0
        %1347 = vmatpush1.bf16.msra.mxu0 0
        %1348 = vmatprep.subr.bf16.mxu0 0
        %1349 = vmatpush1.bf16.msra.mxu0 0
        %1350 = vmatprep.subr.bf16.mxu0 0
        %1351 = vmatpush1.bf16.msra.mxu0 0
        %1352 = vmatprep.subr.bf16.mxu0 0
        %1353 = vmatpush1.bf16.msra.mxu0 0
        %1354 = vmatprep.mubr.bf16.mxu0 0
        %1355 = vmatmul.mubr.bf16.gmra.mrb[0].mxu0 %v1311
        %v1356 = vpop.f32.mrb[0].mxu0
        %v1357 = vadd.f32 0.0, %v1356
        %v1358 = vpop.f32.mrb[0].mxu0
        %v1359 = vpop.f32.mrb[0].mxu0
        %v1360 = vadd.f32 0.0, %v1359
        %v1361 = vpop.f32.mrb[0].mxu0
        %1362 = vmatprep.mubr.bf16.mxu0 0
        %1363 = vmatmul.mubr.bf16.gmra.mrb[0].mxu0 %v1314
        %v1364 = vpop.f32.mrb[0].mxu0
        %v1365 = vadd.f32 0.0, %v1364
        %v1366 = vpop.f32.mrb[0].mxu0
        %v1367 = vpop.f32.mrb[0].mxu0
        %v1368 = vadd.f32 0.0, %v1367
        %v1369 = vpop.f32.mrb[0].mxu0
        %1370 = vmatprep.mubr.bf16.mxu0 0
        %1371 = vmatmul.mubr.bf16.gmra.mrb[0].mxu0 %v1317
        %v1372 = vpop.f32.mrb[0].mxu0
        %v1373 = vadd.f32 0.0, %v1372
        %v1374 = vpop.f32.mrb[0].mxu0
        %v1375 = vpop.f32.mrb[0].mxu0
        %v1376 = vadd.f32 0.0, %v1375
        %v1377 = vpop.f32.mrb[0].mxu0
        %1378 = vmatprep.mubr.bf16.mxu0 0
        %1379 = vmatmul.mubr.bf16.gmra.mrb[0].mxu0 %v1320
        %v1380 = vpop.f32.mrb[0].mxu0
        %v1381 = vadd.f32 0.0, %v1380
        %v1382 = vpop.f32.mrb[0].mxu0
        %v1383 = vpop.f32.mrb[0].mxu0
        %v1384 = vadd.f32 0.0, %v1383
        %v1385 = vpop.f32.mrb[0].mxu0
        %1386 = vdwg.mxu0
        %v1387 = vadd.f32 %v1257, %v1357
        %v1388 = vadd.f32 %v1258, %v1360
        %v1389 = vadd.f32 %v1259, %v1365
        %v1390 = vadd.f32 %v1260, %v1368
        %v1391 = vadd.f32 %v1261, %v1373
        %v1392 = vadd.f32 %v1262, %v1376
        %v1393 = vadd.f32 %v1263, %v1381
        %v1394 = vadd.f32 %v1264, %v1384
        %v1395 = vld [vmem:[%s524] sm:$0x1f]
        %v1396 = vld [vmem:[%s524 + $0x8] sm:$0x1f]
        %v1397 = vld [vmem:[%s524 + $0x10] sm:$0x1f]
        %v1398 = vld [vmem:[%s524 + $0x18] sm:$0x1f]
        %v1399 = vld [vmem:[%s524 + $0x20] sm:$0x1f]
        %v1400 = vld [vmem:[%s524 + $0x28] sm:$0x1f]
        %v1401 = vld [vmem:[%s524 + $0x30] sm:$0x1f]
        %v1402 = vld [vmem:[%s524 + $0x38] sm:$0x1f]
        %v1411 = vunpack.c.l.b16 %v1395
        %v1412 = vunpack.c.h.b16 %v1395
        %v1413 = vunpack.c.l.b16 %v1396
        %v1414 = vunpack.c.h.b16 %v1396
        %v1415 = vunpack.c.l.b16 %v1397
        %v1416 = vunpack.c.h.b16 %v1397
        %v1417 = vunpack.c.l.b16 %v1398
        %v1418 = vunpack.c.h.b16 %v1398
        %v1419 = vunpack.c.l.b16 %v1399
        %v1420 = vunpack.c.h.b16 %v1399
        %v1421 = vunpack.c.l.b16 %v1400
        %v1422 = vunpack.c.h.b16 %v1400
        %v1423 = vunpack.c.l.b16 %v1401
        %v1424 = vunpack.c.h.b16 %v1401
        %v1425 = vunpack.c.l.b16 %v1402
        %v1426 = vunpack.c.h.b16 %v1402
        %v1427 = vpack.c.b16 %v1411, %v1411
        %v1428 = vpack.c.b16 %v1412, %v1412
        %v1429 = vpack.c.b16 %v1413, %v1413
        %v1430 = vpack.c.b16 %v1414, %v1414
        %v1431 = vpack.c.b16 %v1415, %v1415
        %v1432 = vpack.c.b16 %v1416, %v1416
        %v1433 = vpack.c.b16 %v1417, %v1417
        %v1434 = vpack.c.b16 %v1418, %v1418
        %v1435 = vpack.c.b16 %v1419, %v1419
        %v1436 = vpack.c.b16 %v1420, %v1420
        %v1437 = vpack.c.b16 %v1421, %v1421
        %v1438 = vpack.c.b16 %v1422, %v1422
        %v1439 = vpack.c.b16 %v1423, %v1423
        %v1440 = vpack.c.b16 %v1424, %v1424
        %v1441 = vpack.c.b16 %v1425, %v1425
        %v1442 = vpack.c.b16 %v1426, %v1426
        %v1444 = vshrl.u32 %v1427, 16
        %v1446 = vrot.slane %v1444, 4
        %v1447 = vshll.u32 %v1427, 16
        %v1449 = vrot.slane %v1447, 5
        %v1450 = vor.u32 %v1446, %v1449
        %v1451 = vrot.slane %v1450, 4
        %v1453 = vshll.u32 %v1428, 16
        %v1455 = vrot.slane %v1453, 5
        %v1456 = vsel %vm740, %v1451, %v1455
        %v1458 = vshrl.u32 %v1429, 16
        %v1460 = vrot.slane %v1458, 4
        %v1461 = vshll.u32 %v1429, 16
        %v1463 = vrot.slane %v1461, 5
        %v1464 = vor.u32 %v1460, %v1463
        %v1465 = vrot.slane %v1464, 4
        %v1467 = vshll.u32 %v1430, 16
        %v1469 = vrot.slane %v1467, 5
        %v1470 = vsel %vm740, %v1465, %v1469
        %v1472 = vshrl.u32 %v1431, 16
        %v1474 = vrot.slane %v1472, 4
        %v1475 = vshll.u32 %v1431, 16
        %v1477 = vrot.slane %v1475, 5
        %v1478 = vor.u32 %v1474, %v1477
        %v1479 = vrot.slane %v1478, 4
        %v1481 = vshll.u32 %v1432, 16
        %v1483 = vrot.slane %v1481, 5
        %v1484 = vsel %vm740, %v1479, %v1483
        %v1486 = vshrl.u32 %v1433, 16
        %v1488 = vrot.slane %v1486, 4
        %v1489 = vshll.u32 %v1433, 16
        %v1491 = vrot.slane %v1489, 5
        %v1492 = vor.u32 %v1488, %v1491
        %v1493 = vrot.slane %v1492, 4
        %v1495 = vshll.u32 %v1434, 16
        %v1497 = vrot.slane %v1495, 5
        %v1498 = vsel %vm740, %v1493, %v1497
        %v1500 = vshrl.u32 %v1435, 16
        %v1502 = vrot.slane %v1500, 4
        %v1503 = vshll.u32 %v1435, 16
        %v1505 = vrot.slane %v1503, 5
        %v1506 = vor.u32 %v1502, %v1505
        %v1507 = vrot.slane %v1506, 4
        %v1509 = vshll.u32 %v1436, 16
        %v1511 = vrot.slane %v1509, 5
        %v1512 = vsel %vm740, %v1507, %v1511
        %v1514 = vshrl.u32 %v1437, 16
        %v1516 = vrot.slane %v1514, 4
        %v1517 = vshll.u32 %v1437, 16
        %v1519 = vrot.slane %v1517, 5
        %v1520 = vor.u32 %v1516, %v1519
        %v1521 = vrot.slane %v1520, 4
        %v1523 = vshll.u32 %v1438, 16
        %v1525 = vrot.slane %v1523, 5
        %v1526 = vsel %vm740, %v1521, %v1525
        %v1528 = vshrl.u32 %v1439, 16
        %v1530 = vrot.slane %v1528, 4
        %v1531 = vshll.u32 %v1439, 16
        %v1533 = vrot.slane %v1531, 5
        %v1534 = vor.u32 %v1530, %v1533
        %v1535 = vrot.slane %v1534, 4
        %v1537 = vshll.u32 %v1440, 16
        %v1539 = vrot.slane %v1537, 5
        %v1540 = vsel %vm740, %v1535, %v1539
        %v1542 = vshrl.u32 %v1441, 16
        %v1544 = vrot.slane %v1542, 4
        %v1545 = vshll.u32 %v1441, 16
        %v1547 = vrot.slane %v1545, 5
        %v1548 = vor.u32 %v1544, %v1547
        %v1549 = vrot.slane %v1548, 4
        %v1551 = vshll.u32 %v1442, 16
        %v1553 = vrot.slane %v1551, 5
        %v1554 = vsel %vm740, %v1549, %v1553
        %s1555 = scalar_lea.vmem [#allocation11], 64
        %v1556 = vld [vmem:[%s1555] sm:$0xf]
        %v1557 = vld [vmem:[%s1555 + $0x4] sm:$0xf]
        %v1558 = vld [vmem:[%s1555 + $0x8] sm:$0xf]
        %v1559 = vld [vmem:[%s1555 + $0xc] sm:$0xf]
        %v1560 = vunpack.c.l.b16 %v1456
        %v1561 = vunpack.c.l.b16 %v1470
        %v1562 = vunpack.c.l.b16 %v1484
        %v1563 = vunpack.c.l.b16 %v1498
        %v1564 = vunpack.c.l.b16 %v1512
        %v1565 = vunpack.c.l.b16 %v1526
        %v1566 = vunpack.c.l.b16 %v1540
        %v1567 = vunpack.c.l.b16 %v1554
        %v1568 = vpack.c.b16 %v1561, %v1560
        %v1569 = vpack.c.b16 %v1563, %v1562
        %v1570 = vpack.c.b16 %v1565, %v1564
        %v1571 = vpack.c.b16 %v1567, %v1566
        %v1576 = vunpack.c.l.b16 %v1556
        %v1577 = vunpack.c.l.b16 %v1557
        %v1578 = vunpack.c.l.b16 %v1558
        %v1579 = vunpack.c.l.b16 %v1559
        %v1580 = vpack.c.b16 %v1577, %v1576
        %v1581 = vpack.c.b16 %v1579, %v1578
        %v1585 = vsel %vm385, %v1568, 0
        %v1588 = vsel %vm385, %v1569, 0
        %v1591 = vsel %vm385, %v1570, 0
        %v1594 = vsel %vm385, %v1571, 0
        %1596 = vmatprep.subr.bf16.mxu0 0
        %1597 = vmatpush1.bf16.msra.mxu0 %v1580
        %1598 = vmatprep.subr.bf16.mxu0 0
        %1599 = vmatpush1.bf16.msra.mxu0 %v1581
        %1600 = vmatprep.subr.bf16.mxu0 0
        %1601 = vmatpush1.bf16.msra.mxu0 0
        %1602 = vmatprep.subr.bf16.mxu0 0
        %1603 = vmatpush1.bf16.msra.mxu0 0
        %1604 = vmatprep.subr.bf16.mxu0 0
        %1605 = vmatpush1.bf16.msra.mxu0 0
        %1606 = vmatprep.subr.bf16.mxu0 0
        %1607 = vmatpush1.bf16.msra.mxu0 0
        %1608 = vmatprep.subr.bf16.mxu0 0
        %1609 = vmatpush1.bf16.msra.mxu0 0
        %1610 = vmatprep.subr.bf16.mxu0 0
        %1611 = vmatpush1.bf16.msra.mxu0 0
        %1612 = vmatprep.subr.bf16.mxu0 0
        %1613 = vmatpush1.bf16.msra.mxu0 0
        %1614 = vmatprep.subr.bf16.mxu0 0
        %1615 = vmatpush1.bf16.msra.mxu0 0
        %1616 = vmatprep.subr.bf16.mxu0 0
        %1617 = vmatpush1.bf16.msra.mxu0 0
        %1618 = vmatprep.subr.bf16.mxu0 0
        %1619 = vmatpush1.bf16.msra.mxu0 0
        %1620 = vmatprep.subr.bf16.mxu0 0
        %1621 = vmatpush1.bf16.msra.mxu0 0
        %1622 = vmatprep.subr.bf16.mxu0 0
        %1623 = vmatpush1.bf16.msra.mxu0 0
        %1624 = vmatprep.subr.bf16.mxu0 0
        %1625 = vmatpush1.bf16.msra.mxu0 0
        %1626 = vmatprep.subr.bf16.mxu0 0
        %1627 = vmatpush1.bf16.msra.mxu0 0
        %1628 = vmatprep.mubr.bf16.mxu0 0
        %1629 = vmatmul.mubr.bf16.gmra.mrb[0].mxu0 %v1585
        %v1630 = vpop.f32.mrb[0].mxu0
        %v1631 = vadd.f32 0.0, %v1630
        %v1632 = vpop.f32.mrb[0].mxu0
        %v1633 = vpop.f32.mrb[0].mxu0
        %v1634 = vadd.f32 0.0, %v1633
        %v1635 = vpop.f32.mrb[0].mxu0
        %1636 = vmatprep.mubr.bf16.mxu0 0
        %1637 = vmatmul.mubr.bf16.gmra.mrb[0].mxu0 %v1588
        %v1638 = vpop.f32.mrb[0].mxu0
        %v1639 = vadd.f32 0.0, %v1638
        %v1640 = vpop.f32.mrb[0].mxu0
        %v1641 = vpop.f32.mrb[0].mxu0
        %v1642 = vadd.f32 0.0, %v1641
        %v1643 = vpop.f32.mrb[0].mxu0
        %1644 = vmatprep.mubr.bf16.mxu0 0
        %1645 = vmatmul.mubr.bf16.gmra.mrb[0].mxu0 %v1591
        %v1646 = vpop.f32.mrb[0].mxu0
        %v1647 = vadd.f32 0.0, %v1646
        %v1648 = vpop.f32.mrb[0].mxu0
        %v1649 = vpop.f32.mrb[0].mxu0
        %v1650 = vadd.f32 0.0, %v1649
        %v1651 = vpop.f32.mrb[0].mxu0
        %1652 = vmatprep.mubr.bf16.mxu0 0
        %1653 = vmatmul.mubr.bf16.gmra.mrb[0].mxu0 %v1594
        %v1654 = vpop.f32.mrb[0].mxu0
        %v1655 = vadd.f32 0.0, %v1654
        %v1656 = vpop.f32.mrb[0].mxu0
        %v1657 = vpop.f32.mrb[0].mxu0
        %v1658 = vadd.f32 0.0, %v1657
        %v1659 = vpop.f32.mrb[0].mxu0
        %1660 = vdwg.mxu0
        %v1661 = vadd.f32 %v1387, %v1631
        %v1662 = vadd.f32 %v1388, %v1634
        %v1663 = vadd.f32 %v1389, %v1639
        %v1664 = vadd.f32 %v1390, %v1642
        %v1665 = vadd.f32 %v1391, %v1647
        %v1666 = vadd.f32 %v1392, %v1650
        %v1667 = vadd.f32 %v1393, %v1655
        %v1668 = vadd.f32 %v1394, %v1658
        %v1669 = vld [vmem:[%s524] sm:$0x1e]
        %v1670 = vld [vmem:[%s524 + $0x8] sm:$0x1e]
        %v1671 = vld [vmem:[%s524 + $0x10] sm:$0x1e]
        %v1672 = vld [vmem:[%s524 + $0x18] sm:$0x1e]
        %v1673 = vld [vmem:[%s524 + $0x20] sm:$0x1e]
        %v1674 = vld [vmem:[%s524 + $0x28] sm:$0x1e]
        %v1675 = vld [vmem:[%s524 + $0x30] sm:$0x1e]
        %v1676 = vld [vmem:[%s524 + $0x38] sm:$0x1e]
        %v1685 = vunpack.c.l.b16 %v1669
        %v1686 = vunpack.c.h.b16 %v1669
        %v1687 = vunpack.c.l.b16 %v1670
        %v1688 = vunpack.c.h.b16 %v1670
        %v1689 = vunpack.c.l.b16 %v1671
        %v1690 = vunpack.c.h.b16 %v1671
        %v1691 = vunpack.c.l.b16 %v1672
        %v1692 = vunpack.c.h.b16 %v1672
        %v1693 = vunpack.c.l.b16 %v1673
        %v1694 = vunpack.c.h.b16 %v1673
        %v1695 = vunpack.c.l.b16 %v1674
        %v1696 = vunpack.c.h.b16 %v1674
        %v1697 = vunpack.c.l.b16 %v1675
        %v1698 = vunpack.c.h.b16 %v1675
        %v1699 = vunpack.c.l.b16 %v1676
        %v1700 = vunpack.c.h.b16 %v1676
        %v1701 = vpack.c.b16 %v1685, %v1685
        %v1702 = vpack.c.b16 %v1686, %v1686
        %v1703 = vpack.c.b16 %v1687, %v1687
        %v1704 = vpack.c.b16 %v1688, %v1688
        %v1705 = vpack.c.b16 %v1689, %v1689
        %v1706 = vpack.c.b16 %v1690, %v1690
        %v1707 = vpack.c.b16 %v1691, %v1691
        %v1708 = vpack.c.b16 %v1692, %v1692
        %v1709 = vpack.c.b16 %v1693, %v1693
        %v1710 = vpack.c.b16 %v1694, %v1694
        %v1711 = vpack.c.b16 %v1695, %v1695
        %v1712 = vpack.c.b16 %v1696, %v1696
        %v1713 = vpack.c.b16 %v1697, %v1697
        %v1714 = vpack.c.b16 %v1698, %v1698
        %v1715 = vpack.c.b16 %v1699, %v1699
        %v1716 = vpack.c.b16 %v1700, %v1700
        %v1717 = vrot.slane %v1701, 5
        %v1718 = vrot.slane %v1717, 4
        %v1719 = vrot.slane %v1702, 5
        %v1720 = vsel %vm1118, %v1718, %v1719
        %v1721 = vrot.slane %v1703, 5
        %v1722 = vrot.slane %v1721, 4
        %v1723 = vrot.slane %v1704, 5
        %v1724 = vsel %vm1118, %v1722, %v1723
        %v1725 = vrot.slane %v1705, 5
        %v1726 = vrot.slane %v1725, 4
        %v1727 = vrot.slane %v1706, 5
        %v1728 = vsel %vm1118, %v1726, %v1727
        %v1729 = vrot.slane %v1707, 5
        %v1730 = vrot.slane %v1729, 4
        %v1731 = vrot.slane %v1708, 5
        %v1732 = vsel %vm1118, %v1730, %v1731
        %v1733 = vrot.slane %v1709, 5
        %v1734 = vrot.slane %v1733, 4
        %v1735 = vrot.slane %v1710, 5
        %v1736 = vsel %vm1118, %v1734, %v1735
        %v1737 = vrot.slane %v1711, 5
        %v1738 = vrot.slane %v1737, 4
        %v1739 = vrot.slane %v1712, 5
        %v1740 = vsel %vm1118, %v1738, %v1739
        %v1741 = vrot.slane %v1713, 5
        %v1742 = vrot.slane %v1741, 4
        %v1743 = vrot.slane %v1714, 5
        %v1744 = vsel %vm1118, %v1742, %v1743
        %v1745 = vrot.slane %v1715, 5
        %v1746 = vrot.slane %v1745, 4
        %v1747 = vrot.slane %v1716, 5
        %v1748 = vsel %vm1118, %v1746, %v1747
        %s1749 = scalar_lea.vmem [#allocation11], 80
        %v1750 = vld [vmem:[%s1749] sm:$0xf]
        %v1751 = vld [vmem:[%s1749 + $0x4] sm:$0xf]
        %v1752 = vld [vmem:[%s1749 + $0x8] sm:$0xf]
        %v1753 = vld [vmem:[%s1749 + $0xc] sm:$0xf]
        %v1754 = vunpack.c.l.b16 %v1720
        %v1755 = vunpack.c.l.b16 %v1724
        %v1756 = vunpack.c.l.b16 %v1728
        %v1757 = vunpack.c.l.b16 %v1732
        %v1758 = vunpack.c.l.b16 %v1736
        %v1759 = vunpack.c.l.b16 %v1740
        %v1760 = vunpack.c.l.b16 %v1744
        %v1761 = vunpack.c.l.b16 %v1748
        %v1762 = vpack.c.b16 %v1755, %v1754
        %v1763 = vpack.c.b16 %v1757, %v1756
        %v1764 = vpack.c.b16 %v1759, %v1758
        %v1765 = vpack.c.b16 %v1761, %v1760
        %v1770 = vunpack.c.l.b16 %v1750
        %v1771 = vunpack.c.l.b16 %v1751
        %v1772 = vunpack.c.l.b16 %v1752
        %v1773 = vunpack.c.l.b16 %v1753
        %v1774 = vpack.c.b16 %v1771, %v1770
        %v1775 = vpack.c.b16 %v1773, %v1772
        %v1779 = vsel %vm385, %v1762, 0
        %v1782 = vsel %vm385, %v1763, 0
        %v1785 = vsel %vm385, %v1764, 0
        %v1788 = vsel %vm385, %v1765, 0
        %1790 = vmatprep.subr.bf16.mxu0 0
        %1791 = vmatpush1.bf16.msra.mxu0 %v1774
        %1792 = vmatprep.subr.bf16.mxu0 0
        %1793 = vmatpush1.bf16.msra.mxu0 %v1775
        %1794 = vmatprep.subr.bf16.mxu0 0
        %1795 = vmatpush1.bf16.msra.mxu0 0
        %1796 = vmatprep.subr.bf16.mxu0 0
        %1797 = vmatpush1.bf16.msra.mxu0 0
        %1798 = vmatprep.subr.bf16.mxu0 0
        %1799 = vmatpush1.bf16.msra.mxu0 0
        %1800 = vmatprep.subr.bf16.mxu0 0
        %1801 = vmatpush1.bf16.msra.mxu0 0
        %1802 = vmatprep.subr.bf16.mxu0 0
        %1803 = vmatpush1.bf16.msra.mxu0 0
        %1804 = vmatprep.subr.bf16.mxu0 0
        %1805 = vmatpush1.bf16.msra.mxu0 0
        %1806 = vmatprep.subr.bf16.mxu0 0
        %1807 = vmatpush1.bf16.msra.mxu0 0
        %1808 = vmatprep.subr.bf16.mxu0 0
        %1809 = vmatpush1.bf16.msra.mxu0 0
        %1810 = vmatprep.subr.bf16.mxu0 0
        %1811 = vmatpush1.bf16.msra.mxu0 0
        %1812 = vmatprep.subr.bf16.mxu0 0
        %1813 = vmatpush1.bf16.msra.mxu0 0
        %1814 = vmatprep.subr.bf16.mxu0 0
        %1815 = vmatpush1.bf16.msra.mxu0 0
        %1816 = vmatprep.subr.bf16.mxu0 0
        %1817 = vmatpush1.bf16.msra.mxu0 0
        %1818 = vmatprep.subr.bf16.mxu0 0
        %1819 = vmatpush1.bf16.msra.mxu0 0
        %1820 = vmatprep.subr.bf16.mxu0 0
        %1821 = vmatpush1.bf16.msra.mxu0 0
        %1822 = vmatprep.mubr.bf16.mxu0 0
        %1823 = vmatmul.mubr.bf16.gmra.mrb[0].mxu0 %v1779
        %v1824 = vpop.f32.mrb[0].mxu0
        %v1825 = vadd.f32 0.0, %v1824
        %v1826 = vpop.f32.mrb[0].mxu0
        %v1827 = vpop.f32.mrb[0].mxu0
        %v1828 = vadd.f32 0.0, %v1827
        %v1829 = vpop.f32.mrb[0].mxu0
        %1830 = vmatprep.mubr.bf16.mxu0 0
        %1831 = vmatmul.mubr.bf16.gmra.mrb[0].mxu0 %v1782
        %v1832 = vpop.f32.mrb[0].mxu0
        %v1833 = vadd.f32 0.0, %v1832
        %v1834 = vpop.f32.mrb[0].mxu0
        %v1835 = vpop.f32.mrb[0].mxu0
        %v1836 = vadd.f32 0.0, %v1835
        %v1837 = vpop.f32.mrb[0].mxu0
        %1838 = vmatprep.mubr.bf16.mxu0 0
        %1839 = vmatmul.mubr.bf16.gmra.mrb[0].mxu0 %v1785
        %v1840 = vpop.f32.mrb[0].mxu0
        %v1841 = vadd.f32 0.0, %v1840
        %v1842 = vpop.f32.mrb[0].mxu0
        %v1843 = vpop.f32.mrb[0].mxu0
        %v1844 = vadd.f32 0.0, %v1843
        %v1845 = vpop.f32.mrb[0].mxu0
        %1846 = vmatprep.mubr.bf16.mxu0 0
        %1847 = vmatmul.mubr.bf16.gmra.mrb[0].mxu0 %v1788
        %v1848 = vpop.f32.mrb[0].mxu0
        %v1849 = vadd.f32 0.0, %v1848
        %v1850 = vpop.f32.mrb[0].mxu0
        %v1851 = vpop.f32.mrb[0].mxu0
        %v1852 = vadd.f32 0.0, %v1851
        %v1853 = vpop.f32.mrb[0].mxu0
        %1854 = vdwg.mxu0
        %v1855 = vadd.f32 %v1661, %v1825
        %v1856 = vadd.f32 %v1662, %v1828
        %v1857 = vadd.f32 %v1663, %v1833
        %v1858 = vadd.f32 %v1664, %v1836
        %v1859 = vadd.f32 %v1665, %v1841
        %v1860 = vadd.f32 %v1666, %v1844
        %v1861 = vadd.f32 %v1667, %v1849
        %v1862 = vadd.f32 %v1668, %v1852
        %s1863 = scalar_lea.vmem [#allocation2], 16
        %v1864 = vld [vmem:[%s1863] sm:$0xf]
        %v1865 = vld [vmem:[%s1863 + $0x8] sm:$0xf]
        %v1866 = vld [vmem:[%s1863 + $0x10] sm:$0xf]
        %v1867 = vld [vmem:[%s1863 + $0x18] sm:$0xf]
        %v1868 = vld [vmem:[%s1863 + $0x20] sm:$0xf]
        %v1869 = vld [vmem:[%s1863 + $0x28] sm:$0xf]
        %v1870 = vld [vmem:[%s1863 + $0x30] sm:$0xf]
        %v1871 = vld [vmem:[%s1863 + $0x38] sm:$0xf]
        %s1872 = scalar_lea.vmem [#allocation11], 96
        %v1873 = vld [vmem:[%s1872] sm:$0xf]
        %v1874 = vld [vmem:[%s1872 + $0x4] sm:$0xf]
        %v1875 = vld [vmem:[%s1872 + $0x8] sm:$0xf]
        %v1876 = vld [vmem:[%s1872 + $0xc] sm:$0xf]
        %v1885 = vunpack.c.l.b16 %v1864
        %v1886 = vunpack.c.l.b16 %v1865
        %v1887 = vunpack.c.l.b16 %v1866
        %v1888 = vunpack.c.l.b16 %v1867
        %v1889 = vunpack.c.l.b16 %v1868
        %v1890 = vunpack.c.l.b16 %v1869
        %v1891 = vunpack.c.l.b16 %v1870
        %v1892 = vunpack.c.l.b16 %v1871
        %v1893 = vpack.c.b16 %v1886, %v1885
        %v1894 = vpack.c.b16 %v1888, %v1887
        %v1895 = vpack.c.b16 %v1890, %v1889
        %v1896 = vpack.c.b16 %v1892, %v1891
        %v1901 = vunpack.c.l.b16 %v1873
        %v1902 = vunpack.c.l.b16 %v1874
        %v1903 = vunpack.c.l.b16 %v1875
        %v1904 = vunpack.c.l.b16 %v1876
        %v1905 = vpack.c.b16 %v1902, %v1901
        %v1906 = vpack.c.b16 %v1904, %v1903
        %v1910 = vsel %vm385, %v1893, 0
        %v1913 = vsel %vm385, %v1894, 0
        %v1916 = vsel %vm385, %v1895, 0
        %v1919 = vsel %vm385, %v1896, 0
        %1921 = vmatprep.subr.bf16.mxu0 0
        %1922 = vmatpush1.bf16.msra.mxu0 %v1905
        %1923 = vmatprep.subr.bf16.mxu0 0
        %1924 = vmatpush1.bf16.msra.mxu0 %v1906
        %1925 = vmatprep.subr.bf16.mxu0 0
        %1926 = vmatpush1.bf16.msra.mxu0 0
        %1927 = vmatprep.subr.bf16.mxu0 0
        %1928 = vmatpush1.bf16.msra.mxu0 0
        %1929 = vmatprep.subr.bf16.mxu0 0
        %1930 = vmatpush1.bf16.msra.mxu0 0
        %1931 = vmatprep.subr.bf16.mxu0 0
        %1932 = vmatpush1.bf16.msra.mxu0 0
        %1933 = vmatprep.subr.bf16.mxu0 0
        %1934 = vmatpush1.bf16.msra.mxu0 0
        %1935 = vmatprep.subr.bf16.mxu0 0
        %1936 = vmatpush1.bf16.msra.mxu0 0
        %1937 = vmatprep.subr.bf16.mxu0 0
        %1938 = vmatpush1.bf16.msra.mxu0 0
        %1939 = vmatprep.subr.bf16.mxu0 0
        %1940 = vmatpush1.bf16.msra.mxu0 0
        %1941 = vmatprep.subr.bf16.mxu0 0
        %1942 = vmatpush1.bf16.msra.mxu0 0
        %1943 = vmatprep.subr.bf16.mxu0 0
        %1944 = vmatpush1.bf16.msra.mxu0 0
        %1945 = vmatprep.subr.bf16.mxu0 0
        %1946 = vmatpush1.bf16.msra.mxu0 0
        %1947 = vmatprep.subr.bf16.mxu0 0
        %1948 = vmatpush1.bf16.msra.mxu0 0
        %1949 = vmatprep.subr.bf16.mxu0 0
        %1950 = vmatpush1.bf16.msra.mxu0 0
        %1951 = vmatprep.subr.bf16.mxu0 0
        %1952 = vmatpush1.bf16.msra.mxu0 0
        %1953 = vmatprep.mubr.bf16.mxu0 0
        %1954 = vmatmul.mubr.bf16.gmra.mrb[0].mxu0 %v1910
        %v1955 = vpop.f32.mrb[0].mxu0
        %v1956 = vadd.f32 0.0, %v1955
        %v1957 = vpop.f32.mrb[0].mxu0
        %v1958 = vpop.f32.mrb[0].mxu0
        %v1959 = vadd.f32 0.0, %v1958
        %v1960 = vpop.f32.mrb[0].mxu0
        %1961 = vmatprep.mubr.bf16.mxu0 0
        %1962 = vmatmul.mubr.bf16.gmra.mrb[0].mxu0 %v1913
        %v1963 = vpop.f32.mrb[0].mxu0
        %v1964 = vadd.f32 0.0, %v1963
        %v1965 = vpop.f32.mrb[0].mxu0
        %v1966 = vpop.f32.mrb[0].mxu0
        %v1967 = vadd.f32 0.0, %v1966
        %v1968 = vpop.f32.mrb[0].mxu0
        %1969 = vmatprep.mubr.bf16.mxu0 0
        %1970 = vmatmul.mubr.bf16.gmra.mrb[0].mxu0 %v1916
        %v1971 = vpop.f32.mrb[0].mxu0
        %v1972 = vadd.f32 0.0, %v1971
        %v1973 = vpop.f32.mrb[0].mxu0
        %v1974 = vpop.f32.mrb[0].mxu0
        %v1975 = vadd.f32 0.0, %v1974
        %v1976 = vpop.f32.mrb[0].mxu0
        %1977 = vmatprep.mubr.bf16.mxu0 0
        %1978 = vmatmul.mubr.bf16.gmra.mrb[0].mxu0 %v1919
        %v1979 = vpop.f32.mrb[0].mxu0
        %v1980 = vadd.f32 0.0, %v1979
        %v1981 = vpop.f32.mrb[0].mxu0
        %v1982 = vpop.f32.mrb[0].mxu0
        %v1983 = vadd.f32 0.0, %v1982
        %v1984 = vpop.f32.mrb[0].mxu0
        %1985 = vdwg.mxu0
        %v1986 = vadd.f32 %v1855, %v1956
        %v1987 = vadd.f32 %v1856, %v1959
        %v1988 = vadd.f32 %v1857, %v1964
        %v1989 = vadd.f32 %v1858, %v1967
        %v1990 = vadd.f32 %v1859, %v1972
        %v1991 = vadd.f32 %v1860, %v1975
        %v1992 = vadd.f32 %v1861, %v1980
        %v1993 = vadd.f32 %v1862, %v1983
        %v1994 = vld [vmem:[%s1863] sm:$0x1f]
        %v1995 = vld [vmem:[%s1863 + $0x8] sm:$0x1f]
        %v1996 = vld [vmem:[%s1863 + $0x10] sm:$0x1f]
        %v1997 = vld [vmem:[%s1863 + $0x18] sm:$0x1f]
        %v1998 = vld [vmem:[%s1863 + $0x20] sm:$0x1f]
        %v1999 = vld [vmem:[%s1863 + $0x28] sm:$0x1f]
        %v2000 = vld [vmem:[%s1863 + $0x30] sm:$0x1f]
        %v2001 = vld [vmem:[%s1863 + $0x38] sm:$0x1f]
        %v2010 = vunpack.c.l.b16 %v1994
        %v2011 = vunpack.c.h.b16 %v1994
        %v2012 = vunpack.c.l.b16 %v1995
        %v2013 = vunpack.c.h.b16 %v1995
        %v2014 = vunpack.c.l.b16 %v1996
        %v2015 = vunpack.c.h.b16 %v1996
        %v2016 = vunpack.c.l.b16 %v1997
        %v2017 = vunpack.c.h.b16 %v1997
        %v2018 = vunpack.c.l.b16 %v1998
        %v2019 = vunpack.c.h.b16 %v1998
        %v2020 = vunpack.c.l.b16 %v1999
        %v2021 = vunpack.c.h.b16 %v1999
        %v2022 = vunpack.c.l.b16 %v2000
        %v2023 = vunpack.c.h.b16 %v2000
        %v2024 = vunpack.c.l.b16 %v2001
        %v2025 = vunpack.c.h.b16 %v2001
        %v2026 = vpack.c.b16 %v2010, %v2010
        %v2027 = vpack.c.b16 %v2011, %v2011
        %v2028 = vpack.c.b16 %v2012, %v2012
        %v2029 = vpack.c.b16 %v2013, %v2013
        %v2030 = vpack.c.b16 %v2014, %v2014
        %v2031 = vpack.c.b16 %v2015, %v2015
        %v2032 = vpack.c.b16 %v2016, %v2016
        %v2033 = vpack.c.b16 %v2017, %v2017
        %v2034 = vpack.c.b16 %v2018, %v2018
        %v2035 = vpack.c.b16 %v2019, %v2019
        %v2036 = vpack.c.b16 %v2020, %v2020
        %v2037 = vpack.c.b16 %v2021, %v2021
        %v2038 = vpack.c.b16 %v2022, %v2022
        %v2039 = vpack.c.b16 %v2023, %v2023
        %v2040 = vpack.c.b16 %v2024, %v2024
        %v2041 = vpack.c.b16 %v2025, %v2025
        %v2043 = vshrl.u32 %v2026, 16
        %v2045 = vrot.slane %v2043, 4
        %v2046 = vshll.u32 %v2026, 16
        %v2048 = vrot.slane %v2046, 5
        %v2049 = vor.u32 %v2045, %v2048
        %v2050 = vrot.slane %v2049, 4
        %v2052 = vshll.u32 %v2027, 16
        %v2054 = vrot.slane %v2052, 5
        %v2055 = vsel %vm740, %v2050, %v2054
        %v2057 = vshrl.u32 %v2028, 16
        %v2059 = vrot.slane %v2057, 4
        %v2060 = vshll.u32 %v2028, 16
        %v2062 = vrot.slane %v2060, 5
        %v2063 = vor.u32 %v2059, %v2062
        %v2064 = vrot.slane %v2063, 4
        %v2066 = vshll.u32 %v2029, 16
        %v2068 = vrot.slane %v2066, 5
        %v2069 = vsel %vm740, %v2064, %v2068
        %v2071 = vshrl.u32 %v2030, 16
        %v2073 = vrot.slane %v2071, 4
        %v2074 = vshll.u32 %v2030, 16
        %v2076 = vrot.slane %v2074, 5
        %v2077 = vor.u32 %v2073, %v2076
        %v2078 = vrot.slane %v2077, 4
        %v2080 = vshll.u32 %v2031, 16
        %v2082 = vrot.slane %v2080, 5
        %v2083 = vsel %vm740, %v2078, %v2082
        %v2085 = vshrl.u32 %v2032, 16
        %v2087 = vrot.slane %v2085, 4
        %v2088 = vshll.u32 %v2032, 16
        %v2090 = vrot.slane %v2088, 5
        %v2091 = vor.u32 %v2087, %v2090
        %v2092 = vrot.slane %v2091, 4
        %v2094 = vshll.u32 %v2033, 16
        %v2096 = vrot.slane %v2094, 5
        %v2097 = vsel %vm740, %v2092, %v2096
        %v2099 = vshrl.u32 %v2034, 16
        %v2101 = vrot.slane %v2099, 4
        %v2102 = vshll.u32 %v2034, 16
        %v2104 = vrot.slane %v2102, 5
        %v2105 = vor.u32 %v2101, %v2104
        %v2106 = vrot.slane %v2105, 4
        %v2108 = vshll.u32 %v2035, 16
        %v2110 = vrot.slane %v2108, 5
        %v2111 = vsel %vm740, %v2106, %v2110
        %v2113 = vshrl.u32 %v2036, 16
        %v2115 = vrot.slane %v2113, 4
        %v2116 = vshll.u32 %v2036, 16
        %v2118 = vrot.slane %v2116, 5
        %v2119 = vor.u32 %v2115, %v2118
        %v2120 = vrot.slane %v2119, 4
        %v2122 = vshll.u32 %v2037, 16
        %v2124 = vrot.slane %v2122, 5
        %v2125 = vsel %vm740, %v2120, %v2124
        %v2127 = vshrl.u32 %v2038, 16
        %v2129 = vrot.slane %v2127, 4
        %v2130 = vshll.u32 %v2038, 16
        %v2132 = vrot.slane %v2130, 5
        %v2133 = vor.u32 %v2129, %v2132
        %v2134 = vrot.slane %v2133, 4
        %v2136 = vshll.u32 %v2039, 16
        %v2138 = vrot.slane %v2136, 5
        %v2139 = vsel %vm740, %v2134, %v2138
        %v2141 = vshrl.u32 %v2040, 16
        %v2143 = vrot.slane %v2141, 4
        %v2144 = vshll.u32 %v2040, 16
        %v2146 = vrot.slane %v2144, 5
        %v2147 = vor.u32 %v2143, %v2146
        %v2148 = vrot.slane %v2147, 4
        %v2150 = vshll.u32 %v2041, 16
        %v2152 = vrot.slane %v2150, 5
        %v2153 = vsel %vm740, %v2148, %v2152
        %s2154 = scalar_lea.vmem [#allocation11], 112
        %v2155 = vld [vmem:[%s2154] sm:$0xf]
        %v2156 = vld [vmem:[%s2154 + $0x4] sm:$0xf]
        %v2157 = vld [vmem:[%s2154 + $0x8] sm:$0xf]
        %v2158 = vld [vmem:[%s2154 + $0xc] sm:$0xf]
        %v2159 = vunpack.c.l.b16 %v2055
        %v2160 = vunpack.c.l.b16 %v2069
        %v2161 = vunpack.c.l.b16 %v2083
        %v2162 = vunpack.c.l.b16 %v2097
        %v2163 = vunpack.c.l.b16 %v2111
        %v2164 = vunpack.c.l.b16 %v2125
        %v2165 = vunpack.c.l.b16 %v2139
        %v2166 = vunpack.c.l.b16 %v2153
        %v2167 = vpack.c.b16 %v2160, %v2159
        %v2168 = vpack.c.b16 %v2162, %v2161
        %v2169 = vpack.c.b16 %v2164, %v2163
        %v2170 = vpack.c.b16 %v2166, %v2165
        %v2175 = vunpack.c.l.b16 %v2155
        %v2176 = vunpack.c.l.b16 %v2156
        %v2177 = vunpack.c.l.b16 %v2157
        %v2178 = vunpack.c.l.b16 %v2158
        %v2179 = vpack.c.b16 %v2176, %v2175
        %v2180 = vpack.c.b16 %v2178, %v2177
        %v2184 = vsel %vm385, %v2167, 0
        %v2187 = vsel %vm385, %v2168, 0
        %v2190 = vsel %vm385, %v2169, 0
        %v2193 = vsel %vm385, %v2170, 0
        %2195 = vmatprep.subr.bf16.mxu0 0
        %2196 = vmatpush1.bf16.msra.mxu0 %v2179
        %2197 = vmatprep.subr.bf16.mxu0 0
        %2198 = vmatpush1.bf16.msra.mxu0 %v2180
        %2199 = vmatprep.subr.bf16.mxu0 0
        %2200 = vmatpush1.bf16.msra.mxu0 0
        %2201 = vmatprep.subr.bf16.mxu0 0
        %2202 = vmatpush1.bf16.msra.mxu0 0
        %2203 = vmatprep.subr.bf16.mxu0 0
        %2204 = vmatpush1.bf16.msra.mxu0 0
        %2205 = vmatprep.subr.bf16.mxu0 0
        %2206 = vmatpush1.bf16.msra.mxu0 0
        %2207 = vmatprep.subr.bf16.mxu0 0
        %2208 = vmatpush1.bf16.msra.mxu0 0
        %2209 = vmatprep.subr.bf16.mxu0 0
        %2210 = vmatpush1.bf16.msra.mxu0 0
        %2211 = vmatprep.subr.bf16.mxu0 0
        %2212 = vmatpush1.bf16.msra.mxu0 0
        %2213 = vmatprep.subr.bf16.mxu0 0
        %2214 = vmatpush1.bf16.msra.mxu0 0
        %2215 = vmatprep.subr.bf16.mxu0 0
        %2216 = vmatpush1.bf16.msra.mxu0 0
        %2217 = vmatprep.subr.bf16.mxu0 0
        %2218 = vmatpush1.bf16.msra.mxu0 0
        %2219 = vmatprep.subr.bf16.mxu0 0
        %2220 = vmatpush1.bf16.msra.mxu0 0
        %2221 = vmatprep.subr.bf16.mxu0 0
        %2222 = vmatpush1.bf16.msra.mxu0 0
        %2223 = vmatprep.subr.bf16.mxu0 0
        %2224 = vmatpush1.bf16.msra.mxu0 0
        %2225 = vmatprep.subr.bf16.mxu0 0
        %2226 = vmatpush1.bf16.msra.mxu0 0
        %2227 = vmatprep.mubr.bf16.mxu0 0
        %2228 = vmatmul.mubr.bf16.gmra.mrb[0].mxu0 %v2184
        %v2229 = vpop.f32.mrb[0].mxu0
        %v2230 = vadd.f32 0.0, %v2229
        %v2231 = vpop.f32.mrb[0].mxu0
        %v2232 = vpop.f32.mrb[0].mxu0
        %v2233 = vadd.f32 0.0, %v2232
        %v2234 = vpop.f32.mrb[0].mxu0
        %2235 = vmatprep.mubr.bf16.mxu0 0
        %2236 = vmatmul.mubr.bf16.gmra.mrb[0].mxu0 %v2187
        %v2237 = vpop.f32.mrb[0].mxu0
        %v2238 = vadd.f32 0.0, %v2237
        %v2239 = vpop.f32.mrb[0].mxu0
        %v2240 = vpop.f32.mrb[0].mxu0
        %v2241 = vadd.f32 0.0, %v2240
        %v2242 = vpop.f32.mrb[0].mxu0
        %2243 = vmatprep.mubr.bf16.mxu0 0
        %2244 = vmatmul.mubr.bf16.gmra.mrb[0].mxu0 %v2190
        %v2245 = vpop.f32.mrb[0].mxu0
        %v2246 = vadd.f32 0.0, %v2245
        %v2247 = vpop.f32.mrb[0].mxu0
        %v2248 = vpop.f32.mrb[0].mxu0
        %v2249 = vadd.f32 0.0, %v2248
        %v2250 = vpop.f32.mrb[0].mxu0
        %2251 = vmatprep.mubr.bf16.mxu0 0
        %2252 = vmatmul.mubr.bf16.gmra.mrb[0].mxu0 %v2193
        %v2253 = vpop.f32.mrb[0].mxu0
        %v2254 = vadd.f32 0.0, %v2253
        %v2255 = vpop.f32.mrb[0].mxu0
        %v2256 = vpop.f32.mrb[0].mxu0
        %v2257 = vadd.f32 0.0, %v2256
        %v2258 = vpop.f32.mrb[0].mxu0
        %2259 = vdwg.mxu0
        %v2260 = vadd.f32 %v1986, %v2230
        %v2261 = vadd.f32 %v1987, %v2233
        %v2262 = vadd.f32 %v1988, %v2238
        %v2263 = vadd.f32 %v1989, %v2241
        %v2264 = vadd.f32 %v1990, %v2246
        %v2265 = vadd.f32 %v1991, %v2249
        %v2266 = vadd.f32 %v1992, %v2254
        %v2267 = vadd.f32 %v1993, %v2257
        %v2268 = vld [vmem:[%s1863] sm:$0x1e]
        %v2269 = vld [vmem:[%s1863 + $0x8] sm:$0x1e]
        %v2270 = vld [vmem:[%s1863 + $0x10] sm:$0x1e]
        %v2271 = vld [vmem:[%s1863 + $0x18] sm:$0x1e]
        %v2272 = vld [vmem:[%s1863 + $0x20] sm:$0x1e]
        %v2273 = vld [vmem:[%s1863 + $0x28] sm:$0x1e]
        %v2274 = vld [vmem:[%s1863 + $0x30] sm:$0x1e]
        %v2275 = vld [vmem:[%s1863 + $0x38] sm:$0x1e]
        %v2284 = vunpack.c.l.b16 %v2268
        %v2285 = vunpack.c.h.b16 %v2268
        %v2286 = vunpack.c.l.b16 %v2269
        %v2287 = vunpack.c.h.b16 %v2269
        %v2288 = vunpack.c.l.b16 %v2270
        %v2289 = vunpack.c.h.b16 %v2270
        %v2290 = vunpack.c.l.b16 %v2271
        %v2291 = vunpack.c.h.b16 %v2271
        %v2292 = vunpack.c.l.b16 %v2272
        %v2293 = vunpack.c.h.b16 %v2272
        %v2294 = vunpack.c.l.b16 %v2273
        %v2295 = vunpack.c.h.b16 %v2273
        %v2296 = vunpack.c.l.b16 %v2274
        %v2297 = vunpack.c.h.b16 %v2274
        %v2298 = vunpack.c.l.b16 %v2275
        %v2299 = vunpack.c.h.b16 %v2275
        %v2300 = vpack.c.b16 %v2284, %v2284
        %v2301 = vpack.c.b16 %v2285, %v2285
        %v2302 = vpack.c.b16 %v2286, %v2286
        %v2303 = vpack.c.b16 %v2287, %v2287
        %v2304 = vpack.c.b16 %v2288, %v2288
        %v2305 = vpack.c.b16 %v2289, %v2289
        %v2306 = vpack.c.b16 %v2290, %v2290
        %v2307 = vpack.c.b16 %v2291, %v2291
        %v2308 = vpack.c.b16 %v2292, %v2292
        %v2309 = vpack.c.b16 %v2293, %v2293
        %v2310 = vpack.c.b16 %v2294, %v2294
        %v2311 = vpack.c.b16 %v2295, %v2295
        %v2312 = vpack.c.b16 %v2296, %v2296
        %v2313 = vpack.c.b16 %v2297, %v2297
        %v2314 = vpack.c.b16 %v2298, %v2298
        %v2315 = vpack.c.b16 %v2299, %v2299
        %v2316 = vrot.slane %v2300, 5
        %v2317 = vrot.slane %v2316, 4
        %v2318 = vrot.slane %v2301, 5
        %v2319 = vsel %vm1118, %v2317, %v2318
        %v2320 = vrot.slane %v2302, 5
        %v2321 = vrot.slane %v2320, 4
        %v2322 = vrot.slane %v2303, 5
        %v2323 = vsel %vm1118, %v2321, %v2322
        %v2324 = vrot.slane %v2304, 5
        %v2325 = vrot.slane %v2324, 4
        %v2326 = vrot.slane %v2305, 5
        %v2327 = vsel %vm1118, %v2325, %v2326
        %v2328 = vrot.slane %v2306, 5
        %v2329 = vrot.slane %v2328, 4
        %v2330 = vrot.slane %v2307, 5
        %v2331 = vsel %vm1118, %v2329, %v2330
        %v2332 = vrot.slane %v2308, 5
        %v2333 = vrot.slane %v2332, 4
        %v2334 = vrot.slane %v2309, 5
        %v2335 = vsel %vm1118, %v2333, %v2334
        %v2336 = vrot.slane %v2310, 5
        %v2337 = vrot.slane %v2336, 4
        %v2338 = vrot.slane %v2311, 5
        %v2339 = vsel %vm1118, %v2337, %v2338
        %v2340 = vrot.slane %v2312, 5
        %v2341 = vrot.slane %v2340, 4
        %v2342 = vrot.slane %v2313, 5
        %v2343 = vsel %vm1118, %v2341, %v2342
        %v2344 = vrot.slane %v2314, 5
        %v2345 = vrot.slane %v2344, 4
        %v2346 = vrot.slane %v2315, 5
        %v2347 = vsel %vm1118, %v2345, %v2346
        %s2348 = scalar_lea.vmem [#allocation11], 128
        %v2349 = vld [vmem:[%s2348] sm:$0xf]
        %v2350 = vld [vmem:[%s2348 + $0x4] sm:$0xf]
        %v2351 = vld [vmem:[%s2348 + $0x8] sm:$0xf]
        %v2352 = vld [vmem:[%s2348 + $0xc] sm:$0xf]
        %v2353 = vunpack.c.l.b16 %v2319
        %v2354 = vunpack.c.l.b16 %v2323
        %v2355 = vunpack.c.l.b16 %v2327
        %v2356 = vunpack.c.l.b16 %v2331
        %v2357 = vunpack.c.l.b16 %v2335
        %v2358 = vunpack.c.l.b16 %v2339
        %v2359 = vunpack.c.l.b16 %v2343
        %v2360 = vunpack.c.l.b16 %v2347
        %v2361 = vpack.c.b16 %v2354, %v2353
        %v2362 = vpack.c.b16 %v2356, %v2355
        %v2363 = vpack.c.b16 %v2358, %v2357
        %v2364 = vpack.c.b16 %v2360, %v2359
        %v2369 = vunpack.c.l.b16 %v2349
        %v2370 = vunpack.c.l.b16 %v2350
        %v2371 = vunpack.c.l.b16 %v2351
        %v2372 = vunpack.c.l.b16 %v2352
        %v2373 = vpack.c.b16 %v2370, %v2369
        %v2374 = vpack.c.b16 %v2372, %v2371
        %v2378 = vsel %vm385, %v2361, 0
        %v2381 = vsel %vm385, %v2362, 0
        %v2384 = vsel %vm385, %v2363, 0
        %v2387 = vsel %vm385, %v2364, 0
        %2389 = vmatprep.subr.bf16.mxu0 0
        %2390 = vmatpush1.bf16.msra.mxu0 %v2373
        %2391 = vmatprep.subr.bf16.mxu0 0
        %2392 = vmatpush1.bf16.msra.mxu0 %v2374
        %2393 = vmatprep.subr.bf16.mxu0 0
        %2394 = vmatpush1.bf16.msra.mxu0 0
        %2395 = vmatprep.subr.bf16.mxu0 0
        %2396 = vmatpush1.bf16.msra.mxu0 0
        %2397 = vmatprep.subr.bf16.mxu0 0
        %2398 = vmatpush1.bf16.msra.mxu0 0
        %2399 = vmatprep.subr.bf16.mxu0 0
        %2400 = vmatpush1.bf16.msra.mxu0 0
        %2401 = vmatprep.subr.bf16.mxu0 0
        %2402 = vmatpush1.bf16.msra.mxu0 0
        %2403 = vmatprep.subr.bf16.mxu0 0
        %2404 = vmatpush1.bf16.msra.mxu0 0
        %2405 = vmatprep.subr.bf16.mxu0 0
        %2406 = vmatpush1.bf16.msra.mxu0 0
        %2407 = vmatprep.subr.bf16.mxu0 0
        %2408 = vmatpush1.bf16.msra.mxu0 0
        %2409 = vmatprep.subr.bf16.mxu0 0
        %2410 = vmatpush1.bf16.msra.mxu0 0
        %2411 = vmatprep.subr.bf16.mxu0 0
        %2412 = vmatpush1.bf16.msra.mxu0 0
        %2413 = vmatprep.subr.bf16.mxu0 0
        %2414 = vmatpush1.bf16.msra.mxu0 0
        %2415 = vmatprep.subr.bf16.mxu0 0
        %2416 = vmatpush1.bf16.msra.mxu0 0
        %2417 = vmatprep.subr.bf16.mxu0 0
        %2418 = vmatpush1.bf16.msra.mxu0 0
        %2419 = vmatprep.subr.bf16.mxu0 0
        %2420 = vmatpush1.bf16.msra.mxu0 0
        %2421 = vmatprep.mubr.bf16.mxu0 0
        %2422 = vmatmul.mubr.bf16.gmra.mrb[0].mxu0 %v2378
        %v2423 = vpop.f32.mrb[0].mxu0
        %v2424 = vadd.f32 0.0, %v2423
        %v2425 = vpop.f32.mrb[0].mxu0
        %v2426 = vpop.f32.mrb[0].mxu0
        %v2427 = vadd.f32 0.0, %v2426
        %v2428 = vpop.f32.mrb[0].mxu0
        %2429 = vmatprep.mubr.bf16.mxu0 0
        %2430 = vmatmul.mubr.bf16.gmra.mrb[0].mxu0 %v2381
        %v2431 = vpop.f32.mrb[0].mxu0
        %v2432 = vadd.f32 0.0, %v2431
        %v2433 = vpop.f32.mrb[0].mxu0
        %v2434 = vpop.f32.mrb[0].mxu0
        %v2435 = vadd.f32 0.0, %v2434
        %v2436 = vpop.f32.mrb[0].mxu0
        %2437 = vmatprep.mubr.bf16.mxu0 0
        %2438 = vmatmul.mubr.bf16.gmra.mrb[0].mxu0 %v2384
        %v2439 = vpop.f32.mrb[0].mxu0
        %v2440 = vadd.f32 0.0, %v2439
        %v2441 = vpop.f32.mrb[0].mxu0
        %v2442 = vpop.f32.mrb[0].mxu0
        %v2443 = vadd.f32 0.0, %v2442
        %v2444 = vpop.f32.mrb[0].mxu0
        %2445 = vmatprep.mubr.bf16.mxu0 0
        %2446 = vmatmul.mubr.bf16.gmra.mrb[0].mxu0 %v2387
        %v2447 = vpop.f32.mrb[0].mxu0
        %v2448 = vadd.f32 0.0, %v2447
        %v2449 = vpop.f32.mrb[0].mxu0
        %v2450 = vpop.f32.mrb[0].mxu0
        %v2451 = vadd.f32 0.0, %v2450
        %v2452 = vpop.f32.mrb[0].mxu0
        %2453 = vdwg.mxu0
        %v2454 = vadd.f32 %v2260, %v2424
        %v2455 = vadd.f32 %v2261, %v2427
        %v2456 = vadd.f32 %v2262, %v2432
        %v2457 = vadd.f32 %v2263, %v2435
        %v2458 = vadd.f32 %v2264, %v2440
        %v2459 = vadd.f32 %v2265, %v2443
        %v2460 = vadd.f32 %v2266, %v2448
        %v2461 = vadd.f32 %v2267, %v2451
        %v2462 = vld [vmem:[#allocation13] sm:$0x1]
        %v2464 = vlaneseq
        %v2465 = vshrl.u32 %v2464, 7
        %v2466 = vsub.s32 0, %v2465
        %v2467 = vrot.slane %v2462, %v2466
        %v2469 = vadd.f32 %v2454, %v2467
        %v2470 = vadd.f32 %v2455, %v2467
        %v2471 = vadd.f32 %v2456, %v2467
        %v2472 = vadd.f32 %v2457, %v2467
        %v2473 = vadd.f32 %v2458, %v2467
        %v2474 = vadd.f32 %v2459, %v2467
        %v2475 = vadd.f32 %v2460, %v2467
        %v2476 = vadd.f32 %v2461, %v2467
        %v2477 = vmul.f32 %v2469, 0.5
        %v2478 = vmul.f32 %v2470, 0.5
        %v2479 = vmul.f32 %v2471, 0.5
        %v2480 = vmul.f32 %v2472, 0.5
        %v2481 = vmul.f32 %v2473, 0.5
        %v2482 = vmul.f32 %v2474, 0.5
        %v2483 = vmul.f32 %v2475, 0.5
        %v2484 = vmul.f32 %v2476, 0.5
        %v2485 = vmul.f32 %v2469, 0.044715
        %v2486 = vmul.f32 %v2470, 0.044715
        %v2487 = vmul.f32 %v2471, 0.044715
        %v2488 = vmul.f32 %v2472, 0.044715
        %v2489 = vmul.f32 %v2473, 0.044715
        %v2490 = vmul.f32 %v2474, 0.044715
        %v2491 = vmul.f32 %v2475, 0.044715
        %v2492 = vmul.f32 %v2476, 0.044715
        %v2493 = vmul.f32 %v2485, %v2469
        %v2494 = vmul.f32 %v2486, %v2470
        %v2495 = vmul.f32 %v2487, %v2471
        %v2496 = vmul.f32 %v2488, %v2472
        %v2497 = vmul.f32 %v2489, %v2473
        %v2498 = vmul.f32 %v2490, %v2474
        %v2499 = vmul.f32 %v2491, %v2475
        %v2500 = vmul.f32 %v2492, %v2476
        %v2501 = vmul.f32 %v2493, %v2469
        %v2502 = vmul.f32 %v2494, %v2470
        %v2503 = vmul.f32 %v2495, %v2471
        %v2504 = vmul.f32 %v2496, %v2472
        %v2505 = vmul.f32 %v2497, %v2473
        %v2506 = vmul.f32 %v2498, %v2474
        %v2507 = vmul.f32 %v2499, %v2475
        %v2508 = vmul.f32 %v2500, %v2476
        %v2509 = vadd.f32 %v2469, %v2501
        %v2510 = vadd.f32 %v2470, %v2502
        %v2511 = vadd.f32 %v2471, %v2503
        %v2512 = vadd.f32 %v2472, %v2504
        %v2513 = vadd.f32 %v2473, %v2505
        %v2514 = vadd.f32 %v2474, %v2506
        %v2515 = vadd.f32 %v2475, %v2507
        %v2516 = vadd.f32 %v2476, %v2508
        %v2517 = vmul.f32 %v2509, 0.7978846
        %v2518 = vmul.f32 %v2510, 0.7978846
        %v2519 = vmul.f32 %v2511, 0.7978846
        %v2520 = vmul.f32 %v2512, 0.7978846
        %v2521 = vmul.f32 %v2513, 0.7978846
        %v2522 = vmul.f32 %v2514, 0.7978846
        %v2523 = vmul.f32 %v2515, 0.7978846
        %v2524 = vmul.f32 %v2516, 0.7978846
        %v2525 = vtanh.pop %v2517
        %v2526 = vtanh.pop %v2518
        %v2527 = vtanh.pop %v2519
        %v2528 = vtanh.pop %v2520
        %v2529 = vtanh.pop %v2521
        %v2530 = vtanh.pop %v2522
        %v2531 = vtanh.pop %v2523
        %v2532 = vtanh.pop %v2524
        %v2533 = vadd.f32 %v2525, 1.0
        %v2534 = vadd.f32 %v2526, 1.0
        %v2535 = vadd.f32 %v2527, 1.0
        %v2536 = vadd.f32 %v2528, 1.0
        %v2537 = vadd.f32 %v2529, 1.0
        %v2538 = vadd.f32 %v2530, 1.0
        %v2539 = vadd.f32 %v2531, 1.0
        %v2540 = vadd.f32 %v2532, 1.0
        %v2541 = vmul.f32 %v2477, %v2533
        %v2542 = vmul.f32 %v2478, %v2534
        %v2543 = vmul.f32 %v2479, %v2535
        %v2544 = vmul.f32 %v2480, %v2536
        %v2545 = vmul.f32 %v2481, %v2537
        %v2546 = vmul.f32 %v2482, %v2538
        %v2547 = vmul.f32 %v2483, %v2539
        %v2548 = vmul.f32 %v2484, %v2540
        %2549 = vst [vmem:[#allocation3] sm:$0xff] 0
        %s2550 = scalar_lea.vmem [#allocation3], 72
        %2551 = vst [vmem:[%s2550] sm:$0xff] 0
        %s2552 = scalar_lea.vmem [#allocation3], 8
        %vm2553 = vcmask 1040384
        %vm2554 = vmand %vm2553, %vm526
        %v2555 = vld [vmem:[%s2552] sm:$0x1]
        %v2556 = vsel %vm2554, 0, %v2555
        %2557 = vst [vmem:[%s2552] sm:$0x1] %v2556
        %v2558 = vld [vmem:[%s2552 + $0x8] sm:$0x1]
        %v2559 = vsel %vm2554, 0, %v2558
        %2560 = vst [vmem:[%s2552 + $0x8] sm:$0x1] %v2559
        %v2561 = vld [vmem:[%s2552 + $0x10] sm:$0x1]
        %v2562 = vsel %vm2554, 0, %v2561
        %2563 = vst [vmem:[%s2552 + $0x10] sm:$0x1] %v2562
        %v2564 = vld [vmem:[%s2552 + $0x18] sm:$0x1]
        %v2565 = vsel %vm2554, 0, %v2564
        %2566 = vst [vmem:[%s2552 + $0x18] sm:$0x1] %v2565
        %v2567 = vld [vmem:[%s2552 + $0x20] sm:$0x1]
        %v2568 = vsel %vm2554, 0, %v2567
        %2569 = vst [vmem:[%s2552 + $0x20] sm:$0x1] %v2568
        %v2570 = vld [vmem:[%s2552 + $0x28] sm:$0x1]
        %v2571 = vsel %vm2554, 0, %v2570
        %2572 = vst [vmem:[%s2552 + $0x28] sm:$0x1] %v2571
        %v2573 = vld [vmem:[%s2552 + $0x30] sm:$0x1]
        %v2574 = vsel %vm2554, 0, %v2573
        %2575 = vst [vmem:[%s2552 + $0x30] sm:$0x1] %v2574
        %v2576 = vld [vmem:[%s2552 + $0x38] sm:$0x1]
        %v2577 = vsel %vm2554, 0, %v2576
        %2578 = vst [vmem:[%s2552 + $0x38] sm:$0x1] %v2577
        %vm2579 = vcmask 1044484
        %vm2580 = vmand %vm2579, %vm553
        %v2581 = vld [vmem:[%s2552] sm:$0x10]
        %v2582 = vsel %vm2580, 0, %v2581
        %2583 = vst [vmem:[%s2552] sm:$0x10] %v2582
        %v2584 = vld [vmem:[%s2552 + $0x8] sm:$0x10]
        %v2585 = vsel %vm2580, 0, %v2584
        %2586 = vst [vmem:[%s2552 + $0x8] sm:$0x10] %v2585
        %v2587 = vld [vmem:[%s2552 + $0x10] sm:$0x10]
        %v2588 = vsel %vm2580, 0, %v2587
        %2589 = vst [vmem:[%s2552 + $0x10] sm:$0x10] %v2588
        %v2590 = vld [vmem:[%s2552 + $0x18] sm:$0x10]
        %v2591 = vsel %vm2580, 0, %v2590
        %2592 = vst [vmem:[%s2552 + $0x18] sm:$0x10] %v2591
        %v2593 = vld [vmem:[%s2552 + $0x20] sm:$0x10]
        %v2594 = vsel %vm2580, 0, %v2593
        %2595 = vst [vmem:[%s2552 + $0x20] sm:$0x10] %v2594
        %v2596 = vld [vmem:[%s2552 + $0x28] sm:$0x10]
        %v2597 = vsel %vm2580, 0, %v2596
        %2598 = vst [vmem:[%s2552 + $0x28] sm:$0x10] %v2597
        %v2599 = vld [vmem:[%s2552 + $0x30] sm:$0x10]
        %v2600 = vsel %vm2580, 0, %v2599
        %2601 = vst [vmem:[%s2552 + $0x30] sm:$0x10] %v2600
        %v2602 = vld [vmem:[%s2552 + $0x38] sm:$0x10]
        %v2603 = vsel %vm2580, 0, %v2602
        %2604 = vst [vmem:[%s2552 + $0x38] sm:$0x10] %v2603
        %v2605 = vpack.c.bf16 %v2541, %v2541
        %v2606 = vpack.c.bf16 %v2542, %v2542
        %v2607 = vpack.c.bf16 %v2543, %v2543
        %v2608 = vpack.c.bf16 %v2544, %v2544
        %v2609 = vpack.c.bf16 %v2545, %v2545
        %v2610 = vpack.c.bf16 %v2546, %v2546
        %v2611 = vpack.c.bf16 %v2547, %v2547
        %v2612 = vpack.c.bf16 %v2548, %v2548
        %v2614 = vshrl.u32 %v2605, 16
        %v2616 = vrot.slane %v2614, 7
        %v2617 = vshll.u32 %v2605, 16
        %v2619 = vor.u32 %v2616, %v2617
        %v2621 = vshrl.u32 %v2606, 16
        %v2623 = vrot.slane %v2621, 7
        %v2624 = vshll.u32 %v2606, 16
        %v2626 = vor.u32 %v2623, %v2624
        %v2628 = vshrl.u32 %v2607, 16
        %v2630 = vrot.slane %v2628, 7
        %v2631 = vshll.u32 %v2607, 16
        %v2633 = vor.u32 %v2630, %v2631
        %v2635 = vshrl.u32 %v2608, 16
        %v2637 = vrot.slane %v2635, 7
        %v2638 = vshll.u32 %v2608, 16
        %v2640 = vor.u32 %v2637, %v2638
        %v2642 = vshrl.u32 %v2609, 16
        %v2644 = vrot.slane %v2642, 7
        %v2645 = vshll.u32 %v2609, 16
        %v2647 = vor.u32 %v2644, %v2645
        %v2649 = vshrl.u32 %v2610, 16
        %v2651 = vrot.slane %v2649, 7
        %v2652 = vshll.u32 %v2610, 16
        %v2654 = vor.u32 %v2651, %v2652
        %v2656 = vshrl.u32 %v2611, 16
        %v2658 = vrot.slane %v2656, 7
        %v2659 = vshll.u32 %v2611, 16
        %v2661 = vor.u32 %v2658, %v2659
        %v2663 = vshrl.u32 %v2612, 16
        %v2665 = vrot.slane %v2663, 7
        %v2666 = vshll.u32 %v2612, 16
        %v2668 = vor.u32 %v2665, %v2666
        %vm2677 = vcmask 1044480
        %vm2678 = vmand %vm2677, %vm652
        %v2679 = vld [vmem:[%s2552] sm:$0x1f]
        %v2680 = vsel %vm2678, %v2619, %v2679
        %2681 = vst [vmem:[%s2552] sm:$0x1f] %v2680
        %v2682 = vld [vmem:[%s2552 + $0x8] sm:$0x1f]
        %v2683 = vsel %vm2678, %v2626, %v2682
        %2684 = vst [vmem:[%s2552 + $0x8] sm:$0x1f] %v2683
        %v2685 = vld [vmem:[%s2552 + $0x10] sm:$0x1f]
        %v2686 = vsel %vm2678, %v2633, %v2685
        %2687 = vst [vmem:[%s2552 + $0x10] sm:$0x1f] %v2686
        %v2688 = vld [vmem:[%s2552 + $0x18] sm:$0x1f]
        %v2689 = vsel %vm2678, %v2640, %v2688
        %2690 = vst [vmem:[%s2552 + $0x18] sm:$0x1f] %v2689
        %v2691 = vld [vmem:[%s2552 + $0x20] sm:$0x1f]
        %v2692 = vsel %vm2678, %v2647, %v2691
        %2693 = vst [vmem:[%s2552 + $0x20] sm:$0x1f] %v2692
        %v2694 = vld [vmem:[%s2552 + $0x28] sm:$0x1f]
        %v2695 = vsel %vm2678, %v2654, %v2694
        %2696 = vst [vmem:[%s2552 + $0x28] sm:$0x1f] %v2695
        %v2697 = vld [vmem:[%s2552 + $0x30] sm:$0x1f]
        %v2698 = vsel %vm2678, %v2661, %v2697
        %2699 = vst [vmem:[%s2552 + $0x30] sm:$0x1f] %v2698
        %v2700 = vld [vmem:[%s2552 + $0x38] sm:$0x1f]
        %v2701 = vsel %vm2678, %v2668, %v2700
        %2702 = vst [vmem:[%s2552 + $0x38] sm:$0x1f] %v2701
        %v2703 = vld [vmem:[#allocation3] sm:$0xf]
        %v2704 = vld [vmem:[#allocation3 + $0x8] sm:$0xf]
        %v2705 = vld [vmem:[#allocation3 + $0x10] sm:$0xf]
        %v2706 = vld [vmem:[#allocation3 + $0x18] sm:$0xf]
        %v2707 = vld [vmem:[#allocation3 + $0x20] sm:$0xf]
        %v2708 = vld [vmem:[#allocation3 + $0x28] sm:$0xf]
        %v2709 = vld [vmem:[#allocation3 + $0x30] sm:$0xf]
        %v2710 = vld [vmem:[#allocation3 + $0x38] sm:$0xf]
        %v2719 = vunpack.c.l.b16 %v2703
        %v2720 = vunpack.c.l.b16 %v2704
        %v2721 = vunpack.c.l.b16 %v2705
        %v2722 = vunpack.c.l.b16 %v2706
        %v2723 = vunpack.c.l.b16 %v2707
        %v2724 = vunpack.c.l.b16 %v2708
        %v2725 = vunpack.c.l.b16 %v2709
        %v2726 = vunpack.c.l.b16 %v2710
        %v2727 = vpack.c.b16 %v2720, %v2719
        %v2728 = vpack.c.b16 %v2722, %v2721
        %v2729 = vpack.c.b16 %v2724, %v2723
        %v2730 = vpack.c.b16 %v2726, %v2725
        %2735 = vst [vmem:[#allocation4] sm:$0xff] %v2727
        %2736 = vst [vmem:[#allocation4 + $0x48] sm:$0xff] %v2728
        %2737 = vst [vmem:[#allocation4 + $0x90] sm:$0xff] %v2729
        %2738 = vst [vmem:[#allocation4 + $0xd8] sm:$0xff] %v2730
        %v2739 = vld [vmem:[#allocation3] sm:$0x1f]
        %v2740 = vld [vmem:[#allocation3 + $0x8] sm:$0x1f]
        %v2741 = vld [vmem:[#allocation3 + $0x10] sm:$0x1f]
        %v2742 = vld [vmem:[#allocation3 + $0x18] sm:$0x1f]
        %v2743 = vld [vmem:[#allocation3 + $0x20] sm:$0x1f]
        %v2744 = vld [vmem:[#allocation3 + $0x28] sm:$0x1f]
        %v2745 = vld [vmem:[#allocation3 + $0x30] sm:$0x1f]
        %v2746 = vld [vmem:[#allocation3 + $0x38] sm:$0x1f]
        %v2755 = vunpack.c.l.b16 %v2739
        %v2756 = vunpack.c.h.b16 %v2739
        %v2757 = vunpack.c.l.b16 %v2740
        %v2758 = vunpack.c.h.b16 %v2740
        %v2759 = vunpack.c.l.b16 %v2741
        %v2760 = vunpack.c.h.b16 %v2741
        %v2761 = vunpack.c.l.b16 %v2742
        %v2762 = vunpack.c.h.b16 %v2742
        %v2763 = vunpack.c.l.b16 %v2743
        %v2764 = vunpack.c.h.b16 %v2743
        %v2765 = vunpack.c.l.b16 %v2744
        %v2766 = vunpack.c.h.b16 %v2744
        %v2767 = vunpack.c.l.b16 %v2745
        %v2768 = vunpack.c.h.b16 %v2745
        %v2769 = vunpack.c.l.b16 %v2746
        %v2770 = vunpack.c.h.b16 %v2746
        %v2771 = vpack.c.b16 %v2755, %v2755
        %v2772 = vpack.c.b16 %v2756, %v2756
        %v2773 = vpack.c.b16 %v2757, %v2757
        %v2774 = vpack.c.b16 %v2758, %v2758
        %v2775 = vpack.c.b16 %v2759, %v2759
        %v2776 = vpack.c.b16 %v2760, %v2760
        %v2777 = vpack.c.b16 %v2761, %v2761
        %v2778 = vpack.c.b16 %v2762, %v2762
        %v2779 = vpack.c.b16 %v2763, %v2763
        %v2780 = vpack.c.b16 %v2764, %v2764
        %v2781 = vpack.c.b16 %v2765, %v2765
        %v2782 = vpack.c.b16 %v2766, %v2766
        %v2783 = vpack.c.b16 %v2767, %v2767
        %v2784 = vpack.c.b16 %v2768, %v2768
        %v2785 = vpack.c.b16 %v2769, %v2769
        %v2786 = vpack.c.b16 %v2770, %v2770
        %v2788 = vshrl.u32 %v2771, 16
        %v2790 = vrot.slane %v2788, 4
        %v2791 = vshll.u32 %v2771, 16
        %v2793 = vrot.slane %v2791, 5
        %v2794 = vor.u32 %v2790, %v2793
        %v2795 = vrot.slane %v2794, 4
        %v2797 = vshll.u32 %v2772, 16
        %v2799 = vrot.slane %v2797, 5
        %v2800 = vsel %vm740, %v2795, %v2799
        %v2802 = vshrl.u32 %v2773, 16
        %v2804 = vrot.slane %v2802, 4
        %v2805 = vshll.u32 %v2773, 16
        %v2807 = vrot.slane %v2805, 5
        %v2808 = vor.u32 %v2804, %v2807
        %v2809 = vrot.slane %v2808, 4
        %v2811 = vshll.u32 %v2774, 16
        %v2813 = vrot.slane %v2811, 5
        %v2814 = vsel %vm740, %v2809, %v2813
        %v2816 = vshrl.u32 %v2775, 16
        %v2818 = vrot.slane %v2816, 4
        %v2819 = vshll.u32 %v2775, 16
        %v2821 = vrot.slane %v2819, 5
        %v2822 = vor.u32 %v2818, %v2821
        %v2823 = vrot.slane %v2822, 4
        %v2825 = vshll.u32 %v2776, 16
        %v2827 = vrot.slane %v2825, 5
        %v2828 = vsel %vm740, %v2823, %v2827
        %v2830 = vshrl.u32 %v2777, 16
        %v2832 = vrot.slane %v2830, 4
        %v2833 = vshll.u32 %v2777, 16
        %v2835 = vrot.slane %v2833, 5
        %v2836 = vor.u32 %v2832, %v2835
        %v2837 = vrot.slane %v2836, 4
        %v2839 = vshll.u32 %v2778, 16
        %v2841 = vrot.slane %v2839, 5
        %v2842 = vsel %vm740, %v2837, %v2841
        %v2844 = vshrl.u32 %v2779, 16
        %v2846 = vrot.slane %v2844, 4
        %v2847 = vshll.u32 %v2779, 16
        %v2849 = vrot.slane %v2847, 5
        %v2850 = vor.u32 %v2846, %v2849
        %v2851 = vrot.slane %v2850, 4
        %v2853 = vshll.u32 %v2780, 16
        %v2855 = vrot.slane %v2853, 5
        %v2856 = vsel %vm740, %v2851, %v2855
        %v2858 = vshrl.u32 %v2781, 16
        %v2860 = vrot.slane %v2858, 4
        %v2861 = vshll.u32 %v2781, 16
        %v2863 = vrot.slane %v2861, 5
        %v2864 = vor.u32 %v2860, %v2863
        %v2865 = vrot.slane %v2864, 4
        %v2867 = vshll.u32 %v2782, 16
        %v2869 = vrot.slane %v2867, 5
        %v2870 = vsel %vm740, %v2865, %v2869
        %v2872 = vshrl.u32 %v2783, 16
        %v2874 = vrot.slane %v2872, 4
        %v2875 = vshll.u32 %v2783, 16
        %v2877 = vrot.slane %v2875, 5
        %v2878 = vor.u32 %v2874, %v2877
        %v2879 = vrot.slane %v2878, 4
        %v2881 = vshll.u32 %v2784, 16
        %v2883 = vrot.slane %v2881, 5
        %v2884 = vsel %vm740, %v2879, %v2883
        %v2886 = vshrl.u32 %v2785, 16
        %v2888 = vrot.slane %v2886, 4
        %v2889 = vshll.u32 %v2785, 16
        %v2891 = vrot.slane %v2889, 5
        %v2892 = vor.u32 %v2888, %v2891
        %v2893 = vrot.slane %v2892, 4
        %v2895 = vshll.u32 %v2786, 16
        %v2897 = vrot.slane %v2895, 5
        %v2898 = vsel %vm740, %v2893, %v2897
        %v2899 = vunpack.c.l.b16 %v2800
        %v2900 = vunpack.c.l.b16 %v2814
        %v2901 = vunpack.c.l.b16 %v2828
        %v2902 = vunpack.c.l.b16 %v2842
        %v2903 = vunpack.c.l.b16 %v2856
        %v2904 = vunpack.c.l.b16 %v2870
        %v2905 = vunpack.c.l.b16 %v2884
        %v2906 = vunpack.c.l.b16 %v2898
        %v2907 = vpack.c.b16 %v2900, %v2899
        %v2908 = vpack.c.b16 %v2902, %v2901
        %v2909 = vpack.c.b16 %v2904, %v2903
        %v2910 = vpack.c.b16 %v2906, %v2905
        %2915 = vst [vmem:[#allocation4 + $0x8] sm:$0xff] %v2907
        %2916 = vst [vmem:[#allocation4 + $0x50] sm:$0xff] %v2908
        %2917 = vst [vmem:[#allocation4 + $0x98] sm:$0xff] %v2909
        %2918 = vst [vmem:[#allocation4 + $0xe0] sm:$0xff] %v2910
        %v2919 = vld [vmem:[#allocation3] sm:$0x1e]
        %v2920 = vld [vmem:[#allocation3 + $0x8] sm:$0x1e]
        %v2921 = vld [vmem:[#allocation3 + $0x10] sm:$0x1e]
        %v2922 = vld [vmem:[#allocation3 + $0x18] sm:$0x1e]
        %v2923 = vld [vmem:[#allocation3 + $0x20] sm:$0x1e]
        %v2924 = vld [vmem:[#allocation3 + $0x28] sm:$0x1e]
        %v2925 = vld [vmem:[#allocation3 + $0x30] sm:$0x1e]
        %v2926 = vld [vmem:[#allocation3 + $0x38] sm:$0x1e]
        %v2935 = vunpack.c.l.b16 %v2919
        %v2936 = vunpack.c.h.b16 %v2919
        %v2937 = vunpack.c.l.b16 %v2920
        %v2938 = vunpack.c.h.b16 %v2920
        %v2939 = vunpack.c.l.b16 %v2921
        %v2940 = vunpack.c.h.b16 %v2921
        %v2941 = vunpack.c.l.b16 %v2922
        %v2942 = vunpack.c.h.b16 %v2922
        %v2943 = vunpack.c.l.b16 %v2923
        %v2944 = vunpack.c.h.b16 %v2923
        %v2945 = vunpack.c.l.b16 %v2924
        %v2946 = vunpack.c.h.b16 %v2924
        %v2947 = vunpack.c.l.b16 %v2925
        %v2948 = vunpack.c.h.b16 %v2925
        %v2949 = vunpack.c.l.b16 %v2926
        %v2950 = vunpack.c.h.b16 %v2926
        %v2951 = vpack.c.b16 %v2935, %v2935
        %v2952 = vpack.c.b16 %v2936, %v2936
        %v2953 = vpack.c.b16 %v2937, %v2937
        %v2954 = vpack.c.b16 %v2938, %v2938
        %v2955 = vpack.c.b16 %v2939, %v2939
        %v2956 = vpack.c.b16 %v2940, %v2940
        %v2957 = vpack.c.b16 %v2941, %v2941
        %v2958 = vpack.c.b16 %v2942, %v2942
        %v2959 = vpack.c.b16 %v2943, %v2943
        %v2960 = vpack.c.b16 %v2944, %v2944
        %v2961 = vpack.c.b16 %v2945, %v2945
        %v2962 = vpack.c.b16 %v2946, %v2946
        %v2963 = vpack.c.b16 %v2947, %v2947
        %v2964 = vpack.c.b16 %v2948, %v2948
        %v2965 = vpack.c.b16 %v2949, %v2949
        %v2966 = vpack.c.b16 %v2950, %v2950
        %v2967 = vrot.slane %v2951, 5
        %v2968 = vrot.slane %v2967, 4
        %v2969 = vrot.slane %v2952, 5
        %v2970 = vsel %vm1118, %v2968, %v2969
        %v2971 = vrot.slane %v2953, 5
        %v2972 = vrot.slane %v2971, 4
        %v2973 = vrot.slane %v2954, 5
        %v2974 = vsel %vm1118, %v2972, %v2973
        %v2975 = vrot.slane %v2955, 5
        %v2976 = vrot.slane %v2975, 4
        %v2977 = vrot.slane %v2956, 5
        %v2978 = vsel %vm1118, %v2976, %v2977
        %v2979 = vrot.slane %v2957, 5
        %v2980 = vrot.slane %v2979, 4
        %v2981 = vrot.slane %v2958, 5
        %v2982 = vsel %vm1118, %v2980, %v2981
        %v2983 = vrot.slane %v2959, 5
        %v2984 = vrot.slane %v2983, 4
        %v2985 = vrot.slane %v2960, 5
        %v2986 = vsel %vm1118, %v2984, %v2985
        %v2987 = vrot.slane %v2961, 5
        %v2988 = vrot.slane %v2987, 4
        %v2989 = vrot.slane %v2962, 5
        %v2990 = vsel %vm1118, %v2988, %v2989
        %v2991 = vrot.slane %v2963, 5
        %v2992 = vrot.slane %v2991, 4
        %v2993 = vrot.slane %v2964, 5
        %v2994 = vsel %vm1118, %v2992, %v2993
        %v2995 = vrot.slane %v2965, 5
        %v2996 = vrot.slane %v2995, 4
        %v2997 = vrot.slane %v2966, 5
        %v2998 = vsel %vm1118, %v2996, %v2997
        %v2999 = vunpack.c.l.b16 %v2970
        %v3000 = vunpack.c.l.b16 %v2974
        %v3001 = vunpack.c.l.b16 %v2978
        %v3002 = vunpack.c.l.b16 %v2982
        %v3003 = vunpack.c.l.b16 %v2986
        %v3004 = vunpack.c.l.b16 %v2990
        %v3005 = vunpack.c.l.b16 %v2994
        %v3006 = vunpack.c.l.b16 %v2998
        %v3007 = vpack.c.b16 %v3000, %v2999
        %v3008 = vpack.c.b16 %v3002, %v3001
        %v3009 = vpack.c.b16 %v3004, %v3003
        %v3010 = vpack.c.b16 %v3006, %v3005
        %3015 = vst [vmem:[#allocation4 + $0x10] sm:$0xff] %v3007
        %3016 = vst [vmem:[#allocation4 + $0x58] sm:$0xff] %v3008
        %3017 = vst [vmem:[#allocation4 + $0xa0] sm:$0xff] %v3009
        %3018 = vst [vmem:[#allocation4 + $0xe8] sm:$0xff] %v3010
        %v3019 = vld [vmem:[%s2552] sm:$0xf]
        %v3020 = vld [vmem:[%s2552 + $0x8] sm:$0xf]
        %v3021 = vld [vmem:[%s2552 + $0x10] sm:$0xf]
        %v3022 = vld [vmem:[%s2552 + $0x18] sm:$0xf]
        %v3023 = vld [vmem:[%s2552 + $0x20] sm:$0xf]
        %v3024 = vld [vmem:[%s2552 + $0x28] sm:$0xf]
        %v3025 = vld [vmem:[%s2552 + $0x30] sm:$0xf]
        %v3026 = vld [vmem:[%s2552 + $0x38] sm:$0xf]
        %v3035 = vunpack.c.l.b16 %v3019
        %v3036 = vunpack.c.l.b16 %v3020
        %v3037 = vunpack.c.l.b16 %v3021
        %v3038 = vunpack.c.l.b16 %v3022
        %v3039 = vunpack.c.l.b16 %v3023
        %v3040 = vunpack.c.l.b16 %v3024
        %v3041 = vunpack.c.l.b16 %v3025
        %v3042 = vunpack.c.l.b16 %v3026
        %v3043 = vpack.c.b16 %v3036, %v3035
        %v3044 = vpack.c.b16 %v3038, %v3037
        %v3045 = vpack.c.b16 %v3040, %v3039
        %v3046 = vpack.c.b16 %v3042, %v3041
        %3051 = vst [vmem:[#allocation4 + $0x18] sm:$0xff] %v3043
        %3052 = vst [vmem:[#allocation4 + $0x60] sm:$0xff] %v3044
        %3053 = vst [vmem:[#allocation4 + $0xa8] sm:$0xff] %v3045
        %3054 = vst [vmem:[#allocation4 + $0xf0] sm:$0xff] %v3046
        %v3055 = vld [vmem:[%s2552] sm:$0x1f]
        %v3056 = vld [vmem:[%s2552 + $0x8] sm:$0x1f]
        %v3057 = vld [vmem:[%s2552 + $0x10] sm:$0x1f]
        %v3058 = vld [vmem:[%s2552 + $0x18] sm:$0x1f]
        %v3059 = vld [vmem:[%s2552 + $0x20] sm:$0x1f]
        %v3060 = vld [vmem:[%s2552 + $0x28] sm:$0x1f]
        %v3061 = vld [vmem:[%s2552 + $0x30] sm:$0x1f]
        %v3062 = vld [vmem:[%s2552 + $0x38] sm:$0x1f]
        %v3071 = vunpack.c.l.b16 %v3055
        %v3072 = vunpack.c.h.b16 %v3055
        %v3073 = vunpack.c.l.b16 %v3056
        %v3074 = vunpack.c.h.b16 %v3056
        %v3075 = vunpack.c.l.b16 %v3057
        %v3076 = vunpack.c.h.b16 %v3057
        %v3077 = vunpack.c.l.b16 %v3058
        %v3078 = vunpack.c.h.b16 %v3058
        %v3079 = vunpack.c.l.b16 %v3059
        %v3080 = vunpack.c.h.b16 %v3059
        %v3081 = vunpack.c.l.b16 %v3060
        %v3082 = vunpack.c.h.b16 %v3060
        %v3083 = vunpack.c.l.b16 %v3061
        %v3084 = vunpack.c.h.b16 %v3061
        %v3085 = vunpack.c.l.b16 %v3062
        %v3086 = vunpack.c.h.b16 %v3062
        %v3087 = vpack.c.b16 %v3071, %v3071
        %v3088 = vpack.c.b16 %v3072, %v3072
        %v3089 = vpack.c.b16 %v3073, %v3073
        %v3090 = vpack.c.b16 %v3074, %v3074
        %v3091 = vpack.c.b16 %v3075, %v3075
        %v3092 = vpack.c.b16 %v3076, %v3076
        %v3093 = vpack.c.b16 %v3077, %v3077
        %v3094 = vpack.c.b16 %v3078, %v3078
        %v3095 = vpack.c.b16 %v3079, %v3079
        %v3096 = vpack.c.b16 %v3080, %v3080
        %v3097 = vpack.c.b16 %v3081, %v3081
        %v3098 = vpack.c.b16 %v3082, %v3082
        %v3099 = vpack.c.b16 %v3083, %v3083
        %v3100 = vpack.c.b16 %v3084, %v3084
        %v3101 = vpack.c.b16 %v3085, %v3085
        %v3102 = vpack.c.b16 %v3086, %v3086
        %v3104 = vshrl.u32 %v3087, 16
        %v3106 = vrot.slane %v3104, 4
        %v3107 = vshll.u32 %v3087, 16
        %v3109 = vrot.slane %v3107, 5
        %v3110 = vor.u32 %v3106, %v3109
        %v3111 = vrot.slane %v3110, 4
        %v3113 = vshll.u32 %v3088, 16
        %v3115 = vrot.slane %v3113, 5
        %v3116 = vsel %vm740, %v3111, %v3115
        %v3118 = vshrl.u32 %v3089, 16
        %v3120 = vrot.slane %v3118, 4
        %v3121 = vshll.u32 %v3089, 16
        %v3123 = vrot.slane %v3121, 5
        %v3124 = vor.u32 %v3120, %v3123
        %v3125 = vrot.slane %v3124, 4
        %v3127 = vshll.u32 %v3090, 16
        %v3129 = vrot.slane %v3127, 5
        %v3130 = vsel %vm740, %v3125, %v3129
        %v3132 = vshrl.u32 %v3091, 16
        %v3134 = vrot.slane %v3132, 4
        %v3135 = vshll.u32 %v3091, 16
        %v3137 = vrot.slane %v3135, 5
        %v3138 = vor.u32 %v3134, %v3137
        %v3139 = vrot.slane %v3138, 4
        %v3141 = vshll.u32 %v3092, 16
        %v3143 = vrot.slane %v3141, 5
        %v3144 = vsel %vm740, %v3139, %v3143
        %v3146 = vshrl.u32 %v3093, 16
        %v3148 = vrot.slane %v3146, 4
        %v3149 = vshll.u32 %v3093, 16
        %v3151 = vrot.slane %v3149, 5
        %v3152 = vor.u32 %v3148, %v3151
        %v3153 = vrot.slane %v3152, 4
        %v3155 = vshll.u32 %v3094, 16
        %v3157 = vrot.slane %v3155, 5
        %v3158 = vsel %vm740, %v3153, %v3157
        %v3160 = vshrl.u32 %v3095, 16
        %v3162 = vrot.slane %v3160, 4
        %v3163 = vshll.u32 %v3095, 16
        %v3165 = vrot.slane %v3163, 5
        %v3166 = vor.u32 %v3162, %v3165
        %v3167 = vrot.slane %v3166, 4
        %v3169 = vshll.u32 %v3096, 16
        %v3171 = vrot.slane %v3169, 5
        %v3172 = vsel %vm740, %v3167, %v3171
        %v3174 = vshrl.u32 %v3097, 16
        %v3176 = vrot.slane %v3174, 4
        %v3177 = vshll.u32 %v3097, 16
        %v3179 = vrot.slane %v3177, 5
        %v3180 = vor.u32 %v3176, %v3179
        %v3181 = vrot.slane %v3180, 4
        %v3183 = vshll.u32 %v3098, 16
        %v3185 = vrot.slane %v3183, 5
        %v3186 = vsel %vm740, %v3181, %v3185
        %v3188 = vshrl.u32 %v3099, 16
        %v3190 = vrot.slane %v3188, 4
        %v3191 = vshll.u32 %v3099, 16
        %v3193 = vrot.slane %v3191, 5
        %v3194 = vor.u32 %v3190, %v3193
        %v3195 = vrot.slane %v3194, 4
        %v3197 = vshll.u32 %v3100, 16
        %v3199 = vrot.slane %v3197, 5
        %v3200 = vsel %vm740, %v3195, %v3199
        %v3202 = vshrl.u32 %v3101, 16
        %v3204 = vrot.slane %v3202, 4
        %v3205 = vshll.u32 %v3101, 16
        %v3207 = vrot.slane %v3205, 5
        %v3208 = vor.u32 %v3204, %v3207
        %v3209 = vrot.slane %v3208, 4
        %v3211 = vshll.u32 %v3102, 16
        %v3213 = vrot.slane %v3211, 5
        %v3214 = vsel %vm740, %v3209, %v3213
        %v3215 = vunpack.c.l.b16 %v3116
        %v3216 = vunpack.c.l.b16 %v3130
        %v3217 = vunpack.c.l.b16 %v3144
        %v3218 = vunpack.c.l.b16 %v3158
        %v3219 = vunpack.c.l.b16 %v3172
        %v3220 = vunpack.c.l.b16 %v3186
        %v3221 = vunpack.c.l.b16 %v3200
        %v3222 = vunpack.c.l.b16 %v3214
        %v3223 = vpack.c.b16 %v3216, %v3215
        %v3224 = vpack.c.b16 %v3218, %v3217
        %v3225 = vpack.c.b16 %v3220, %v3219
        %v3226 = vpack.c.b16 %v3222, %v3221
        %3231 = vst [vmem:[#allocation4 + $0x20] sm:$0xff] %v3223
        %3232 = vst [vmem:[#allocation4 + $0x68] sm:$0xff] %v3224
        %3233 = vst [vmem:[#allocation4 + $0xb0] sm:$0xff] %v3225
        %3234 = vst [vmem:[#allocation4 + $0xf8] sm:$0xff] %v3226
        %v3235 = vld [vmem:[%s2552] sm:$0x1e]
        %v3236 = vld [vmem:[%s2552 + $0x8] sm:$0x1e]
        %v3237 = vld [vmem:[%s2552 + $0x10] sm:$0x1e]
        %v3238 = vld [vmem:[%s2552 + $0x18] sm:$0x1e]
        %v3239 = vld [vmem:[%s2552 + $0x20] sm:$0x1e]
        %v3240 = vld [vmem:[%s2552 + $0x28] sm:$0x1e]
        %v3241 = vld [vmem:[%s2552 + $0x30] sm:$0x1e]
        %v3242 = vld [vmem:[%s2552 + $0x38] sm:$0x1e]
        %v3251 = vunpack.c.l.b16 %v3235
        %v3252 = vunpack.c.h.b16 %v3235
        %v3253 = vunpack.c.l.b16 %v3236
        %v3254 = vunpack.c.h.b16 %v3236
        %v3255 = vunpack.c.l.b16 %v3237
        %v3256 = vunpack.c.h.b16 %v3237
        %v3257 = vunpack.c.l.b16 %v3238
        %v3258 = vunpack.c.h.b16 %v3238
        %v3259 = vunpack.c.l.b16 %v3239
        %v3260 = vunpack.c.h.b16 %v3239
        %v3261 = vunpack.c.l.b16 %v3240
        %v3262 = vunpack.c.h.b16 %v3240
        %v3263 = vunpack.c.l.b16 %v3241
        %v3264 = vunpack.c.h.b16 %v3241
        %v3265 = vunpack.c.l.b16 %v3242
        %v3266 = vunpack.c.h.b16 %v3242
        %v3267 = vpack.c.b16 %v3251, %v3251
        %v3268 = vpack.c.b16 %v3252, %v3252
        %v3269 = vpack.c.b16 %v3253, %v3253
        %v3270 = vpack.c.b16 %v3254, %v3254
        %v3271 = vpack.c.b16 %v3255, %v3255
        %v3272 = vpack.c.b16 %v3256, %v3256
        %v3273 = vpack.c.b16 %v3257, %v3257
        %v3274 = vpack.c.b16 %v3258, %v3258
        %v3275 = vpack.c.b16 %v3259, %v3259
        %v3276 = vpack.c.b16 %v3260, %v3260
        %v3277 = vpack.c.b16 %v3261, %v3261
        %v3278 = vpack.c.b16 %v3262, %v3262
        %v3279 = vpack.c.b16 %v3263, %v3263
        %v3280 = vpack.c.b16 %v3264, %v3264
        %v3281 = vpack.c.b16 %v3265, %v3265
        %v3282 = vpack.c.b16 %v3266, %v3266
        %v3283 = vrot.slane %v3267, 5
        %v3284 = vrot.slane %v3283, 4
        %v3285 = vrot.slane %v3268, 5
        %v3286 = vsel %vm1118, %v3284, %v3285
        %v3287 = vrot.slane %v3269, 5
        %v3288 = vrot.slane %v3287, 4
        %v3289 = vrot.slane %v3270, 5
        %v3290 = vsel %vm1118, %v3288, %v3289
        %v3291 = vrot.slane %v3271, 5
        %v3292 = vrot.slane %v3291, 4
        %v3293 = vrot.slane %v3272, 5
        %v3294 = vsel %vm1118, %v3292, %v3293
        %v3295 = vrot.slane %v3273, 5
        %v3296 = vrot.slane %v3295, 4
        %v3297 = vrot.slane %v3274, 5
        %v3298 = vsel %vm1118, %v3296, %v3297
        %v3299 = vrot.slane %v3275, 5
        %v3300 = vrot.slane %v3299, 4
        %v3301 = vrot.slane %v3276, 5
        %v3302 = vsel %vm1118, %v3300, %v3301
        %v3303 = vrot.slane %v3277, 5
        %v3304 = vrot.slane %v3303, 4
        %v3305 = vrot.slane %v3278, 5
        %v3306 = vsel %vm1118, %v3304, %v3305
        %v3307 = vrot.slane %v3279, 5
        %v3308 = vrot.slane %v3307, 4
        %v3309 = vrot.slane %v3280, 5
        %v3310 = vsel %vm1118, %v3308, %v3309
        %v3311 = vrot.slane %v3281, 5
        %v3312 = vrot.slane %v3311, 4
        %v3313 = vrot.slane %v3282, 5
        %v3314 = vsel %vm1118, %v3312, %v3313
        %v3315 = vunpack.c.l.b16 %v3286
        %v3316 = vunpack.c.l.b16 %v3290
        %v3317 = vunpack.c.l.b16 %v3294
        %v3318 = vunpack.c.l.b16 %v3298
        %v3319 = vunpack.c.l.b16 %v3302
        %v3320 = vunpack.c.l.b16 %v3306
        %v3321 = vunpack.c.l.b16 %v3310
        %v3322 = vunpack.c.l.b16 %v3314
        %v3323 = vpack.c.b16 %v3316, %v3315
        %v3324 = vpack.c.b16 %v3318, %v3317
        %v3325 = vpack.c.b16 %v3320, %v3319
        %v3326 = vpack.c.b16 %v3322, %v3321
        %3331 = vst [vmem:[#allocation4 + $0x28] sm:$0xff] %v3323
        %3332 = vst [vmem:[#allocation4 + $0x70] sm:$0xff] %v3324
        %3333 = vst [vmem:[#allocation4 + $0xb8] sm:$0xff] %v3325
        %3334 = vst [vmem:[#allocation4 + $0x100] sm:$0xff] %v3326
        %s3335 = scalar_lea.vmem [#allocation3], 16
        %v3336 = vld [vmem:[%s3335] sm:$0xf]
        %v3337 = vld [vmem:[%s3335 + $0x8] sm:$0xf]
        %v3338 = vld [vmem:[%s3335 + $0x10] sm:$0xf]
        %v3339 = vld [vmem:[%s3335 + $0x18] sm:$0xf]
        %v3340 = vld [vmem:[%s3335 + $0x20] sm:$0xf]
        %v3341 = vld [vmem:[%s3335 + $0x28] sm:$0xf]
        %v3342 = vld [vmem:[%s3335 + $0x30] sm:$0xf]
        %v3343 = vld [vmem:[%s3335 + $0x38] sm:$0xf]
        %v3352 = vunpack.c.l.b16 %v3336
        %v3353 = vunpack.c.l.b16 %v3337
        %v3354 = vunpack.c.l.b16 %v3338
        %v3355 = vunpack.c.l.b16 %v3339
        %v3356 = vunpack.c.l.b16 %v3340
        %v3357 = vunpack.c.l.b16 %v3341
        %v3358 = vunpack.c.l.b16 %v3342
        %v3359 = vunpack.c.l.b16 %v3343
        %v3360 = vpack.c.b16 %v3353, %v3352
        %v3361 = vpack.c.b16 %v3355, %v3354
        %v3362 = vpack.c.b16 %v3357, %v3356
        %v3363 = vpack.c.b16 %v3359, %v3358
        %3368 = vst [vmem:[#allocation4 + $0x30] sm:$0xff] %v3360
        %3369 = vst [vmem:[#allocation4 + $0x78] sm:$0xff] %v3361
        %3370 = vst [vmem:[#allocation4 + $0xc0] sm:$0xff] %v3362
        %3371 = vst [vmem:[#allocation4 + $0x108] sm:$0xff] %v3363
        %v3372 = vld [vmem:[%s3335] sm:$0x1f]
        %v3373 = vld [vmem:[%s3335 + $0x8] sm:$0x1f]
        %v3374 = vld [vmem:[%s3335 + $0x10] sm:$0x1f]
        %v3375 = vld [vmem:[%s3335 + $0x18] sm:$0x1f]
        %v3376 = vld [vmem:[%s3335 + $0x20] sm:$0x1f]
        %v3377 = vld [vmem:[%s3335 + $0x28] sm:$0x1f]
        %v3378 = vld [vmem:[%s3335 + $0x30] sm:$0x1f]
        %v3379 = vld [vmem:[%s3335 + $0x38] sm:$0x1f]
        %v3388 = vunpack.c.l.b16 %v3372
        %v3389 = vunpack.c.h.b16 %v3372
        %v3390 = vunpack.c.l.b16 %v3373
        %v3391 = vunpack.c.h.b16 %v3373
        %v3392 = vunpack.c.l.b16 %v3374
        %v3393 = vunpack.c.h.b16 %v3374
        %v3394 = vunpack.c.l.b16 %v3375
        %v3395 = vunpack.c.h.b16 %v3375
        %v3396 = vunpack.c.l.b16 %v3376
        %v3397 = vunpack.c.h.b16 %v3376
        %v3398 = vunpack.c.l.b16 %v3377
        %v3399 = vunpack.c.h.b16 %v3377
        %v3400 = vunpack.c.l.b16 %v3378
        %v3401 = vunpack.c.h.b16 %v3378
        %v3402 = vunpack.c.l.b16 %v3379
        %v3403 = vunpack.c.h.b16 %v3379
        %v3404 = vpack.c.b16 %v3388, %v3388
        %v3405 = vpack.c.b16 %v3389, %v3389
        %v3406 = vpack.c.b16 %v3390, %v3390
        %v3407 = vpack.c.b16 %v3391, %v3391
        %v3408 = vpack.c.b16 %v3392, %v3392
        %v3409 = vpack.c.b16 %v3393, %v3393
        %v3410 = vpack.c.b16 %v3394, %v3394
        %v3411 = vpack.c.b16 %v3395, %v3395
        %v3412 = vpack.c.b16 %v3396, %v3396
        %v3413 = vpack.c.b16 %v3397, %v3397
        %v3414 = vpack.c.b16 %v3398, %v3398
        %v3415 = vpack.c.b16 %v3399, %v3399
        %v3416 = vpack.c.b16 %v3400, %v3400
        %v3417 = vpack.c.b16 %v3401, %v3401
        %v3418 = vpack.c.b16 %v3402, %v3402
        %v3419 = vpack.c.b16 %v3403, %v3403
        %v3421 = vshrl.u32 %v3404, 16
        %v3423 = vrot.slane %v3421, 4
        %v3424 = vshll.u32 %v3404, 16
        %v3426 = vrot.slane %v3424, 5
        %v3427 = vor.u32 %v3423, %v3426
        %v3428 = vrot.slane %v3427, 4
        %v3430 = vshll.u32 %v3405, 16
        %v3432 = vrot.slane %v3430, 5
        %v3433 = vsel %vm740, %v3428, %v3432
        %v3435 = vshrl.u32 %v3406, 16
        %v3437 = vrot.slane %v3435, 4
        %v3438 = vshll.u32 %v3406, 16
        %v3440 = vrot.slane %v3438, 5
        %v3441 = vor.u32 %v3437, %v3440
        %v3442 = vrot.slane %v3441, 4
        %v3444 = vshll.u32 %v3407, 16
        %v3446 = vrot.slane %v3444, 5
        %v3447 = vsel %vm740, %v3442, %v3446
        %v3449 = vshrl.u32 %v3408, 16
        %v3451 = vrot.slane %v3449, 4
        %v3452 = vshll.u32 %v3408, 16
        %v3454 = vrot.slane %v3452, 5
        %v3455 = vor.u32 %v3451, %v3454
        %v3456 = vrot.slane %v3455, 4
        %v3458 = vshll.u32 %v3409, 16
        %v3460 = vrot.slane %v3458, 5
        %v3461 = vsel %vm740, %v3456, %v3460
        %v3463 = vshrl.u32 %v3410, 16
        %v3465 = vrot.slane %v3463, 4
        %v3466 = vshll.u32 %v3410, 16
        %v3468 = vrot.slane %v3466, 5
        %v3469 = vor.u32 %v3465, %v3468
        %v3470 = vrot.slane %v3469, 4
        %v3472 = vshll.u32 %v3411, 16
        %v3474 = vrot.slane %v3472, 5
        %v3475 = vsel %vm740, %v3470, %v3474
        %v3477 = vshrl.u32 %v3412, 16
        %v3479 = vrot.slane %v3477, 4
        %v3480 = vshll.u32 %v3412, 16
        %v3482 = vrot.slane %v3480, 5
        %v3483 = vor.u32 %v3479, %v3482
        %v3484 = vrot.slane %v3483, 4
        %v3486 = vshll.u32 %v3413, 16
        %v3488 = vrot.slane %v3486, 5
        %v3489 = vsel %vm740, %v3484, %v3488
        %v3491 = vshrl.u32 %v3414, 16
        %v3493 = vrot.slane %v3491, 4
        %v3494 = vshll.u32 %v3414, 16
        %v3496 = vrot.slane %v3494, 5
        %v3497 = vor.u32 %v3493, %v3496
        %v3498 = vrot.slane %v3497, 4
        %v3500 = vshll.u32 %v3415, 16
        %v3502 = vrot.slane %v3500, 5
        %v3503 = vsel %vm740, %v3498, %v3502
        %v3505 = vshrl.u32 %v3416, 16
        %v3507 = vrot.slane %v3505, 4
        %v3508 = vshll.u32 %v3416, 16
        %v3510 = vrot.slane %v3508, 5
        %v3511 = vor.u32 %v3507, %v3510
        %v3512 = vrot.slane %v3511, 4
        %v3514 = vshll.u32 %v3417, 16
        %v3516 = vrot.slane %v3514, 5
        %v3517 = vsel %vm740, %v3512, %v3516
        %v3519 = vshrl.u32 %v3418, 16
        %v3521 = vrot.slane %v3519, 4
        %v3522 = vshll.u32 %v3418, 16
        %v3524 = vrot.slane %v3522, 5
        %v3525 = vor.u32 %v3521, %v3524
        %v3526 = vrot.slane %v3525, 4
        %v3528 = vshll.u32 %v3419, 16
        %v3530 = vrot.slane %v3528, 5
        %v3531 = vsel %vm740, %v3526, %v3530
        %v3532 = vunpack.c.l.b16 %v3433
        %v3533 = vunpack.c.l.b16 %v3447
        %v3534 = vunpack.c.l.b16 %v3461
        %v3535 = vunpack.c.l.b16 %v3475
        %v3536 = vunpack.c.l.b16 %v3489
        %v3537 = vunpack.c.l.b16 %v3503
        %v3538 = vunpack.c.l.b16 %v3517
        %v3539 = vunpack.c.l.b16 %v3531
        %v3540 = vpack.c.b16 %v3533, %v3532
        %v3541 = vpack.c.b16 %v3535, %v3534
        %v3542 = vpack.c.b16 %v3537, %v3536
        %v3543 = vpack.c.b16 %v3539, %v3538
        %3548 = vst [vmem:[#allocation4 + $0x38] sm:$0xff] %v3540
        %3549 = vst [vmem:[#allocation4 + $0x80] sm:$0xff] %v3541
        %3550 = vst [vmem:[#allocation4 + $0xc8] sm:$0xff] %v3542
        %3551 = vst [vmem:[#allocation4 + $0x110] sm:$0xff] %v3543
        %v3552 = vld [vmem:[%s3335] sm:$0x1e]
        %v3553 = vld [vmem:[%s3335 + $0x8] sm:$0x1e]
        %v3554 = vld [vmem:[%s3335 + $0x10] sm:$0x1e]
        %v3555 = vld [vmem:[%s3335 + $0x18] sm:$0x1e]
        %v3556 = vld [vmem:[%s3335 + $0x20] sm:$0x1e]
        %v3557 = vld [vmem:[%s3335 + $0x28] sm:$0x1e]
        %v3558 = vld [vmem:[%s3335 + $0x30] sm:$0x1e]
        %v3559 = vld [vmem:[%s3335 + $0x38] sm:$0x1e]
        %v3568 = vunpack.c.l.b16 %v3552
        %v3569 = vunpack.c.h.b16 %v3552
        %v3570 = vunpack.c.l.b16 %v3553
        %v3571 = vunpack.c.h.b16 %v3553
        %v3572 = vunpack.c.l.b16 %v3554
        %v3573 = vunpack.c.h.b16 %v3554
        %v3574 = vunpack.c.l.b16 %v3555
        %v3575 = vunpack.c.h.b16 %v3555
        %v3576 = vunpack.c.l.b16 %v3556
        %v3577 = vunpack.c.h.b16 %v3556
        %v3578 = vunpack.c.l.b16 %v3557
        %v3579 = vunpack.c.h.b16 %v3557
        %v3580 = vunpack.c.l.b16 %v3558
        %v3581 = vunpack.c.h.b16 %v3558
        %v3582 = vunpack.c.l.b16 %v3559
        %v3583 = vunpack.c.h.b16 %v3559
        %v3584 = vpack.c.b16 %v3568, %v3568
        %v3585 = vpack.c.b16 %v3569, %v3569
        %v3586 = vpack.c.b16 %v3570, %v3570
        %v3587 = vpack.c.b16 %v3571, %v3571
        %v3588 = vpack.c.b16 %v3572, %v3572
        %v3589 = vpack.c.b16 %v3573, %v3573
        %v3590 = vpack.c.b16 %v3574, %v3574
        %v3591 = vpack.c.b16 %v3575, %v3575
        %v3592 = vpack.c.b16 %v3576, %v3576
        %v3593 = vpack.c.b16 %v3577, %v3577
        %v3594 = vpack.c.b16 %v3578, %v3578
        %v3595 = vpack.c.b16 %v3579, %v3579
        %v3596 = vpack.c.b16 %v3580, %v3580
        %v3597 = vpack.c.b16 %v3581, %v3581
        %v3598 = vpack.c.b16 %v3582, %v3582
        %v3599 = vpack.c.b16 %v3583, %v3583
        %v3600 = vrot.slane %v3584, 5
        %v3601 = vrot.slane %v3600, 4
        %v3602 = vrot.slane %v3585, 5
        %v3603 = vsel %vm1118, %v3601, %v3602
        %v3604 = vrot.slane %v3586, 5
        %v3605 = vrot.slane %v3604, 4
        %v3606 = vrot.slane %v3587, 5
        %v3607 = vsel %vm1118, %v3605, %v3606
        %v3608 = vrot.slane %v3588, 5
        %v3609 = vrot.slane %v3608, 4
        %v3610 = vrot.slane %v3589, 5
        %v3611 = vsel %vm1118, %v3609, %v3610
        %v3612 = vrot.slane %v3590, 5
        %v3613 = vrot.slane %v3612, 4
        %v3614 = vrot.slane %v3591, 5
        %v3615 = vsel %vm1118, %v3613, %v3614
        %v3616 = vrot.slane %v3592, 5
        %v3617 = vrot.slane %v3616, 4
        %v3618 = vrot.slane %v3593, 5
        %v3619 = vsel %vm1118, %v3617, %v3618
        %v3620 = vrot.slane %v3594, 5
        %v3621 = vrot.slane %v3620, 4
        %v3622 = vrot.slane %v3595, 5
        %v3623 = vsel %vm1118, %v3621, %v3622
        %v3624 = vrot.slane %v3596, 5
        %v3625 = vrot.slane %v3624, 4
        %v3626 = vrot.slane %v3597, 5
        %v3627 = vsel %vm1118, %v3625, %v3626
        %v3628 = vrot.slane %v3598, 5
        %v3629 = vrot.slane %v3628, 4
        %v3630 = vrot.slane %v3599, 5
        %v3631 = vsel %vm1118, %v3629, %v3630
        %v3632 = vunpack.c.l.b16 %v3603
        %v3633 = vunpack.c.l.b16 %v3607
        %v3634 = vunpack.c.l.b16 %v3611
        %v3635 = vunpack.c.l.b16 %v3615
        %v3636 = vunpack.c.l.b16 %v3619
        %v3637 = vunpack.c.l.b16 %v3623
        %v3638 = vunpack.c.l.b16 %v3627
        %v3639 = vunpack.c.l.b16 %v3631
        %v3640 = vpack.c.b16 %v3633, %v3632
        %v3641 = vpack.c.b16 %v3635, %v3634
        %v3642 = vpack.c.b16 %v3637, %v3636
        %v3643 = vpack.c.b16 %v3639, %v3638
        %3648 = vst [vmem:[#allocation4 + $0x40] sm:$0xff] %v3640
        %3649 = vst [vmem:[#allocation4 + $0x88] sm:$0xff] %v3641
        %3650 = vst [vmem:[#allocation4 + $0xd0] sm:$0xff] %v3642
        %3651 = vst [vmem:[#allocation4 + $0x118] sm:$0xff] %v3643
        %v3652 = vld [vmem:[#allocation4] sm:$0xff]
        %v3653 = vld [vmem:[#allocation4 + $0x8] sm:$0xff]
        %v3654 = vld [vmem:[#allocation4 + $0x10] sm:$0xff]
        %v3655 = vld [vmem:[#allocation4 + $0x18] sm:$0xff]
        %v3656 = vld [vmem:[#allocation4 + $0x20] sm:$0xff]
        %v3657 = vld [vmem:[#allocation4 + $0x28] sm:$0xff]
        %v3658 = vld [vmem:[#allocation4 + $0x30] sm:$0xff]
        %v3659 = vld [vmem:[#allocation4 + $0x38] sm:$0xff]
        %v3660 = vld [vmem:[#allocation4 + $0x40] sm:$0xff]
        %v3661 = vld [vmem:[#allocation4 + $0x48] sm:$0xff]
        %v3662 = vld [vmem:[#allocation4 + $0x50] sm:$0xff]
        %v3663 = vld [vmem:[#allocation4 + $0x58] sm:$0xff]
        %v3664 = vld [vmem:[#allocation4 + $0x60] sm:$0xff]
        %v3665 = vld [vmem:[#allocation4 + $0x68] sm:$0xff]
        %v3666 = vld [vmem:[#allocation4 + $0x70] sm:$0xff]
        %v3667 = vld [vmem:[#allocation4 + $0x78] sm:$0xff]
        %v3668 = vld [vmem:[#allocation4 + $0x80] sm:$0xff]
        %v3669 = vld [vmem:[#allocation4 + $0x88] sm:$0xff]
        %v3670 = vld [vmem:[#allocation4 + $0x90] sm:$0xff]
        %v3671 = vld [vmem:[#allocation4 + $0x98] sm:$0xff]
        %v3672 = vld [vmem:[#allocation4 + $0xa0] sm:$0xff]
        %v3673 = vld [vmem:[#allocation4 + $0xa8] sm:$0xff]
        %v3674 = vld [vmem:[#allocation4 + $0xb0] sm:$0xff]
        %v3675 = vld [vmem:[#allocation4 + $0xb8] sm:$0xff]
        %v3676 = vld [vmem:[#allocation4 + $0xc0] sm:$0xff]
        %v3677 = vld [vmem:[#allocation4 + $0xc8] sm:$0xff]
        %v3678 = vld [vmem:[#allocation4 + $0xd0] sm:$0xff]
        %v3679 = vld [vmem:[#allocation4 + $0xd8] sm:$0xff]
        %v3680 = vld [vmem:[#allocation4 + $0xe0] sm:$0xff]
        %v3681 = vld [vmem:[#allocation4 + $0xe8] sm:$0xff]
        %v3682 = vld [vmem:[#allocation4 + $0xf0] sm:$0xff]
        %v3683 = vld [vmem:[#allocation4 + $0xf8] sm:$0xff]
        %v3684 = vld [vmem:[#allocation4 + $0x100] sm:$0xff]
        %v3685 = vld [vmem:[#allocation4 + $0x108] sm:$0xff]
        %v3686 = vld [vmem:[#allocation4 + $0x110] sm:$0xff]
        %v3687 = vld [vmem:[#allocation4 + $0x118] sm:$0xff]
        %v3688 = vld [vmem:[#allocation14] sm:$0xf]
        %v3689 = vld [vmem:[#allocation14 + $0x4] sm:$0xf]
        %v3690 = vld [vmem:[#allocation14 + $0x8] sm:$0xf]
        %v3691 = vld [vmem:[#allocation14 + $0xc] sm:$0xf]
        %v3692 = vld [vmem:[#allocation14 + $0x10] sm:$0xf]
        %v3693 = vld [vmem:[#allocation14 + $0x14] sm:$0xf]
        %v3694 = vld [vmem:[#allocation14 + $0x18] sm:$0xf]
        %v3695 = vld [vmem:[#allocation14 + $0x1c] sm:$0xf]
        %v3696 = vld [vmem:[#allocation14 + $0x20] sm:$0xf]
        %v3697 = vld [vmem:[#allocation14 + $0x24] sm:$0xf]
        %v3698 = vld [vmem:[#allocation14 + $0x28] sm:$0xf]
        %v3699 = vld [vmem:[#allocation14 + $0x2c] sm:$0xf]
        %v3700 = vld [vmem:[#allocation14 + $0x30] sm:$0xf]
        %v3701 = vld [vmem:[#allocation14 + $0x34] sm:$0xf]
        %v3702 = vld [vmem:[#allocation14 + $0x38] sm:$0xf]
        %v3703 = vld [vmem:[#allocation14 + $0x3c] sm:$0xf]
        %v3704 = vld [vmem:[#allocation14 + $0x40] sm:$0xf]
        %v3705 = vld [vmem:[#allocation14 + $0x44] sm:$0xf]
        %v3706 = vld [vmem:[#allocation14 + $0x48] sm:$0xf]
        %v3707 = vld [vmem:[#allocation14 + $0x4c] sm:$0xf]
        %v3708 = vld [vmem:[#allocation14 + $0x50] sm:$0xf]
        %v3709 = vld [vmem:[#allocation14 + $0x54] sm:$0xf]
        %v3710 = vld [vmem:[#allocation14 + $0x58] sm:$0xf]
        %v3711 = vld [vmem:[#allocation14 + $0x5c] sm:$0xf]
        %v3712 = vld [vmem:[#allocation14 + $0x60] sm:$0xf]
        %v3713 = vld [vmem:[#allocation14 + $0x64] sm:$0xf]
        %v3714 = vld [vmem:[#allocation14 + $0x68] sm:$0xf]
        %v3715 = vld [vmem:[#allocation14 + $0x6c] sm:$0xf]
        %v3716 = vld [vmem:[#allocation14 + $0x70] sm:$0xf]
        %v3717 = vld [vmem:[#allocation14 + $0x74] sm:$0xf]
        %v3718 = vld [vmem:[#allocation14 + $0x78] sm:$0xf]
        %v3719 = vld [vmem:[#allocation14 + $0x7c] sm:$0xf]
        %v3720 = vld [vmem:[#allocation14 + $0x80] sm:$0xf]
        %v3721 = vld [vmem:[#allocation14 + $0x84] sm:$0xf]
        %v3722 = vld [vmem:[#allocation14 + $0x88] sm:$0xf]
        %v3723 = vld [vmem:[#allocation14 + $0x8c] sm:$0xf]
        %v3724 = vld [vmem:[#allocation14 + $0x90] sm:$0xf]
        %v3725 = vld [vmem:[#allocation14 + $0x94] sm:$0xf]
        %v3726 = vld [vmem:[#allocation14 + $0x98] sm:$0xf]
        %v3727 = vld [vmem:[#allocation14 + $0x9c] sm:$0xf]
        %v3728 = vld [vmem:[#allocation14 + $0xa0] sm:$0xf]
        %v3729 = vld [vmem:[#allocation14 + $0xa4] sm:$0xf]
        %v3730 = vld [vmem:[#allocation14 + $0xa8] sm:$0xf]
        %v3731 = vld [vmem:[#allocation14 + $0xac] sm:$0xf]
        %v3732 = vld [vmem:[#allocation14 + $0xb0] sm:$0xf]
        %v3733 = vld [vmem:[#allocation14 + $0xb4] sm:$0xf]
        %v3734 = vld [vmem:[#allocation14 + $0xb8] sm:$0xf]
        %v3735 = vld [vmem:[#allocation14 + $0xbc] sm:$0xf]
        %v3736 = vld [vmem:[#allocation14 + $0xc0] sm:$0xf]
        %v3737 = vld [vmem:[#allocation14 + $0xc4] sm:$0xf]
        %v3738 = vld [vmem:[#allocation14 + $0xc8] sm:$0xf]
        %v3739 = vld [vmem:[#allocation14 + $0xcc] sm:$0xf]
        %v3740 = vld [vmem:[#allocation14 + $0xd0] sm:$0xf]
        %v3741 = vld [vmem:[#allocation14 + $0xd4] sm:$0xf]
        %v3742 = vld [vmem:[#allocation14 + $0xd8] sm:$0xf]
        %v3743 = vld [vmem:[#allocation14 + $0xdc] sm:$0xf]
        %v3744 = vld [vmem:[#allocation14 + $0xe0] sm:$0xf]
        %v3745 = vld [vmem:[#allocation14 + $0xe4] sm:$0xf]
        %v3746 = vld [vmem:[#allocation14 + $0xe8] sm:$0xf]
        %v3747 = vld [vmem:[#allocation14 + $0xec] sm:$0xf]
        %v3748 = vld [vmem:[#allocation14 + $0xf0] sm:$0xf]
        %v3749 = vld [vmem:[#allocation14 + $0xf4] sm:$0xf]
        %v3750 = vld [vmem:[#allocation14 + $0xf8] sm:$0xf]
        %v3751 = vld [vmem:[#allocation14 + $0xfc] sm:$0xf]
        %v3752 = vld [vmem:[#allocation14 + $0x100] sm:$0xf]
        %v3753 = vld [vmem:[#allocation14 + $0x104] sm:$0xf]
        %v3754 = vld [vmem:[#allocation14 + $0x108] sm:$0xf]
        %v3755 = vld [vmem:[#allocation14 + $0x10c] sm:$0xf]
        %v3756 = vld [vmem:[#allocation14 + $0x110] sm:$0xf]
        %v3757 = vld [vmem:[#allocation14 + $0x114] sm:$0xf]
        %v3758 = vld [vmem:[#allocation14 + $0x118] sm:$0xf]
        %v3759 = vld [vmem:[#allocation14 + $0x11c] sm:$0xf]
        %v3760 = vld [vmem:[#allocation14 + $0x120] sm:$0xf]
        %v3761 = vld [vmem:[#allocation14 + $0x124] sm:$0xf]
        %v3762 = vld [vmem:[#allocation14 + $0x128] sm:$0xf]
        %v3763 = vld [vmem:[#allocation14 + $0x12c] sm:$0xf]
        %v3764 = vld [vmem:[#allocation14 + $0x130] sm:$0xf]
        %v3765 = vld [vmem:[#allocation14 + $0x134] sm:$0xf]
        %v3766 = vld [vmem:[#allocation14 + $0x138] sm:$0xf]
        %v3767 = vld [vmem:[#allocation14 + $0x13c] sm:$0xf]
        %v3768 = vld [vmem:[#allocation14 + $0x140] sm:$0xf]
        %v3769 = vld [vmem:[#allocation14 + $0x144] sm:$0xf]
        %v3770 = vld [vmem:[#allocation14 + $0x148] sm:$0xf]
        %v3771 = vld [vmem:[#allocation14 + $0x14c] sm:$0xf]
        %v3772 = vld [vmem:[#allocation14 + $0x150] sm:$0xf]
        %v3773 = vld [vmem:[#allocation14 + $0x154] sm:$0xf]
        %v3774 = vld [vmem:[#allocation14 + $0x158] sm:$0xf]
        %v3775 = vld [vmem:[#allocation14 + $0x15c] sm:$0xf]
        %v3776 = vld [vmem:[#allocation14 + $0x160] sm:$0xf]
        %v3777 = vld [vmem:[#allocation14 + $0x164] sm:$0xf]
        %v3778 = vld [vmem:[#allocation14 + $0x168] sm:$0xf]
        %v3779 = vld [vmem:[#allocation14 + $0x16c] sm:$0xf]
        %v3780 = vld [vmem:[#allocation14 + $0x170] sm:$0xf]
        %v3781 = vld [vmem:[#allocation14 + $0x174] sm:$0xf]
        %v3782 = vld [vmem:[#allocation14 + $0x178] sm:$0xf]
        %v3783 = vld [vmem:[#allocation14 + $0x17c] sm:$0xf]
        %v3784 = vld [vmem:[#allocation14 + $0x180] sm:$0xf]
        %v3785 = vld [vmem:[#allocation14 + $0x184] sm:$0xf]
        %v3786 = vld [vmem:[#allocation14 + $0x188] sm:$0xf]
        %v3787 = vld [vmem:[#allocation14 + $0x18c] sm:$0xf]
        %v3788 = vld [vmem:[#allocation14 + $0x190] sm:$0xf]
        %v3789 = vld [vmem:[#allocation14 + $0x194] sm:$0xf]
        %v3790 = vld [vmem:[#allocation14 + $0x198] sm:$0xf]
        %v3791 = vld [vmem:[#allocation14 + $0x19c] sm:$0xf]
        %v3792 = vld [vmem:[#allocation14 + $0x1a0] sm:$0xf]
        %v3793 = vld [vmem:[#allocation14 + $0x1a4] sm:$0xf]
        %v3794 = vld [vmem:[#allocation14 + $0x1a8] sm:$0xf]
        %v3795 = vld [vmem:[#allocation14 + $0x1ac] sm:$0xf]
        %v3796 = vld [vmem:[#allocation14 + $0x1b0] sm:$0xf]
        %v3797 = vld [vmem:[#allocation14 + $0x1b4] sm:$0xf]
        %v3798 = vld [vmem:[#allocation14 + $0x1b8] sm:$0xf]
        %v3799 = vld [vmem:[#allocation14 + $0x1bc] sm:$0xf]
        %v3800 = vld [vmem:[#allocation14 + $0x1c0] sm:$0xf]
        %v3801 = vld [vmem:[#allocation14 + $0x1c4] sm:$0xf]
        %v3802 = vld [vmem:[#allocation14 + $0x1c8] sm:$0xf]
        %v3803 = vld [vmem:[#allocation14 + $0x1cc] sm:$0xf]
        %v3804 = vld [vmem:[#allocation14 + $0x1d0] sm:$0xf]
        %v3805 = vld [vmem:[#allocation14 + $0x1d4] sm:$0xf]
        %v3806 = vld [vmem:[#allocation14 + $0x1d8] sm:$0xf]
        %v3807 = vld [vmem:[#allocation14 + $0x1dc] sm:$0xf]
        %v3808 = vld [vmem:[#allocation14 + $0x1e0] sm:$0xf]
        %v3809 = vld [vmem:[#allocation14 + $0x1e4] sm:$0xf]
        %v3810 = vld [vmem:[#allocation14 + $0x1e8] sm:$0xf]
        %v3811 = vld [vmem:[#allocation14 + $0x1ec] sm:$0xf]
        %v3812 = vld [vmem:[#allocation14 + $0x1f0] sm:$0xf]
        %v3813 = vld [vmem:[#allocation14 + $0x1f4] sm:$0xf]
        %v3814 = vld [vmem:[#allocation14 + $0x1f8] sm:$0xf]
        %v3815 = vld [vmem:[#allocation14 + $0x1fc] sm:$0xf]
        %v3816 = vld [vmem:[#allocation14 + $0x200] sm:$0xf]
        %v3817 = vld [vmem:[#allocation14 + $0x204] sm:$0xf]
        %v3818 = vld [vmem:[#allocation14 + $0x208] sm:$0xf]
        %v3819 = vld [vmem:[#allocation14 + $0x20c] sm:$0xf]
        %v3820 = vld [vmem:[#allocation14 + $0x210] sm:$0xf]
        %v3821 = vld [vmem:[#allocation14 + $0x214] sm:$0xf]
        %v3822 = vld [vmem:[#allocation14 + $0x218] sm:$0xf]
        %v3823 = vld [vmem:[#allocation14 + $0x21c] sm:$0xf]
        %v3824 = vld [vmem:[#allocation14 + $0x220] sm:$0xf]
        %v3825 = vld [vmem:[#allocation14 + $0x224] sm:$0xf]
        %v3826 = vld [vmem:[#allocation14 + $0x228] sm:$0xf]
        %v3827 = vld [vmem:[#allocation14 + $0x22c] sm:$0xf]
        %v3828 = vld [vmem:[#allocation14 + $0x230] sm:$0xf]
        %v3829 = vld [vmem:[#allocation14 + $0x234] sm:$0xf]
        %v3830 = vld [vmem:[#allocation14 + $0x238] sm:$0xf]
        %v3831 = vld [vmem:[#allocation14 + $0x23c] sm:$0xf]
        %v3832 = vld [vmem:[#allocation16] sm:$0x1]
        %v3834 = vlaneseq
        %v3835 = vshrl.u32 %v3834, 7
        %v3836 = vsub.s32 0, %v3835
        %v3837 = vrot.slane %v3832, %v3836
        %v3983 = vunpack.c.l.b16 %v3688
        %v3984 = vunpack.c.l.b16 %v3689
        %v3985 = vunpack.c.l.b16 %v3690
        %v3986 = vunpack.c.l.b16 %v3691
        %v3987 = vunpack.c.l.b16 %v3692
        %v3988 = vunpack.c.l.b16 %v3693
        %v3989 = vunpack.c.l.b16 %v3694
        %v3990 = vunpack.c.l.b16 %v3695
        %v3991 = vunpack.c.l.b16 %v3696
        %v3992 = vunpack.c.l.b16 %v3697
        %v3993 = vunpack.c.l.b16 %v3698
        %v3994 = vunpack.c.l.b16 %v3699
        %v3995 = vunpack.c.l.b16 %v3700
        %v3996 = vunpack.c.l.b16 %v3701
        %v3997 = vunpack.c.l.b16 %v3702
        %v3998 = vunpack.c.l.b16 %v3703
        %v3999 = vunpack.c.l.b16 %v3704
        %v4000 = vunpack.c.l.b16 %v3705
        %v4001 = vunpack.c.l.b16 %v3706
        %v4002 = vunpack.c.l.b16 %v3707
        %v4003 = vunpack.c.l.b16 %v3708
        %v4004 = vunpack.c.l.b16 %v3709
        %v4005 = vunpack.c.l.b16 %v3710
        %v4006 = vunpack.c.l.b16 %v3711
        %v4007 = vunpack.c.l.b16 %v3712
        %v4008 = vunpack.c.l.b16 %v3713
        %v4009 = vunpack.c.l.b16 %v3714
        %v4010 = vunpack.c.l.b16 %v3715
        %v4011 = vunpack.c.l.b16 %v3716
        %v4012 = vunpack.c.l.b16 %v3717
        %v4013 = vunpack.c.l.b16 %v3718
        %v4014 = vunpack.c.l.b16 %v3719
        %v4015 = vunpack.c.l.b16 %v3720
        %v4016 = vunpack.c.l.b16 %v3721
        %v4017 = vunpack.c.l.b16 %v3722
        %v4018 = vunpack.c.l.b16 %v3723
        %v4019 = vunpack.c.l.b16 %v3724
        %v4020 = vunpack.c.l.b16 %v3725
        %v4021 = vunpack.c.l.b16 %v3726
        %v4022 = vunpack.c.l.b16 %v3727
        %v4023 = vunpack.c.l.b16 %v3728
        %v4024 = vunpack.c.l.b16 %v3729
        %v4025 = vunpack.c.l.b16 %v3730
        %v4026 = vunpack.c.l.b16 %v3731
        %v4027 = vunpack.c.l.b16 %v3732
        %v4028 = vunpack.c.l.b16 %v3733
        %v4029 = vunpack.c.l.b16 %v3734
        %v4030 = vunpack.c.l.b16 %v3735
        %v4031 = vunpack.c.l.b16 %v3736
        %v4032 = vunpack.c.l.b16 %v3737
        %v4033 = vunpack.c.l.b16 %v3738
        %v4034 = vunpack.c.l.b16 %v3739
        %v4035 = vunpack.c.l.b16 %v3740
        %v4036 = vunpack.c.l.b16 %v3741
        %v4037 = vunpack.c.l.b16 %v3742
        %v4038 = vunpack.c.l.b16 %v3743
        %v4039 = vunpack.c.l.b16 %v3744
        %v4040 = vunpack.c.l.b16 %v3745
        %v4041 = vunpack.c.l.b16 %v3746
        %v4042 = vunpack.c.l.b16 %v3747
        %v4043 = vunpack.c.l.b16 %v3748
        %v4044 = vunpack.c.l.b16 %v3749
        %v4045 = vunpack.c.l.b16 %v3750
        %v4046 = vunpack.c.l.b16 %v3751
        %v4047 = vunpack.c.l.b16 %v3752
        %v4048 = vunpack.c.l.b16 %v3753
        %v4049 = vunpack.c.l.b16 %v3754
        %v4050 = vunpack.c.l.b16 %v3755
        %v4051 = vunpack.c.l.b16 %v3756
        %v4052 = vunpack.c.l.b16 %v3757
        %v4053 = vunpack.c.l.b16 %v3758
        %v4054 = vunpack.c.l.b16 %v3759
        %v4055 = vunpack.c.l.b16 %v3760
        %v4056 = vunpack.c.l.b16 %v3761
        %v4057 = vunpack.c.l.b16 %v3762
        %v4058 = vunpack.c.l.b16 %v3763
        %v4059 = vunpack.c.l.b16 %v3764
        %v4060 = vunpack.c.l.b16 %v3765
        %v4061 = vunpack.c.l.b16 %v3766
        %v4062 = vunpack.c.l.b16 %v3767
        %v4063 = vunpack.c.l.b16 %v3768
        %v4064 = vunpack.c.l.b16 %v3769
        %v4065 = vunpack.c.l.b16 %v3770
        %v4066 = vunpack.c.l.b16 %v3771
        %v4067 = vunpack.c.l.b16 %v3772
        %v4068 = vunpack.c.l.b16 %v3773
        %v4069 = vunpack.c.l.b16 %v3774
        %v4070 = vunpack.c.l.b16 %v3775
        %v4071 = vunpack.c.l.b16 %v3776
        %v4072 = vunpack.c.l.b16 %v3777
        %v4073 = vunpack.c.l.b16 %v3778
        %v4074 = vunpack.c.l.b16 %v3779
        %v4075 = vunpack.c.l.b16 %v3780
        %v4076 = vunpack.c.l.b16 %v3781
        %v4077 = vunpack.c.l.b16 %v3782
        %v4078 = vunpack.c.l.b16 %v3783
        %v4079 = vunpack.c.l.b16 %v3784
        %v4080 = vunpack.c.l.b16 %v3785
        %v4081 = vunpack.c.l.b16 %v3786
        %v4082 = vunpack.c.l.b16 %v3787
        %v4083 = vunpack.c.l.b16 %v3788
        %v4084 = vunpack.c.l.b16 %v3789
        %v4085 = vunpack.c.l.b16 %v3790
        %v4086 = vunpack.c.l.b16 %v3791
        %v4087 = vunpack.c.l.b16 %v3792
        %v4088 = vunpack.c.l.b16 %v3793
        %v4089 = vunpack.c.l.b16 %v3794
        %v4090 = vunpack.c.l.b16 %v3795
        %v4091 = vunpack.c.l.b16 %v3796
        %v4092 = vunpack.c.l.b16 %v3797
        %v4093 = vunpack.c.l.b16 %v3798
        %v4094 = vunpack.c.l.b16 %v3799
        %v4095 = vunpack.c.l.b16 %v3800
        %v4096 = vunpack.c.l.b16 %v3801
        %v4097 = vunpack.c.l.b16 %v3802
        %v4098 = vunpack.c.l.b16 %v3803
        %v4099 = vunpack.c.l.b16 %v3804
        %v4100 = vunpack.c.l.b16 %v3805
        %v4101 = vunpack.c.l.b16 %v3806
        %v4102 = vunpack.c.l.b16 %v3807
        %v4103 = vunpack.c.l.b16 %v3808
        %v4104 = vunpack.c.l.b16 %v3809
        %v4105 = vunpack.c.l.b16 %v3810
        %v4106 = vunpack.c.l.b16 %v3811
        %v4107 = vunpack.c.l.b16 %v3812
        %v4108 = vunpack.c.l.b16 %v3813
        %v4109 = vunpack.c.l.b16 %v3814
        %v4110 = vunpack.c.l.b16 %v3815
        %v4111 = vunpack.c.l.b16 %v3816
        %v4112 = vunpack.c.l.b16 %v3817
        %v4113 = vunpack.c.l.b16 %v3818
        %v4114 = vunpack.c.l.b16 %v3819
        %v4115 = vunpack.c.l.b16 %v3820
        %v4116 = vunpack.c.l.b16 %v3821
        %v4117 = vunpack.c.l.b16 %v3822
        %v4118 = vunpack.c.l.b16 %v3823
        %v4119 = vunpack.c.l.b16 %v3824
        %v4120 = vunpack.c.l.b16 %v3825
        %v4121 = vunpack.c.l.b16 %v3826
        %v4122 = vunpack.c.l.b16 %v3827
        %v4123 = vunpack.c.l.b16 %v3828
        %v4124 = vunpack.c.l.b16 %v3829
        %v4125 = vunpack.c.l.b16 %v3830
        %v4126 = vunpack.c.l.b16 %v3831
        %v4127 = vpack.c.b16 %v3984, %v3983
        %v4128 = vpack.c.b16 %v3986, %v3985
        %v4129 = vpack.c.b16 %v3988, %v3987
        %v4130 = vpack.c.b16 %v3990, %v3989
        %v4131 = vpack.c.b16 %v3992, %v3991
        %v4132 = vpack.c.b16 %v3994, %v3993
        %v4133 = vpack.c.b16 %v3996, %v3995
        %v4134 = vpack.c.b16 %v3998, %v3997
        %v4135 = vpack.c.b16 %v4000, %v3999
        %v4136 = vpack.c.b16 %v4002, %v4001
        %v4137 = vpack.c.b16 %v4004, %v4003
        %v4138 = vpack.c.b16 %v4006, %v4005
        %v4139 = vpack.c.b16 %v4008, %v4007
        %v4140 = vpack.c.b16 %v4010, %v4009
        %v4141 = vpack.c.b16 %v4012, %v4011
        %v4142 = vpack.c.b16 %v4014, %v4013
        %v4143 = vpack.c.b16 %v4016, %v4015
        %v4144 = vpack.c.b16 %v4018, %v4017
        %v4145 = vpack.c.b16 %v4020, %v4019
        %v4146 = vpack.c.b16 %v4022, %v4021
        %v4147 = vpack.c.b16 %v4024, %v4023
        %v4148 = vpack.c.b16 %v4026, %v4025
        %v4149 = vpack.c.b16 %v4028, %v4027
        %v4150 = vpack.c.b16 %v4030, %v4029
        %v4151 = vpack.c.b16 %v4032, %v4031
        %v4152 = vpack.c.b16 %v4034, %v4033
        %v4153 = vpack.c.b16 %v4036, %v4035
        %v4154 = vpack.c.b16 %v4038, %v4037
        %v4155 = vpack.c.b16 %v4040, %v4039
        %v4156 = vpack.c.b16 %v4042, %v4041
        %v4157 = vpack.c.b16 %v4044, %v4043
        %v4158 = vpack.c.b16 %v4046, %v4045
        %v4159 = vpack.c.b16 %v4048, %v4047
        %v4160 = vpack.c.b16 %v4050, %v4049
        %v4161 = vpack.c.b16 %v4052, %v4051
        %v4162 = vpack.c.b16 %v4054, %v4053
        %v4163 = vpack.c.b16 %v4056, %v4055
        %v4164 = vpack.c.b16 %v4058, %v4057
        %v4165 = vpack.c.b16 %v4060, %v4059
        %v4166 = vpack.c.b16 %v4062, %v4061
        %v4167 = vpack.c.b16 %v4064, %v4063
        %v4168 = vpack.c.b16 %v4066, %v4065
        %v4169 = vpack.c.b16 %v4068, %v4067
        %v4170 = vpack.c.b16 %v4070, %v4069
        %v4171 = vpack.c.b16 %v4072, %v4071
        %v4172 = vpack.c.b16 %v4074, %v4073
        %v4173 = vpack.c.b16 %v4076, %v4075
        %v4174 = vpack.c.b16 %v4078, %v4077
        %v4175 = vpack.c.b16 %v4080, %v4079
        %v4176 = vpack.c.b16 %v4082, %v4081
        %v4177 = vpack.c.b16 %v4084, %v4083
        %v4178 = vpack.c.b16 %v4086, %v4085
        %v4179 = vpack.c.b16 %v4088, %v4087
        %v4180 = vpack.c.b16 %v4090, %v4089
        %v4181 = vpack.c.b16 %v4092, %v4091
        %v4182 = vpack.c.b16 %v4094, %v4093
        %v4183 = vpack.c.b16 %v4096, %v4095
        %v4184 = vpack.c.b16 %v4098, %v4097
        %v4185 = vpack.c.b16 %v4100, %v4099
        %v4186 = vpack.c.b16 %v4102, %v4101
        %v4187 = vpack.c.b16 %v4104, %v4103
        %v4188 = vpack.c.b16 %v4106, %v4105
        %v4189 = vpack.c.b16 %v4108, %v4107
        %v4190 = vpack.c.b16 %v4110, %v4109
        %v4191 = vpack.c.b16 %v4112, %v4111
        %v4192 = vpack.c.b16 %v4114, %v4113
        %v4193 = vpack.c.b16 %v4116, %v4115
        %v4194 = vpack.c.b16 %v4118, %v4117
        %v4195 = vpack.c.b16 %v4120, %v4119
        %v4196 = vpack.c.b16 %v4122, %v4121
        %v4197 = vpack.c.b16 %v4124, %v4123
        %v4198 = vpack.c.b16 %v4126, %v4125
        %4271 = vmatprep.subr.bf16.mxu0 0
        %4272 = vmatpush1.bf16.msra.mxu0 %v4127
        %4273 = vmatprep.subr.bf16.mxu0 0
        %4274 = vmatpush1.bf16.msra.mxu0 %v4128
        %4275 = vmatprep.subr.bf16.mxu0 0
        %4276 = vmatpush1.bf16.msra.mxu0 %v4129
        %4277 = vmatprep.subr.bf16.mxu0 0
        %4278 = vmatpush1.bf16.msra.mxu0 %v4130
        %4279 = vmatprep.subr.bf16.mxu0 0
        %4280 = vmatpush1.bf16.msra.mxu0 %v4131
        %4281 = vmatprep.subr.bf16.mxu0 0
        %4282 = vmatpush1.bf16.msra.mxu0 %v4132
        %4283 = vmatprep.subr.bf16.mxu0 0
        %4284 = vmatpush1.bf16.msra.mxu0 %v4133
        %4285 = vmatprep.subr.bf16.mxu0 0
        %4286 = vmatpush1.bf16.msra.mxu0 %v4134
        %4287 = vmatprep.subr.bf16.mxu0 0
        %4288 = vmatpush1.bf16.msra.mxu0 %v4135
        %4289 = vmatprep.subr.bf16.mxu0 0
        %4290 = vmatpush1.bf16.msra.mxu0 %v4136
        %4291 = vmatprep.subr.bf16.mxu0 0
        %4292 = vmatpush1.bf16.msra.mxu0 %v4137
        %4293 = vmatprep.subr.bf16.mxu0 0
        %4294 = vmatpush1.bf16.msra.mxu0 %v4138
        %4295 = vmatprep.subr.bf16.mxu0 0
        %4296 = vmatpush1.bf16.msra.mxu0 %v4139
        %4297 = vmatprep.subr.bf16.mxu0 0
        %4298 = vmatpush1.bf16.msra.mxu0 %v4140
        %4299 = vmatprep.subr.bf16.mxu0 0
        %4300 = vmatpush1.bf16.msra.mxu0 %v4141
        %4301 = vmatprep.subr.bf16.mxu0 0
        %4302 = vmatpush1.bf16.msra.mxu0 %v4142
        %4303 = vmatprep.mubr.bf16.mxu0 %v3653
        %4304 = vmatmul.mubr.bf16.gmra.mrb[0].mxu0 %v3652
        %v4305 = vpop.f32.mrb[0].mxu0
        %v4306 = vadd.f32 %v3837, %v4305
        %v4307 = vpop.f32.mrb[0].mxu0
        %v4308 = vpop.f32.mrb[0].mxu0
        %v4309 = vadd.f32 %v3837, %v4308
        %v4310 = vpop.f32.mrb[0].mxu0
        %4311 = vmatprep.mubr.bf16.mxu0 %v3662
        %4312 = vmatmul.mubr.bf16.gmra.mrb[0].mxu0 %v3661
        %v4313 = vpop.f32.mrb[0].mxu0
        %v4314 = vadd.f32 %v3837, %v4313
        %v4315 = vpop.f32.mrb[0].mxu0
        %v4316 = vpop.f32.mrb[0].mxu0
        %v4317 = vadd.f32 %v3837, %v4316
        %v4318 = vpop.f32.mrb[0].mxu0
        %4319 = vmatprep.mubr.bf16.mxu0 %v3671
        %4320 = vmatmul.mubr.bf16.gmra.mrb[0].mxu0 %v3670
        %v4321 = vpop.f32.mrb[0].mxu0
        %v4322 = vadd.f32 %v3837, %v4321
        %v4323 = vpop.f32.mrb[0].mxu0
        %v4324 = vpop.f32.mrb[0].mxu0
        %v4325 = vadd.f32 %v3837, %v4324
        %v4326 = vpop.f32.mrb[0].mxu0
        %4327 = vmatprep.mubr.bf16.mxu0 %v3680
        %4328 = vmatmul.mubr.bf16.gmra.mrb[0].mxu0 %v3679
        %v4329 = vpop.f32.mrb[0].mxu0
        %v4330 = vadd.f32 %v3837, %v4329
        %v4331 = vpop.f32.mrb[0].mxu0
        %v4332 = vpop.f32.mrb[0].mxu0
        %v4333 = vadd.f32 %v3837, %v4332
        %v4334 = vpop.f32.mrb[0].mxu0
        %4335 = vdwg.mxu0
        %4336 = vmatprep.subr.bf16.mxu0 0
        %4337 = vmatpush1.bf16.msra.mxu0 %v4143
        %4338 = vmatprep.subr.bf16.mxu0 0
        %4339 = vmatpush1.bf16.msra.mxu0 %v4144
        %4340 = vmatprep.subr.bf16.mxu0 0
        %4341 = vmatpush1.bf16.msra.mxu0 %v4145
        %4342 = vmatprep.subr.bf16.mxu0 0
        %4343 = vmatpush1.bf16.msra.mxu0 %v4146
        %4344 = vmatprep.subr.bf16.mxu0 0
        %4345 = vmatpush1.bf16.msra.mxu0 %v4147
        %4346 = vmatprep.subr.bf16.mxu0 0
        %4347 = vmatpush1.bf16.msra.mxu0 %v4148
        %4348 = vmatprep.subr.bf16.mxu0 0
        %4349 = vmatpush1.bf16.msra.mxu0 %v4149
        %4350 = vmatprep.subr.bf16.mxu0 0
        %4351 = vmatpush1.bf16.msra.mxu0 %v4150
        %4352 = vmatprep.subr.bf16.mxu0 0
        %4353 = vmatpush1.bf16.msra.mxu0 %v4151
        %4354 = vmatprep.subr.bf16.mxu0 0
        %4355 = vmatpush1.bf16.msra.mxu0 %v4152
        %4356 = vmatprep.subr.bf16.mxu0 0
        %4357 = vmatpush1.bf16.msra.mxu0 %v4153
        %4358 = vmatprep.subr.bf16.mxu0 0
        %4359 = vmatpush1.bf16.msra.mxu0 %v4154
        %4360 = vmatprep.subr.bf16.mxu0 0
        %4361 = vmatpush1.bf16.msra.mxu0 %v4155
        %4362 = vmatprep.subr.bf16.mxu0 0
        %4363 = vmatpush1.bf16.msra.mxu0 %v4156
        %4364 = vmatprep.subr.bf16.mxu0 0
        %4365 = vmatpush1.bf16.msra.mxu0 %v4157
        %4366 = vmatprep.subr.bf16.mxu0 0
        %4367 = vmatpush1.bf16.msra.mxu0 %v4158
        %4368 = vmatprep.mubr.bf16.mxu0 %v3655
        %4369 = vmatmul.mubr.bf16.gmra.mrb[0].mxu0 %v3654
        %v4370 = vpop.f32.mrb[0].mxu0
        %v4371 = vadd.f32 %v4306, %v4370
        %v4372 = vpop.f32.mrb[0].mxu0
        %v4373 = vpop.f32.mrb[0].mxu0
        %v4374 = vadd.f32 %v4309, %v4373
        %v4375 = vpop.f32.mrb[0].mxu0
        %4376 = vmatprep.mubr.bf16.mxu0 %v3664
        %4377 = vmatmul.mubr.bf16.gmra.mrb[0].mxu0 %v3663
        %v4378 = vpop.f32.mrb[0].mxu0
        %v4379 = vadd.f32 %v4314, %v4378
        %v4380 = vpop.f32.mrb[0].mxu0
        %v4381 = vpop.f32.mrb[0].mxu0
        %v4382 = vadd.f32 %v4317, %v4381
        %v4383 = vpop.f32.mrb[0].mxu0
        %4384 = vmatprep.mubr.bf16.mxu0 %v3673
        %4385 = vmatmul.mubr.bf16.gmra.mrb[0].mxu0 %v3672
        %v4386 = vpop.f32.mrb[0].mxu0
        %v4387 = vadd.f32 %v4322, %v4386
        %v4388 = vpop.f32.mrb[0].mxu0
        %v4389 = vpop.f32.mrb[0].mxu0
        %v4390 = vadd.f32 %v4325, %v4389
        %v4391 = vpop.f32.mrb[0].mxu0
        %4392 = vmatprep.mubr.bf16.mxu0 %v3682
        %4393 = vmatmul.mubr.bf16.gmra.mrb[0].mxu0 %v3681
        %v4394 = vpop.f32.mrb[0].mxu0
        %v4395 = vadd.f32 %v4330, %v4394
        %v4396 = vpop.f32.mrb[0].mxu0
        %v4397 = vpop.f32.mrb[0].mxu0
        %v4398 = vadd.f32 %v4333, %v4397
        %v4399 = vpop.f32.mrb[0].mxu0
        %4400 = vdwg.mxu0
        %4401 = vmatprep.subr.bf16.mxu0 0
        %4402 = vmatpush1.bf16.msra.mxu0 %v4159
        %4403 = vmatprep.subr.bf16.mxu0 0
        %4404 = vmatpush1.bf16.msra.mxu0 %v4160
        %4405 = vmatprep.subr.bf16.mxu0 0
        %4406 = vmatpush1.bf16.msra.mxu0 %v4161
        %4407 = vmatprep.subr.bf16.mxu0 0
        %4408 = vmatpush1.bf16.msra.mxu0 %v4162
        %4409 = vmatprep.subr.bf16.mxu0 0
        %4410 = vmatpush1.bf16.msra.mxu0 %v4163
        %4411 = vmatprep.subr.bf16.mxu0 0
        %4412 = vmatpush1.bf16.msra.mxu0 %v4164
        %4413 = vmatprep.subr.bf16.mxu0 0
        %4414 = vmatpush1.bf16.msra.mxu0 %v4165
        %4415 = vmatprep.subr.bf16.mxu0 0
        %4416 = vmatpush1.bf16.msra.mxu0 %v4166
        %4417 = vmatprep.subr.bf16.mxu0 0
        %4418 = vmatpush1.bf16.msra.mxu0 %v4167
        %4419 = vmatprep.subr.bf16.mxu0 0
        %4420 = vmatpush1.bf16.msra.mxu0 %v4168
        %4421 = vmatprep.subr.bf16.mxu0 0
        %4422 = vmatpush1.bf16.msra.mxu0 %v4169
        %4423 = vmatprep.subr.bf16.mxu0 0
        %4424 = vmatpush1.bf16.msra.mxu0 %v4170
        %4425 = vmatprep.subr.bf16.mxu0 0
        %4426 = vmatpush1.bf16.msra.mxu0 %v4171
        %4427 = vmatprep.subr.bf16.mxu0 0
        %4428 = vmatpush1.bf16.msra.mxu0 %v4172
        %4429 = vmatprep.subr.bf16.mxu0 0
        %4430 = vmatpush1.bf16.msra.mxu0 %v4173
        %4431 = vmatprep.subr.bf16.mxu0 0
        %4432 = vmatpush1.bf16.msra.mxu0 %v4174
        %4433 = vmatprep.mubr.bf16.mxu0 %v3657
        %4434 = vmatmul.mubr.bf16.gmra.mrb[0].mxu0 %v3656
        %v4435 = vpop.f32.mrb[0].mxu0
        %v4436 = vadd.f32 %v4371, %v4435
        %v4437 = vpop.f32.mrb[0].mxu0
        %v4438 = vpop.f32.mrb[0].mxu0
        %v4439 = vadd.f32 %v4374, %v4438
        %v4440 = vpop.f32.mrb[0].mxu0
        %4441 = vmatprep.mubr.bf16.mxu0 %v3666
        %4442 = vmatmul.mubr.bf16.gmra.mrb[0].mxu0 %v3665
        %v4443 = vpop.f32.mrb[0].mxu0
        %v4444 = vadd.f32 %v4379, %v4443
        %v4445 = vpop.f32.mrb[0].mxu0
        %v4446 = vpop.f32.mrb[0].mxu0
        %v4447 = vadd.f32 %v4382, %v4446
        %v4448 = vpop.f32.mrb[0].mxu0
        %4449 = vmatprep.mubr.bf16.mxu0 %v3675
        %4450 = vmatmul.mubr.bf16.gmra.mrb[0].mxu0 %v3674
        %v4451 = vpop.f32.mrb[0].mxu0
        %v4452 = vadd.f32 %v4387, %v4451
        %v4453 = vpop.f32.mrb[0].mxu0
        %v4454 = vpop.f32.mrb[0].mxu0
        %v4455 = vadd.f32 %v4390, %v4454
        %v4456 = vpop.f32.mrb[0].mxu0
        %4457 = vmatprep.mubr.bf16.mxu0 %v3684
        %4458 = vmatmul.mubr.bf16.gmra.mrb[0].mxu0 %v3683
        %v4459 = vpop.f32.mrb[0].mxu0
        %v4460 = vadd.f32 %v4395, %v4459
        %v4461 = vpop.f32.mrb[0].mxu0
        %v4462 = vpop.f32.mrb[0].mxu0
        %v4463 = vadd.f32 %v4398, %v4462
        %v4464 = vpop.f32.mrb[0].mxu0
        %4465 = vdwg.mxu0
        %4466 = vmatprep.subr.bf16.mxu0 0
        %4467 = vmatpush1.bf16.msra.mxu0 %v4175
        %4468 = vmatprep.subr.bf16.mxu0 0
        %4469 = vmatpush1.bf16.msra.mxu0 %v4176
        %4470 = vmatprep.subr.bf16.mxu0 0
        %4471 = vmatpush1.bf16.msra.mxu0 %v4177
        %4472 = vmatprep.subr.bf16.mxu0 0
        %4473 = vmatpush1.bf16.msra.mxu0 %v4178
        %4474 = vmatprep.subr.bf16.mxu0 0
        %4475 = vmatpush1.bf16.msra.mxu0 %v4179
        %4476 = vmatprep.subr.bf16.mxu0 0
        %4477 = vmatpush1.bf16.msra.mxu0 %v4180
        %4478 = vmatprep.subr.bf16.mxu0 0
        %4479 = vmatpush1.bf16.msra.mxu0 %v4181
        %4480 = vmatprep.subr.bf16.mxu0 0
        %4481 = vmatpush1.bf16.msra.mxu0 %v4182
        %4482 = vmatprep.subr.bf16.mxu0 0
        %4483 = vmatpush1.bf16.msra.mxu0 %v4183
        %4484 = vmatprep.subr.bf16.mxu0 0
        %4485 = vmatpush1.bf16.msra.mxu0 %v4184
        %4486 = vmatprep.subr.bf16.mxu0 0
        %4487 = vmatpush1.bf16.msra.mxu0 %v4185
        %4488 = vmatprep.subr.bf16.mxu0 0
        %4489 = vmatpush1.bf16.msra.mxu0 %v4186
        %4490 = vmatprep.subr.bf16.mxu0 0
        %4491 = vmatpush1.bf16.msra.mxu0 %v4187
        %4492 = vmatprep.subr.bf16.mxu0 0
        %4493 = vmatpush1.bf16.msra.mxu0 %v4188
        %4494 = vmatprep.subr.bf16.mxu0 0
        %4495 = vmatpush1.bf16.msra.mxu0 %v4189
        %4496 = vmatprep.subr.bf16.mxu0 0
        %4497 = vmatpush1.bf16.msra.mxu0 %v4190
        %4498 = vmatprep.mubr.bf16.mxu0 %v3659
        %4499 = vmatmul.mubr.bf16.gmra.mrb[0].mxu0 %v3658
        %v4500 = vpop.f32.mrb[0].mxu0
        %v4501 = vadd.f32 %v4436, %v4500
        %v4502 = vpop.f32.mrb[0].mxu0
        %v4503 = vpop.f32.mrb[0].mxu0
        %v4504 = vadd.f32 %v4439, %v4503
        %v4505 = vpop.f32.mrb[0].mxu0
        %4506 = vmatprep.mubr.bf16.mxu0 %v3668
        %4507 = vmatmul.mubr.bf16.gmra.mrb[0].mxu0 %v3667
        %v4508 = vpop.f32.mrb[0].mxu0
        %v4509 = vadd.f32 %v4444, %v4508
        %v4510 = vpop.f32.mrb[0].mxu0
        %v4511 = vpop.f32.mrb[0].mxu0
        %v4512 = vadd.f32 %v4447, %v4511
        %v4513 = vpop.f32.mrb[0].mxu0
        %4514 = vmatprep.mubr.bf16.mxu0 %v3677
        %4515 = vmatmul.mubr.bf16.gmra.mrb[0].mxu0 %v3676
        %v4516 = vpop.f32.mrb[0].mxu0
        %v4517 = vadd.f32 %v4452, %v4516
        %v4518 = vpop.f32.mrb[0].mxu0
        %v4519 = vpop.f32.mrb[0].mxu0
        %v4520 = vadd.f32 %v4455, %v4519
        %v4521 = vpop.f32.mrb[0].mxu0
        %4522 = vmatprep.mubr.bf16.mxu0 %v3686
        %4523 = vmatmul.mubr.bf16.gmra.mrb[0].mxu0 %v3685
        %v4524 = vpop.f32.mrb[0].mxu0
        %v4525 = vadd.f32 %v4460, %v4524
        %v4526 = vpop.f32.mrb[0].mxu0
        %v4527 = vpop.f32.mrb[0].mxu0
        %v4528 = vadd.f32 %v4463, %v4527
        %v4529 = vpop.f32.mrb[0].mxu0
        %4530 = vdwg.mxu0
        %4531 = vmatprep.subr.bf16.mxu0 0
        %4532 = vmatpush1.bf16.msra.mxu0 %v4191
        %4533 = vmatprep.subr.bf16.mxu0 0
        %4534 = vmatpush1.bf16.msra.mxu0 %v4192
        %4535 = vmatprep.subr.bf16.mxu0 0
        %4536 = vmatpush1.bf16.msra.mxu0 %v4193
        %4537 = vmatprep.subr.bf16.mxu0 0
        %4538 = vmatpush1.bf16.msra.mxu0 %v4194
        %4539 = vmatprep.subr.bf16.mxu0 0
        %4540 = vmatpush1.bf16.msra.mxu0 %v4195
        %4541 = vmatprep.subr.bf16.mxu0 0
        %4542 = vmatpush1.bf16.msra.mxu0 %v4196
        %4543 = vmatprep.subr.bf16.mxu0 0
        %4544 = vmatpush1.bf16.msra.mxu0 %v4197
        %4545 = vmatprep.subr.bf16.mxu0 0
        %4546 = vmatpush1.bf16.msra.mxu0 %v4198
        %4547 = vmatprep.subr.bf16.mxu0 0
        %4548 = vmatpush1.bf16.msra.mxu0 0
        %4549 = vmatprep.subr.bf16.mxu0 0
        %4550 = vmatpush1.bf16.msra.mxu0 0
        %4551 = vmatprep.subr.bf16.mxu0 0
        %4552 = vmatpush1.bf16.msra.mxu0 0
        %4553 = vmatprep.subr.bf16.mxu0 0
        %4554 = vmatpush1.bf16.msra.mxu0 0
        %4555 = vmatprep.subr.bf16.mxu0 0
        %4556 = vmatpush1.bf16.msra.mxu0 0
        %4557 = vmatprep.subr.bf16.mxu0 0
        %4558 = vmatpush1.bf16.msra.mxu0 0
        %4559 = vmatprep.subr.bf16.mxu0 0
        %4560 = vmatpush1.bf16.msra.mxu0 0
        %4561 = vmatprep.subr.bf16.mxu0 0
        %4562 = vmatpush1.bf16.msra.mxu0 0
        %4563 = vmatprep.mubr.bf16.mxu0 0
        %4564 = vmatmul.mubr.bf16.gmra.mrb[0].mxu0 %v3660
        %v4565 = vpop.f32.mrb[0].mxu0
        %v4566 = vadd.f32 %v4501, %v4565
        %v4567 = vpop.f32.mrb[0].mxu0
        %v4568 = vpop.f32.mrb[0].mxu0
        %v4569 = vadd.f32 %v4504, %v4568
        %v4570 = vpop.f32.mrb[0].mxu0
        %4571 = vmatprep.mubr.bf16.mxu0 0
        %4572 = vmatmul.mubr.bf16.gmra.mrb[0].mxu0 %v3669
        %v4573 = vpop.f32.mrb[0].mxu0
        %v4574 = vadd.f32 %v4509, %v4573
        %v4575 = vpop.f32.mrb[0].mxu0
        %v4576 = vpop.f32.mrb[0].mxu0
        %v4577 = vadd.f32 %v4512, %v4576
        %v4578 = vpop.f32.mrb[0].mxu0
        %4579 = vmatprep.mubr.bf16.mxu0 0
        %4580 = vmatmul.mubr.bf16.gmra.mrb[0].mxu0 %v3678
        %v4581 = vpop.f32.mrb[0].mxu0
        %v4582 = vadd.f32 %v4517, %v4581
        %v4583 = vpop.f32.mrb[0].mxu0
        %v4584 = vpop.f32.mrb[0].mxu0
        %v4585 = vadd.f32 %v4520, %v4584
        %v4586 = vpop.f32.mrb[0].mxu0
        %4587 = vmatprep.mubr.bf16.mxu0 0
        %4588 = vmatmul.mubr.bf16.gmra.mrb[0].mxu0 %v3687
        %v4589 = vpop.f32.mrb[0].mxu0
        %v4590 = vadd.f32 %v4525, %v4589
        %v4591 = vpop.f32.mrb[0].mxu0
        %v4592 = vpop.f32.mrb[0].mxu0
        %v4593 = vadd.f32 %v4528, %v4592
        %v4594 = vpop.f32.mrb[0].mxu0
        %4595 = vdwg.mxu0
        %v4596 = vadd.f32 %v513, %v4566
        %v4597 = vadd.f32 %v514, %v4569
        %v4598 = vadd.f32 %v515, %v4574
        %v4599 = vadd.f32 %v516, %v4577
        %v4600 = vadd.f32 %v517, %v4582
        %v4601 = vadd.f32 %v518, %v4585
        %v4602 = vadd.f32 %v519, %v4590
        %v4603 = vadd.f32 %v520, %v4593
        %v4604 = vcombine.low %v4596, %v4598
        %v4605 = vcombine.high %v4596, %v4598
        %v4607 = vunpack.c.l.s4 1983009808
        %v4608 = vunpack.c.0.s8 %v4607
        %v4609 = vlaneseq
        %v4610 = vshrl.u32 %v4609, 7
        %v4611 = vsub.s32 %v4608, %v4610
        %v4612 = vrot.slane %v4604, %v4611
        %v4614 = vunpack.c.l.s4 1983009808
        %v4615 = vunpack.c.0.s8 %v4614
        %v4616 = vlaneseq
        %v4617 = vshrl.u32 %v4616, 7
        %v4618 = vsub.s32 %v4615, %v4617
        %v4619 = vrot.slane %v4605, %v4618
        %v4620 = vcombine.low %v4597, %v4599
        %v4621 = vcombine.high %v4597, %v4599
        %v4623 = vunpack.c.l.s4 1983009808
        %v4624 = vunpack.c.0.s8 %v4623
        %v4625 = vlaneseq
        %v4626 = vshrl.u32 %v4625, 7
        %v4627 = vsub.s32 %v4624, %v4626
        %v4628 = vrot.slane %v4620, %v4627
        %v4630 = vunpack.c.l.s4 1983009808
        %v4631 = vunpack.c.0.s8 %v4630
        %v4632 = vlaneseq
        %v4633 = vshrl.u32 %v4632, 7
        %v4634 = vsub.s32 %v4631, %v4633
        %v4635 = vrot.slane %v4621, %v4634
        %v4636 = vcombine.low %v4600, %v4602
        %v4637 = vcombine.high %v4600, %v4602
        %v4639 = vunpack.c.l.s4 1983009808
        %v4640 = vunpack.c.0.s8 %v4639
        %v4641 = vlaneseq
        %v4642 = vshrl.u32 %v4641, 7
        %v4643 = vsub.s32 %v4640, %v4642
        %v4644 = vrot.slane %v4636, %v4643
        %v4646 = vunpack.c.l.s4 1983009808
        %v4647 = vunpack.c.0.s8 %v4646
        %v4648 = vlaneseq
        %v4649 = vshrl.u32 %v4648, 7
        %v4650 = vsub.s32 %v4647, %v4649
        %v4651 = vrot.slane %v4637, %v4650
        %v4652 = vcombine.low %v4601, %v4603
        %v4653 = vcombine.high %v4601, %v4603
        %v4655 = vunpack.c.l.s4 1983009808
        %v4656 = vunpack.c.0.s8 %v4655
        %v4657 = vlaneseq
        %v4658 = vshrl.u32 %v4657, 7
        %v4659 = vsub.s32 %v4656, %v4658
        %v4660 = vrot.slane %v4652, %v4659
        %v4662 = vunpack.c.l.s4 1983009808
        %v4663 = vunpack.c.0.s8 %v4662
        %v4664 = vlaneseq
        %v4665 = vshrl.u32 %v4664, 7
        %v4666 = vsub.s32 %v4663, %v4665
        %v4667 = vrot.slane %v4653, %v4666
        %v4668 = vcombine.low %v4612, %v4628
        %v4669 = vcombine.high %v4612, %v4628
        %v4671 = vunpack.c.l.s4 1934713408
        %v4672 = vunpack.c.0.s8 %v4671
        %v4673 = vlaneseq
        %v4674 = vshrl.u32 %v4673, 7
        %v4675 = vsub.s32 %v4672, %v4674
        %v4676 = vrot.slane %v4668, %v4675
        %v4678 = vunpack.c.l.s4 1934713408
        %v4679 = vunpack.c.0.s8 %v4678
        %v4680 = vlaneseq
        %v4681 = vshrl.u32 %v4680, 7
        %v4682 = vsub.s32 %v4679, %v4681
        %v4683 = vrot.slane %v4669, %v4682
        %v4684 = vcombine.low %v4619, %v4635
        %v4685 = vcombine.high %v4619, %v4635
        %v4687 = vunpack.c.l.s4 1934713408
        %v4688 = vunpack.c.0.s8 %v4687
        %v4689 = vlaneseq
        %v4690 = vshrl.u32 %v4689, 7
        %v4691 = vsub.s32 %v4688, %v4690
        %v4692 = vrot.slane %v4684, %v4691
        %v4694 = vunpack.c.l.s4 1934713408
        %v4695 = vunpack.c.0.s8 %v4694
        %v4696 = vlaneseq
        %v4697 = vshrl.u32 %v4696, 7
        %v4698 = vsub.s32 %v4695, %v4697
        %v4699 = vrot.slane %v4685, %v4698
        %v4700 = vcombine.low %v4644, %v4660
        %v4701 = vcombine.high %v4644, %v4660
        %v4703 = vunpack.c.l.s4 1934713408
        %v4704 = vunpack.c.0.s8 %v4703
        %v4705 = vlaneseq
        %v4706 = vshrl.u32 %v4705, 7
        %v4707 = vsub.s32 %v4704, %v4706
        %v4708 = vrot.slane %v4700, %v4707
        %v4710 = vunpack.c.l.s4 1934713408
        %v4711 = vunpack.c.0.s8 %v4710
        %v4712 = vlaneseq
        %v4713 = vshrl.u32 %v4712, 7
        %v4714 = vsub.s32 %v4711, %v4713
        %v4715 = vrot.slane %v4701, %v4714
        %v4716 = vcombine.low %v4651, %v4667
        %v4717 = vcombine.high %v4651, %v4667
        %v4719 = vunpack.c.l.s4 1934713408
        %v4720 = vunpack.c.0.s8 %v4719
        %v4721 = vlaneseq
        %v4722 = vshrl.u32 %v4721, 7
        %v4723 = vsub.s32 %v4720, %v4722
        %v4724 = vrot.slane %v4716, %v4723
        %v4726 = vunpack.c.l.s4 1934713408
        %v4727 = vunpack.c.0.s8 %v4726
        %v4728 = vlaneseq
        %v4729 = vshrl.u32 %v4728, 7
        %v4730 = vsub.s32 %v4727, %v4729
        %v4731 = vrot.slane %v4717, %v4730
        %v4732 = vcombine.low %v4676, %v4708
        %v4733 = vcombine.high %v4676, %v4708
        %v4734 = vcombine.low %v4683, %v4715
        %v4735 = vcombine.high %v4683, %v4715
        %v4736 = vcombine.low %v4692, %v4724
        %v4737 = vcombine.high %v4692, %v4724
        %v4738 = vcombine.low %v4699, %v4731
        %v4739 = vcombine.high %v4699, %v4731
        %4741 = vrot.lane.b32.xlu0 %v4733, 32
        %v4742 = vpop.permute.xlu0 %4741
        %4745 = vrot.lane.b32.xlu0 %v4734, 64
        %v4746 = vpop.permute.xlu0 %4745
        %4749 = vrot.lane.b32.xlu0 %v4735, 96
        %v4750 = vpop.permute.xlu0 %4749
        %4753 = vrot.lane.b32.xlu0 %v4737, 32
        %v4754 = vpop.permute.xlu0 %4753
        %4757 = vrot.lane.b32.xlu0 %v4738, 64
        %v4758 = vpop.permute.xlu0 %4757
        %4761 = vrot.lane.b32.xlu0 %v4739, 96
        %v4762 = vpop.permute.xlu0 %4761
        %v4764 = vsel %vm385, %v4732, %v4742
        %vm4765 = vcmask 523264
        %v4766 = vsel %vm4765, %v4764, %v4746
        %vm4767 = vcmask 785408
        %v4768 = vsel %vm4767, %v4766, %v4750
        %v4769 = vsel %vm385, %v4736, %v4754
        %v4770 = vsel %vm4765, %v4769, %v4758
        %v4771 = vsel %vm4767, %v4770, %v4762
        %4772 = vst [vmem:[%s375] sm:$0xff] %v4768
        %4773 = vst [vmem:[%s375 + $0x8] sm:$0xff] %v4771
        %s4774 = sand.u32 %s187, 1
        %s4775 = scalar_lea.sflag [#allocation7], %s4774
        %s4776 = sand.u32 %s187, 1
        %s4777 = smul.addr %s4776, 16
        %s4778 = scalar_lea.vmem [#allocation17], %s4777
        // Predicated region
        $region77: #{tpu_custom_call.1} parent=47 // pred_check
          %p4779 = pneg %p197
        $region78: #{tpu_custom_call.1} parent=47 // pred_check_branch
          %4781 = sbr.rel (%p4779) target = $region80
        $region79: #{tpu_custom_call.1} parent=47 // pred_region
          %s4783 = ssub.s32 256, 256
          %4784 = vsyncadd %s4775, %s4783
          %s4785 = smul.addr %s27, 2
          %s4786 = smul.addr %s4785, 128
          %s4787 = scalar_lea.hbm %s7, %s4786
          %s4789 = sshll.u32 %s4778, 4
          %s4790 = int_to_ptr.vmem [resolvable:$true] %s4789
          %4792 = dma.vmem_to_hbm [thread:$0]  %s4790, 256, %s4787, %s4775
        $region80: #{tpu_custom_call.1} parent=47 // pred_fallthru
          _
      $region48: #{tpu_custom_call.1} parent=5 // pred_fallthru
        _
      %p4793 = scmp.le.s32.totalorder 2, %s22
      // Predicated region
      $region81: #{tpu_custom_call.1} parent=5 // pred_check
        %p4794 = pneg %p4793
      $region82: #{tpu_custom_call.1} parent=5 // pred_check_branch
        %4796 = sbr.rel (%p4794) target = $region84
      $region83: #{tpu_custom_call.1} parent=5 // pred_region
        %s4797 = ssub.s32 %s22, 2
        // Predicated region
        $region85: #{tpu_custom_call.1} parent=83 // pred_check
          %p4798 = pneg %p203
        $region86: #{tpu_custom_call.1} parent=83 // pred_check_branch
          %4800 = sbr.rel (%p4798) target = $region88
        $region87: #{tpu_custom_call.1} parent=83 // pred_region
          %s4801 = sand.u32 %s188, 1
          %s4802 = scalar_lea.sflag [#allocation7], %s4801
          %s4803 = sand.u32 %s188, 1
          %s4804 = smul.addr %s4803, 16
          %s4805 = scalar_lea.vmem [#allocation17], %s4804
          %4806 = dma.done %s4802, 256
        $region88: #{tpu_custom_call.1} parent=83 // pred_fallthru
          _
      $region84: #{tpu_custom_call.1} parent=5 // pred_fallthru
        _
    $region6: #{tpu_custom_call.1} parent=1 // loop_footer
      %s26 = sadd.s32 1, %s22
    $region7: #{tpu_custom_call.1} parent=1 // loop_footer_branch
      %21 = sbr.rel target = $region3
    $region8: #{tpu_custom_call.1} parent=1 // loop_exit
      _
    %4807 = vsyncpa [#allocation6], 1
    %s4808 = scalar_lea.sflag [#allocation6], 1
    %4809 = vsyncpa %s4808, 1
    %4810 = vsyncpa [#allocation9], 1
    %4811 = vsyncpa [#allocation12], 1
    %4812 = vsyncpa [#allocation15], 1
    %4813 = vsyncpa [#allocation7], 1
    %s4814 = scalar_lea.sflag [#allocation7], 1
    %4815 = vsyncpa %s4814, 1

</llo_original>
